<compile_context>
chip_gen: v7x
topology: tpu7x:2x2x1
jax: 0.10.0
libtpu: 0.0.40
codegen_flags: <defaults>
</compile_context>

<pallas_src>
import functools

import jax
import jax.numpy as jnp
from jax.experimental import pallas as pl
from jax.experimental.pallas import tpu as pltpu


# ---------------------------------------------------------------------------
# Tiled linear:  (M,K) @ (K,N) + b  with f32 VMEM accumulator
# ---------------------------------------------------------------------------

def _matmul_kernel(x_ref, w_ref, b_ref, o_ref, acc_ref):
    @pl.when(pl.program_id(2) == 0)
    def _():
        acc_ref[...] = jnp.zeros_like(acc_ref)

    acc_ref[...] += jnp.dot(x_ref[...], w_ref[...],
                            preferred_element_type=jnp.float32)

    @pl.when(pl.program_id(2) == pl.num_programs(2) - 1)
    def _():
        o_ref[...] = (acc_ref[...] + b_ref[...]).astype(o_ref.dtype)


def _pick_tile(dim, cap, aligns):
    """Largest tile <= cap that divides dim, preferring the given alignments."""
    if dim <= cap:
        return dim
    for a in aligns:
        t = (cap // a) * a
        while t >= a:
            if dim % t == 0:
                return t
            t -= a
    return dim  # full extent: always a legal block


def linear(x, w, b, *, tm_cap=256, tn_cap=512, tk_cap=512):
    """x:(M,K) bf16, w:(K,N) bf16, b:(1,N) f32 -> (M,N) f32."""
    M, K = x.shape
    _, N = w.shape
    tm = _pick_tile(M, tm_cap, (128, 8))
    tn = _pick_tile(N, tn_cap, (256, 128))
    tk = _pick_tile(K, tk_cap, (256, 128))
    return pl.pallas_call(
        _matmul_kernel,
        out_shape=jax.ShapeDtypeStruct((M, N), jnp.float32),
        grid_spec=pltpu.PrefetchScalarGridSpec(
            num_scalar_prefetch=0,
            grid=(M // tm, N // tn, K // tk),
            in_specs=[pl.BlockSpec((tm, tk), lambda i, j, k: (i, k)),
                      pl.BlockSpec((tk, tn), lambda i, j, k: (k, j)),
                      pl.BlockSpec((1, tn), lambda i, j, k: (0, j))],
            out_specs=pl.BlockSpec((tm, tn), lambda i, j, k: (i, j)),
            scratch_shapes=[pltpu.VMEM((tm, tn), jnp.float32)]),
        compiler_params=pltpu.CompilerParams(
            dimension_semantics=("parallel", "parallel", "arbitrary")),
    )(x, w, b)


# ---------------------------------------------------------------------------
# Fused init_h:  relu(relu(x @ W + b) @ W + b)   (tiny, single fused kernel)
# ---------------------------------------------------------------------------

def _init_h_kernel(x_ref, w_ref, b_ref, o_ref):
    h = jnp.dot(x_ref[...], w_ref[...], preferred_element_type=jnp.float32) + b_ref[...]
    h = jnp.maximum(h, 0.0)
    h = jnp.dot(h.astype(w_ref.dtype), w_ref[...],
                preferred_element_type=jnp.float32) + b_ref[...]
    o_ref[...] = jnp.maximum(h, 0.0)


def init_h(x_bf16, w_bf16, b):
    B = x_bf16.shape[0]
    H = w_bf16.shape[1]
    return pl.pallas_call(
        _init_h_kernel,
        out_shape=jax.ShapeDtypeStruct((B, H), jnp.float32),
    )(x_bf16, w_bf16, b)


# ---------------------------------------------------------------------------
# Bidirectional GRU layer: both directions in one pallas_call
#   gi   : (T, B, 6H) f32     precomputed x@W_ih + b_ih, [fwd 3H | bwd 3H]
#   w_hh : (2, H, 3H) bf16    per-direction recurrent weights, gates [r|z|n]
#   b_hh : (2, 1, 3H) f32
#   h0   : (2, B, H) f32
# Outputs:
#   y      : (T, B, 2H) bf16  (fwd in [:, :, :H], bwd in [:, :, H:])
#   h_last : (2, B, H) f32
# ---------------------------------------------------------------------------

def _bigru_kernel(gi_ref, w_hh_ref, b_hh_ref, h0_ref,
                  y_ref, hlast_ref, h_scr, *, hidden_dim, t_block):
    d = pl.program_id(0)            # direction: 0 = forward, 1 = backward
    tb = pl.program_id(1)           # time-block index (reversed for d=1 via index_map)
    H = hidden_dim

    @pl.when(tb == 0)
    def _():
        h_scr[...] = h0_ref[0]

    w_hh = w_hh_ref[0]              # (H, 3H) bf16   (hoisted out of the recurrence)
    b_hh = b_hh_ref[0]              # (1, 3H) f32

    def step(i, carry):
        # within-block timestep: forward walks 0..Tt-1, backward walks Tt-1..0
        t_loc = i + d * (t_block - 1 - 2 * i)
        h_prev = h_scr[...]                                     # (B, H) f32
        gi_t = gi_ref[t_loc]                                    # (B, 3H) f32
        gh = jnp.dot(h_prev.astype(jnp.bfloat16), w_hh,
                     preferred_element_type=jnp.float32) + b_hh
        r = jax.nn.sigmoid(gi_t[:, 0:H] + gh[:, 0:H])
        z = jax.nn.sigmoid(gi_t[:, H:2 * H] + gh[:, H:2 * H])
        n = jnp.tanh(gi_t[:, 2 * H:3 * H] + r * gh[:, 2 * H:3 * H])
        h_new = n + z * (h_prev - n)                            # == (1-z)*n + z*h
        h_scr[...] = h_new
        y_ref[t_loc] = h_new.astype(y_ref.dtype)
        return carry

    jax.lax.fori_loop(0, t_block, step, 0, unroll=True)

    @pl.when(tb == pl.num_programs(1) - 1)
    def _():
        hlast_ref[0] = h_scr[...]


def bigru_layer(gi, w_hh, b_hh, h0, *, hidden_dim, t_block):
    T, B, _ = gi.shape
    H = hidden_dim
    n_tb = T // t_block

    def t_sel(d, tb):
        # forward: tb ; backward: n_tb-1-tb  (in-kernel sequence reversal, no HBM flips)
        return tb + d * (n_tb - 1 - 2 * tb)

    return pl.pallas_call(
        functools.partial(_bigru_kernel, hidden_dim=H, t_block=t_block),
        out_shape=(jax.ShapeDtypeStruct((T, B, 2 * H), jnp.bfloat16),
                   jax.ShapeDtypeStruct((2, B, H), jnp.float32)),
        grid_spec=pltpu.PrefetchScalarGridSpec(
            num_scalar_prefetch=0,
            grid=(2, n_tb),
            in_specs=[pl.BlockSpec((t_block, B, 3 * H),
                                   lambda d, tb: (t_sel(d, tb), 0, d)),
                      pl.BlockSpec((1, H, 3 * H), lambda d, tb: (d, 0, 0)),
                      pl.BlockSpec((1, 1, 3 * H), lambda d, tb: (d, 0, 0)),
                      pl.BlockSpec((1, B, H), lambda d, tb: (d, 0, 0))],
            out_specs=[pl.BlockSpec((t_block, B, H),
                                    lambda d, tb: (t_sel(d, tb), 0, d)),
                       pl.BlockSpec((1, B, H), lambda d, tb: (d, 0, 0))],
            scratch_shapes=[pltpu.VMEM((B, H), jnp.float32)]),
        compiler_params=pltpu.CompilerParams(
            dimension_semantics=("parallel", "arbitrary")),
    )(gi, w_hh, b_hh, h0)


# ---------------------------------------------------------------------------
# Parameter init (deterministic, PyTorch-style uniform bounds)
# ---------------------------------------------------------------------------

def init_params(key, voc_size, input_feature_size, embed_dim, hidden_dim, num_layers):
    keys = iter(jax.random.split(key, 8 + 8 * num_layers))

    def u(shape, bound):
        return jax.random.uniform(next(keys), shape, jnp.float32, -bound, bound)

    H = hidden_dim
    p = {}
    bnd = 1.0 / float(input_feature_size) ** 0.5
    p['fl_w'] = u((input_feature_size, H), bnd)                     # stored (in, out)
    p['fl_b'] = u((1, H), bnd)
    p['embedding'] = jax.random.normal(next(keys), (voc_size, embed_dim), jnp.float32)

    bnd_h = 1.0 / float(H) ** 0.5
    p['gru'] = []
    for layer in range(num_layers):
        din = embed_dim if layer == 0 else 2 * H
        p['gru'].append(dict(
            w_ih=u((din, 6 * H), bnd_h),        # [fwd r|z|n | bwd r|z|n]
            b_ih=u((1, 6 * H), bnd_h),
            w_hh=u((2, H, 3 * H), bnd_h),       # (dir, H, 3H), gates [r|z|n]
            b_hh=u((2, 1, 3 * H), bnd_h),
        ))

    bnd_o = 1.0 / float(2 * H) ** 0.5
    p['out_w'] = u((2 * H, voc_size), bnd_o)
    p['out_b'] = u((1, voc_size), bnd_o)
    return p


# ---------------------------------------------------------------------------
# Generator.forward
# ---------------------------------------------------------------------------

def generator_forward(params, input_feature, sequence, *, hidden_dim, num_layers,
                      t_block_cap=8):
    B, T = sequence.shape
    H = hidden_dim
    F = params['fl_w'].shape[0]
    assert F == H, "forward() applies features_linear twice -> needs F == hidden_dim"
    assert H % 128 == 0, "hidden_dim must be a multiple of 128 (lane alignment)"

    fl_w = params['fl_w'].astype(jnp.bfloat16)
    # inputs = features_linear(x); hidden = features_linear(inputs)  (fused; only
    # `hidden` is consumed downstream)
    hidden = init_h(input_feature.astype(jnp.bfloat16), fl_w, params['fl_b'])   # (B, H)
    h0 = jnp.broadcast_to(hidden[None, :, :], (2, B, H))       # same for every layer/dir

    # Embedding lookup (plain-JAX gather), gathered directly in time-major order and
    # in bf16 so the gathered tensor is half-width.
    # TODO(synk): gather has no simple dense-BlockSpec Pallas equivalent; left in XLA.
    emb_bf16 = params['embedding'].astype(jnp.bfloat16)
    x = jnp.take(emb_bf16, sequence.T, axis=0)                                  # (T, B, E)

    tt = min(t_block_cap, T)
    while T % tt:
        tt -= 1

    h_out = []
    for layer in range(num_layers):
        lp = params['gru'][layer]
        din = x.shape[-1]
        # Hoisted input projection for BOTH directions: one big MXU matmul.
        gi = linear(x.reshape(T * B, din),
                    lp['w_ih'].astype(jnp.bfloat16), lp['b_ih'])                # (T*B, 6H)
        gi = gi.reshape(T, B, 6 * H)
        y, h_last = bigru_layer(gi, lp['w_hh'].astype(jnp.bfloat16),
                                lp['b_hh'], h0, hidden_dim=H, t_block=tt)
        x = y                                                                   # (T, B, 2H) bf16
        h_out.append(h_last)
    h_out = jnp.concatenate(h_out, axis=0)                                      # (2L, B, H)

    V = params['out_w'].shape[1]
    # Transpose the (small) bf16 activations instead of the (large) f32 logits,
    # so logits come out of the tiled matmul already in (B, T, V) layout.
    xt = jnp.transpose(x, (1, 0, 2)).reshape(B * T, 2 * H)
    logits = linear(xt, params['out_w'].astype(jnp.bfloat16), params['out_b'])  # (B*T, V)
    return logits.reshape(B, T, V), h_out


# ---------------------------------------------------------------------------
# Pure-JAX f32 reference (sanity check)
# ---------------------------------------------------------------------------

def _gru_dir_ref(x, w_ih, b_ih, w_hh, b_hh, h0):
    H = h0.shape[-1]

    def step(h, x_t):
        gi = x_t @ w_ih + b_ih
        gh = h @ w_hh + b_hh
        r = jax.nn.sigmoid(gi[:, :H] + gh[:, :H])
        z = jax.nn.sigmoid(gi[:, H:2 * H] + gh[:, H:2 * H])
        n = jnp.tanh(gi[:, 2 * H:] + r * gh[:, 2 * H:])
        h_new = (1.0 - z) * n + z * h
        return h_new, h_new

    h_last, ys = jax.lax.scan(step, h0, x)
    return ys, h_last


def reference_forward(params, input_feature, sequence, *, hidden_dim, num_layers):
    B, T = sequence.shape
    H = hidden_dim
    inputs = jnp.maximum(input_feature @ params['fl_w'] + params['fl_b'], 0.0)
    hidden = jnp.maximum(inputs @ params['fl_w'] + params['fl_b'], 0.0)
    x = jnp.take(params['embedding'], sequence.T, axis=0)                       # (T, B, E)
    h_out = []
    for layer in range(num_layers):
        lp = params['gru'][layer]
        w_f, w_b = lp['w_ih'][:, :3 * H], lp['w_ih'][:, 3 * H:]
        bi_f, bi_b = lp['b_ih'][:, :3 * H], lp['b_ih'][:, 3 * H:]
        y_f, h_f = _gru_dir_ref(x, w_f, bi_f, lp['w_hh'][0], lp['b_hh'][0], hidden)
        y_brev, h_b = _gru_dir_ref(x[::-1], w_b, bi_b, lp['w_hh'][1], lp['b_hh'][1], hidden)
        x = jnp.concatenate([y_f, y_brev[::-1]], axis=-1)
        h_out += [h_f, h_b]
    h_out = jnp.stack(h_out, axis=0)
    logits = x.transpose(1, 0, 2).reshape(B * T, 2 * H) @ params['out_w'] + params['out_b']
    V = params['out_w'].shape[1]
    return logits.reshape(B, T, V), h_out


# ---------------------------------------------------------------------------

if __name__ == "__main__":
    # Small shapes consistent with the module (H multiple of 128 for lane alignment;
    # real defaults are F=H=512, E=128, V=len(voc)).  F must equal H (see forward()).
    VOC, F, E, H, L = 256, 128, 128, 128, 3
    B, T = 8, 16

    key = jax.random.PRNGKey(0)
    kp, kf, ks = jax.random.split(key, 3)
    params = init_params(kp, VOC, F, E, H, L)
    input_feature = jax.random.normal(kf, (B, F), jnp.float32)
    sequence = jax.random.randint(ks, (B, T), 0, VOC, dtype=jnp.int32)

    fwd = jax.jit(functools.partial(generator_forward, hidden_dim=H, num_layers=L))
    logits, h_out = fwd(params, input_feature, sequence)
    jax.block_until_ready((logits, h_out))

    assert logits.shape == (B, T, VOC), logits.shape
    assert h_out.shape == (2 * L, B, H), h_out.shape

    ref_logits, ref_h = reference_forward(params, input_feature, sequence,
                                          hidden_dim=H, num_layers=L)
    assert bool(jnp.all(jnp.isfinite(logits))) and bool(jnp.all(jnp.isfinite(h_out)))
    assert bool(jnp.allclose(logits, ref_logits, atol=3e-2, rtol=3e-2))
    assert bool(jnp.allclose(h_out, ref_h, atol=3e-2, rtol=3e-2))

    print("KERNEL_OK")
</pallas_src>

<mosaic_0001>
module attributes {stable_mosaic.version = 11 : i64} {
  func.func @_init_h_kernel(%arg0: memref<8x128xbf16, #tpu.memory_space<vmem>>, %arg1: memref<128x128xbf16, #tpu.memory_space<vmem>>, %arg2: memref<1x128xf32, #tpu.memory_space<vmem>>, %arg3: memref<8x128xf32, #tpu.memory_space<vmem>>) attributes {dimension_semantics = [], scalar_prefetch = 0 : i64, scratch_operands = 0 : i64, tpu.core_type = #tpu.core_type<tc>} {
    %c0 = arith.constant 0 : index
    %c0_0 = arith.constant 0 : index
    %0 = vector.load %arg0[%c0, %c0_0] : memref<8x128xbf16, #tpu.memory_space<vmem>>, vector<8x128xbf16>
    %c0_1 = arith.constant 0 : index
    %c0_2 = arith.constant 0 : index
    %1 = vector.load %arg1[%c0_1, %c0_2] : memref<128x128xbf16, #tpu.memory_space<vmem>>, vector<128x128xbf16>
    %cst = arith.constant dense<0.000000e+00> : vector<8x128xf32>
    %2 = tpu.matmul %0, %1, %cst {dimension_numbers = #tpu.dot_dimension_numbers<[1], [0], [0], [1], [0, 0, 1, 1], [], []>} : vector<8x128xbf16>, vector<128x128xbf16>, vector<8x128xf32> -> vector<8x128xf32>
    %c0_3 = arith.constant 0 : index
    %c0_4 = arith.constant 0 : index
    %3 = vector.load %arg2[%c0_3, %c0_4] : memref<1x128xf32, #tpu.memory_space<vmem>>, vector<1x128xf32>
    %4 = vector.broadcast %3 : vector<1x128xf32> to vector<8x128xf32>
    %5 = arith.addf %2, %4 : vector<8x128xf32>
    %cst_5 = arith.constant 0.000000e+00 : f32
    %6 = vector.broadcast %cst_5 : f32 to vector<8x128xf32>
    %7 = arith.maximumf %5, %6 : vector<8x128xf32>
    %8 = arith.truncf %7 : vector<8x128xf32> to vector<8x128xbf16>
    %c0_6 = arith.constant 0 : index
    %c0_7 = arith.constant 0 : index
    %9 = vector.load %arg1[%c0_6, %c0_7] : memref<128x128xbf16, #tpu.memory_space<vmem>>, vector<128x128xbf16>
    %cst_8 = arith.constant dense<0.000000e+00> : vector<8x128xf32>
    %10 = tpu.matmul %8, %9, %cst_8 {dimension_numbers = #tpu.dot_dimension_numbers<[1], [0], [0], [1], [0, 0, 1, 1], [], []>} : vector<8x128xbf16>, vector<128x128xbf16>, vector<8x128xf32> -> vector<8x128xf32>
    %c0_9 = arith.constant 0 : index
    %c0_10 = arith.constant 0 : index
    %11 = vector.load %arg2[%c0_9, %c0_10] : memref<1x128xf32, #tpu.memory_space<vmem>>, vector<1x128xf32>
    %12 = vector.broadcast %11 : vector<1x128xf32> to vector<8x128xf32>
    %13 = arith.addf %10, %12 : vector<8x128xf32>
    %cst_11 = arith.constant 0.000000e+00 : f32
    %14 = vector.broadcast %cst_11 : f32 to vector<8x128xf32>
    %15 = arith.maximumf %13, %14 : vector<8x128xf32>
    %c0_12 = arith.constant 0 : index
    %c0_13 = arith.constant 0 : index
    %16 = vector.load %arg3[%c0_12, %c0_13] : memref<8x128xf32, #tpu.memory_space<vmem>>, vector<8x128xf32>
    tpu.vector_store %arg3[%c0_12, %c0_13], %15 {strides = array<i32>} : memref<8x128xf32, #tpu.memory_space<vmem>>, vector<8x128xf32>,
    return
  }
}

module attributes {stable_mosaic.version = 11 : i64} {
  func.func @_matmul_kernel(%arg0: i32, %arg1: i32, %arg2: i32, %arg3: memref<128x128xbf16, #tpu.memory_space<vmem>>, %arg4: memref<128x256xbf16, #tpu.memory_space<vmem>>, %arg5: memref<1x256xf32, #tpu.memory_space<vmem>>, %arg6: memref<128x256xf32, #tpu.memory_space<vmem>>, %arg7: memref<128x256xf32, #tpu.memory_space<vmem>>) attributes {dimension_semantics = [#tpu.dimension_semantics<parallel>, #tpu.dimension_semantics<parallel>, #tpu.dimension_semantics<arbitrary>], iteration_bounds = array<i64: 1, 3, 1>, scalar_prefetch = 0 : i64, scratch_operands = 1 : i64, tpu.core_type = #tpu.core_type<tc>, window_params = [{transform_indices = @transform_0, window_bounds = array<i64: 128, 128>}, {transform_indices = @transform_1, window_bounds = array<i64: 128, 256>}, {transform_indices = @transform_2, window_bounds = array<i64: 1, 256>}, {transform_indices = @transform_3, window_bounds = array<i64: 128, 256>}]} {
    %c0_i32 = arith.constant 0 : i32
    %0 = arith.cmpi eq, %arg2, %c0_i32 : i32
    %1 = arith.extui %0 : i1 to i32
    %c0_i32_0 = arith.constant 0 : i32
    %2 = arith.cmpi ne, %1, %c0_i32_0 : i32
    scf.if %2 {
      %cst_10 = arith.constant 0.000000e+00 : f32
      %12 = vector.broadcast %cst_10 : f32 to vector<128x256xf32>
      %c0_11 = arith.constant 0 : index
      %c0_12 = arith.constant 0 : index
      %13 = vector.load %arg7[%c0_11, %c0_12] : memref<128x256xf32, #tpu.memory_space<vmem>>, vector<128x256xf32>
      tpu.vector_store %arg7[%c0_11, %c0_12], %12 {strides = array<i32>} : memref<128x256xf32, #tpu.memory_space<vmem>>, vector<128x256xf32>,
    } else {
    }
    %c0 = arith.constant 0 : index
    %c0_1 = arith.constant 0 : index
    %3 = vector.load %arg7[%c0, %c0_1] : memref<128x256xf32, #tpu.memory_space<vmem>>, vector<128x256xf32>
    %c0_2 = arith.constant 0 : index
    %c0_3 = arith.constant 0 : index
    %4 = vector.load %arg3[%c0_2, %c0_3] : memref<128x128xbf16, #tpu.memory_space<vmem>>, vector<128x128xbf16>
    %c0_4 = arith.constant 0 : index
    %c0_5 = arith.constant 0 : index
    %5 = vector.load %arg4[%c0_4, %c0_5] : memref<128x256xbf16, #tpu.memory_space<vmem>>, vector<128x256xbf16>
    %cst = arith.constant dense<0.000000e+00> : vector<128x256xf32>
    %6 = tpu.matmul %4, %5, %cst {dimension_numbers = #tpu.dot_dimension_numbers<[1], [0], [0], [1], [0, 0, 1, 1], [], []>} : vector<128x128xbf16>, vector<128x256xbf16>, vector<128x256xf32> -> vector<128x256xf32>
    %7 = arith.addf %3, %6 : vector<128x256xf32>
    %c0_6 = arith.constant 0 : index
    %c0_7 = arith.constant 0 : index
    %8 = vector.load %arg7[%c0_6, %c0_7] : memref<128x256xf32, #tpu.memory_space<vmem>>, vector<128x256xf32>
    tpu.vector_store %arg7[%c0_6, %c0_7], %7 {strides = array<i32>} : memref<128x256xf32, #tpu.memory_space<vmem>>, vector<128x256xf32>,
    %c0_i32_8 = arith.constant 0 : i32
    %9 = arith.cmpi eq, %arg2, %c0_i32_8 : i32
    %10 = arith.extui %9 : i1 to i32
    %c0_i32_9 = arith.constant 0 : i32
    %11 = arith.cmpi ne, %10, %c0_i32_9 : i32
    scf.if %11 {
      %c0_10 = arith.constant 0 : index
      %c0_11 = arith.constant 0 : index
      %12 = vector.load %arg7[%c0_10, %c0_11] : memref<128x256xf32, #tpu.memory_space<vmem>>, vector<128x256xf32>
      %c0_12 = arith.constant 0 : index
      %c0_13 = arith.constant 0 : index
      %13 = vector.load %arg5[%c0_12, %c0_13] : memref<1x256xf32, #tpu.memory_space<vmem>>, vector<1x256xf32>
      %14 = vector.broadcast %13 : vector<1x256xf32> to vector<128x256xf32>
      %15 = arith.addf %12, %14 : vector<128x256xf32>
      %c0_14 = arith.constant 0 : index
      %c0_15 = arith.constant 0 : index
      %16 = vector.load %arg6[%c0_14, %c0_15] : memref<128x256xf32, #tpu.memory_space<vmem>>, vector<128x256xf32>
      tpu.vector_store %arg6[%c0_14, %c0_15], %15 {strides = array<i32>} : memref<128x256xf32, #tpu.memory_space<vmem>>, vector<128x256xf32>,
    } else {
    }
    return
  }
  func.func @transform_0(%arg0: i32, %arg1: i32, %arg2: i32) -> (i32, i32) {
    %c0_i32 = arith.constant 0 : i32
    return %arg0, %arg2 : i32, i32
  }
  func.func @transform_1(%arg0: i32, %arg1: i32, %arg2: i32) -> (i32, i32) {
    %c0_i32 = arith.constant 0 : i32
    return %arg2, %arg1 : i32, i32
  }
  func.func @transform_2(%arg0: i32, %arg1: i32, %arg2: i32) -> (i32, i32) {
    %c0_i32 = arith.constant 0 : i32
    %c0_i32_0 = arith.constant 0 : i32
    return %c0_i32, %arg1 : i32, i32
  }
  func.func @transform_3(%arg0: i32, %arg1: i32, %arg2: i32) -> (i32, i32) {
    %c0_i32 = arith.constant 0 : i32
    return %arg0, %arg1 : i32, i32
  }
}

module attributes {stable_mosaic.version = 11 : i64} {
  func.func @_bigru_kernel(%arg0: i32, %arg1: i32, %arg2: memref<8x8x384xf32, #tpu.memory_space<vmem>>, %arg3: memref<1x128x384xbf16, #tpu.memory_space<vmem>>, %arg4: memref<1x1x384xf32, #tpu.memory_space<vmem>>, %arg5: memref<1x8x128xf32, #tpu.memory_space<vmem>>, %arg6: memref<8x8x128xbf16, #tpu.memory_space<vmem>>, %arg7: memref<1x8x128xf32, #tpu.memory_space<vmem>>, %arg8: memref<8x128xf32, #tpu.memory_space<vmem>>) attributes {dimension_semantics = [#tpu.dimension_semantics<parallel>, #tpu.dimension_semantics<arbitrary>], iteration_bounds = array<i64: 2, 2>, scalar_prefetch = 0 : i64, scratch_operands = 1 : i64, tpu.core_type = #tpu.core_type<tc>, window_params = [{transform_indices = @transform_0, window_bounds = array<i64: 8, 8, 384>}, {transform_indices = @transform_1, window_bounds = array<i64: 1, 128, 384>}, {transform_indices = @transform_2, window_bounds = array<i64: 1, 1, 384>}, {transform_indices = @transform_3, window_bounds = array<i64: 1, 8, 128>}, {transform_indices = @transform_4, window_bounds = array<i64: 8, 8, 128>}, {transform_indices = @transform_5, window_bounds = array<i64: 1, 8, 128>}]} {
    %c0_i32 = arith.constant 0 : i32
    %0 = arith.cmpi eq, %arg1, %c0_i32 : i32
    %1 = arith.extui %0 : i1 to i32
    %c0_i32_0 = arith.constant 0 : i32
    %2 = arith.cmpi ne, %1, %c0_i32_0 : i32
    scf.if %2 {
      %c0_112 = arith.constant 0 : index
      %c0_113 = arith.constant 0 : index
      %c0_114 = arith.constant 0 : index
      %346 = vector.load %arg5[%c0_112, %c0_113, %c0_114] : memref<1x8x128xf32, #tpu.memory_space<vmem>>, vector<1x8x128xf32>
      %347 = vector.shape_cast %346 : vector<1x8x128xf32> to vector<8x128xf32>
      %c0_115 = arith.constant 0 : index
      %c0_116 = arith.constant 0 : index
      %348 = vector.load %arg8[%c0_115, %c0_116] : memref<8x128xf32, #tpu.memory_space<vmem>>, vector<8x128xf32>
      tpu.vector_store %arg8[%c0_115, %c0_116], %347 {strides = array<i32>} : memref<8x128xf32, #tpu.memory_space<vmem>>, vector<8x128xf32>,
    } else {
    }
    %c0 = arith.constant 0 : index
    %c0_1 = arith.constant 0 : index
    %c0_2 = arith.constant 0 : index
    %3 = vector.load %arg3[%c0, %c0_1, %c0_2] : memref<1x128x384xbf16, #tpu.memory_space<vmem>>, vector<1x128x384xbf16>
    %4 = vector.shape_cast %3 : vector<1x128x384xbf16> to vector<128x384xbf16>
    %c0_3 = arith.constant 0 : index
    %c0_4 = arith.constant 0 : index
    %c0_5 = arith.constant 0 : index
    %5 = vector.load %arg4[%c0_3, %c0_4, %c0_5] : memref<1x1x384xf32, #tpu.memory_space<vmem>>, vector<1x1x384xf32>
    %6 = vector.shape_cast %5 : vector<1x1x384xf32> to vector<1x384xf32>
    %c0_i32_6 = arith.constant 0 : i32
    %c2_i32 = arith.constant 2 : i32
    %7 = arith.muli %c2_i32, %c0_i32_6 : i32
    %c7_i32 = arith.constant 7 : i32
    %8 = arith.subi %c7_i32, %7 : i32
    %9 = arith.muli %arg0, %8 : i32
    %10 = arith.addi %c0_i32_6, %9 : i32
    %c0_7 = arith.constant 0 : index
    %c0_8 = arith.constant 0 : index
    %11 = vector.load %arg8[%c0_7, %c0_8] : memref<8x128xf32, #tpu.memory_space<vmem>>, vector<8x128xf32>
    %12 = arith.index_cast %10 : i32 to index
    %c0_9 = arith.constant 0 : index
    %c0_10 = arith.constant 0 : index
    %13 = vector.load %arg2[%12, %c0_9, %c0_10] : memref<8x8x384xf32, #tpu.memory_space<vmem>>, vector<1x8x384xf32>
    %14 = vector.shape_cast %13 : vector<1x8x384xf32> to vector<8x384xf32>
    %15 = arith.truncf %11 : vector<8x128xf32> to vector<8x128xbf16>
    %cst = arith.constant dense<0.000000e+00> : vector<8x384xf32>
    %16 = tpu.matmul %15, %4, %cst {dimension_numbers = #tpu.dot_dimension_numbers<[1], [0], [0], [1], [0, 0, 1, 1], [], []>} : vector<8x128xbf16>, vector<128x384xbf16>, vector<8x384xf32> -> vector<8x384xf32>
    %17 = vector.broadcast %6 : vector<1x384xf32> to vector<8x384xf32>
    %18 = arith.addf %16, %17 : vector<8x384xf32>
    %19 = vector.extract_strided_slice %14 {offsets = [0, 0], sizes = [8, 128], strides = [1, 1]} : vector<8x384xf32> to vector<8x128xf32>
    %20 = vector.extract_strided_slice %18 {offsets = [0, 0], sizes = [8, 128], strides = [1, 1]} : vector<8x384xf32> to vector<8x128xf32>
    %21 = arith.addf %19, %20 : vector<8x128xf32>
    %22 = arith.negf %21 : vector<8x128xf32>
    %23 = math.exp %22 : vector<8x128xf32>
    %cst_11 = arith.constant 1.000000e+00 : f32
    %24 = vector.broadcast %cst_11 : f32 to vector<8x128xf32>
    %25 = arith.addf %24, %23 : vector<8x128xf32>
    %26 = arith.divf %24, %25 : vector<8x128xf32>
    %27 = vector.extract_strided_slice %14 {offsets = [0, 128], sizes = [8, 128], strides = [1, 1]} : vector<8x384xf32> to vector<8x128xf32>
    %28 = vector.extract_strided_slice %18 {offsets = [0, 128], sizes = [8, 128], strides = [1, 1]} : vector<8x384xf32> to vector<8x128xf32>
    %29 = arith.addf %27, %28 : vector<8x128xf32>
    %30 = arith.negf %29 : vector<8x128xf32>
    %31 = math.exp %30 : vector<8x128xf32>
    %cst_12 = arith.constant 1.000000e+00 : f32
    %32 = vector.broadcast %cst_12 : f32 to vector<8x128xf32>
    %33 = arith.addf %32, %31 : vector<8x128xf32>
    %34 = arith.divf %32, %33 : vector<8x128xf32>
    %35 = vector.extract_strided_slice %14 {offsets = [0, 256], sizes = [8, 128], strides = [1, 1]} : vector<8x384xf32> to vector<8x128xf32>
    %36 = vector.extract_strided_slice %18 {offsets = [0, 256], sizes = [8, 128], strides = [1, 1]} : vector<8x384xf32> to vector<8x128xf32>
    %37 = arith.mulf %26, %36 : vector<8x128xf32>
    %38 = arith.addf %35, %37 : vector<8x128xf32>
    %39 = math.tanh %38 : vector<8x128xf32>
    %40 = arith.subf %11, %39 : vector<8x128xf32>
    %41 = arith.mulf %34, %40 : vector<8x128xf32>
    %42 = arith.addf %39, %41 : vector<8x128xf32>
    %c0_13 = arith.constant 0 : index
    %c0_14 = arith.constant 0 : index
    %43 = vector.load %arg8[%c0_13, %c0_14] : memref<8x128xf32, #tpu.memory_space<vmem>>, vector<8x128xf32>
    tpu.vector_store %arg8[%c0_13, %c0_14], %42 {strides = array<i32>} : memref<8x128xf32, #tpu.memory_space<vmem>>, vector<8x128xf32>,
    %44 = arith.truncf %42 : vector<8x128xf32> to vector<8x128xbf16>
    %45 = arith.index_cast %10 : i32 to index
    %c0_15 = arith.constant 0 : index
    %c0_16 = arith.constant 0 : index
    %46 = vector.load %arg6[%45, %c0_15, %c0_16] : memref<8x8x128xbf16, #tpu.memory_space<vmem>>, vector<1x8x128xbf16>
    %47 = vector.shape_cast %46 : vector<1x8x128xbf16> to vector<8x128xbf16>
    %48 = vector.shape_cast %44 : vector<8x128xbf16> to vector<1x8x128xbf16>
    tpu.vector_store %arg6[%45, %c0_15, %c0_16], %48 {strides = array<i32>} : memref<8x8x128xbf16, #tpu.memory_space<vmem>>, vector<1x8x128xbf16>,
    %c1_i32 = arith.constant 1 : i32
    %c2_i32_17 = arith.constant 2 : i32
    %49 = arith.muli %c2_i32_17, %c1_i32 : i32
    %c7_i32_18 = arith.constant 7 : i32
    %50 = arith.subi %c7_i32_18, %49 : i32
    %51 = arith.muli %arg0, %50 : i32
    %52 = arith.addi %c1_i32, %51 : i32
    %c0_19 = arith.constant 0 : index
    %c0_20 = arith.constant 0 : index
    %53 = vector.load %arg8[%c0_19, %c0_20] : memref<8x128xf32, #tpu.memory_space<vmem>>, vector<8x128xf32>
    %54 = arith.index_cast %52 : i32 to index
    %c0_21 = arith.constant 0 : index
    %c0_22 = arith.constant 0 : index
    %55 = vector.load %arg2[%54, %c0_21, %c0_22] : memref<8x8x384xf32, #tpu.memory_space<vmem>>, vector<1x8x384xf32>
    %56 = vector.shape_cast %55 : vector<1x8x384xf32> to vector<8x384xf32>
    %57 = arith.truncf %53 : vector<8x128xf32> to vector<8x128xbf16>
    %cst_23 = arith.constant dense<0.000000e+00> : vector<8x384xf32>
    %58 = tpu.matmul %57, %4, %cst_23 {dimension_numbers = #tpu.dot_dimension_numbers<[1], [0], [0], [1], [0, 0, 1, 1], [], []>} : vector<8x128xbf16>, vector<128x384xbf16>, vector<8x384xf32> -> vector<8x384xf32>
    %59 = vector.broadcast %6 : vector<1x384xf32> to vector<8x384xf32>
    %60 = arith.addf %58, %59 : vector<8x384xf32>
    %61 = vector.extract_strided_slice %56 {offsets = [0, 0], sizes = [8, 128], strides = [1, 1]} : vector<8x384xf32> to vector<8x128xf32>
    %62 = vector.extract_strided_slice %60 {offsets = [0, 0], sizes = [8, 128], strides = [1, 1]} : vector<8x384xf32> to vector<8x128xf32>
    %63 = arith.addf %61, %62 : vector<8x128xf32>
    %64 = arith.negf %63 : vector<8x128xf32>
    %65 = math.exp %64 : vector<8x128xf32>
    %cst_24 = arith.constant 1.000000e+00 : f32
    %66 = vector.broadcast %cst_24 : f32 to vector<8x128xf32>
    %67 = arith.addf %66, %65 : vector<8x128xf32>
    %68 = arith.divf %66, %67 : vector<8x128xf32>
    %69 = vector.extract_strided_slice %56 {offsets = [0, 128], sizes = [8, 128], strides = [1, 1]} : vector<8x384xf32> to vector<8x128xf32>
    %70 = vector.extract_strided_slice %60 {offsets = [0, 128], sizes = [8, 128], strides = [1, 1]} : vector<8x384xf32> to vector<8x128xf32>
    %71 = arith.addf %69, %70 : vector<8x128xf32>
    %72 = arith.negf %71 : vector<8x128xf32>
    %73 = math.exp %72 : vector<8x128xf32>
    %cst_25 = arith.constant 1.000000e+00 : f32
    %74 = vector.broadcast %cst_25 : f32 to vector<8x128xf32>
    %75 = arith.addf %74, %73 : vector<8x128xf32>
    %76 = arith.divf %74, %75 : vector<8x128xf32>
    %77 = vector.extract_strided_slice %56 {offsets = [0, 256], sizes = [8, 128], strides = [1, 1]} : vector<8x384xf32> to vector<8x128xf32>
    %78 = vector.extract_strided_slice %60 {offsets = [0, 256], sizes = [8, 128], strides = [1, 1]} : vector<8x384xf32> to vector<8x128xf32>
    %79 = arith.mulf %68, %78 : vector<8x128xf32>
    %80 = arith.addf %77, %79 : vector<8x128xf32>
    %81 = math.tanh %80 : vector<8x128xf32>
    %82 = arith.subf %53, %81 : vector<8x128xf32>
    %83 = arith.mulf %76, %82 : vector<8x128xf32>
    %84 = arith.addf %81, %83 : vector<8x128xf32>
    %c0_26 = arith.constant 0 : index
    %c0_27 = arith.constant 0 : index
    %85 = vector.load %arg8[%c0_26, %c0_27] : memref<8x128xf32, #tpu.memory_space<vmem>>, vector<8x128xf32>
    tpu.vector_store %arg8[%c0_26, %c0_27], %84 {strides = array<i32>} : memref<8x128xf32, #tpu.memory_space<vmem>>, vector<8x128xf32>,
    %86 = arith.truncf %84 : vector<8x128xf32> to vector<8x128xbf16>
    %87 = arith.index_cast %52 : i32 to index
    %c0_28 = arith.constant 0 : index
    %c0_29 = arith.constant 0 : index
    %88 = vector.load %arg6[%87, %c0_28, %c0_29] : memref<8x8x128xbf16, #tpu.memory_space<vmem>>, vector<1x8x128xbf16>
    %89 = vector.shape_cast %88 : vector<1x8x128xbf16> to vector<8x128xbf16>
    %90 = vector.shape_cast %86 : vector<8x128xbf16> to vector<1x8x128xbf16>
    tpu.vector_store %arg6[%87, %c0_28, %c0_29], %90 {strides = array<i32>} : memref<8x8x128xbf16, #tpu.memory_space<vmem>>, vector<1x8x128xbf16>,
    %c2_i32_30 = arith.constant 2 : i32
    %c2_i32_31 = arith.constant 2 : i32
    %91 = arith.muli %c2_i32_31, %c2_i32_30 : i32
    %c7_i32_32 = arith.constant 7 : i32
    %92 = arith.subi %c7_i32_32, %91 : i32
    %93 = arith.muli %arg0, %92 : i32
    %94 = arith.addi %c2_i32_30, %93 : i32
    %c0_33 = arith.constant 0 : index
    %c0_34 = arith.constant 0 : index
    %95 = vector.load %arg8[%c0_33, %c0_34] : memref<8x128xf32, #tpu.memory_space<vmem>>, vector<8x128xf32>
    %96 = arith.index_cast %94 : i32 to index
    %c0_35 = arith.constant 0 : index
    %c0_36 = arith.constant 0 : index
    %97 = vector.load %arg2[%96, %c0_35, %c0_36] : memref<8x8x384xf32, #tpu.memory_space<vmem>>, vector<1x8x384xf32>
    %98 = vector.shape_cast %97 : vector<1x8x384xf32> to vector<8x384xf32>
    %99 = arith.truncf %95 : vector<8x128xf32> to vector<8x128xbf16>
    %cst_37 = arith.constant dense<0.000000e+00> : vector<8x384xf32>
    %100 = tpu.matmul %99, %4, %cst_37 {dimension_numbers = #tpu.dot_dimension_numbers<[1], [0], [0], [1], [0, 0, 1, 1], [], []>} : vector<8x128xbf16>, vector<128x384xbf16>, vector<8x384xf32> -> vector<8x384xf32>
    %101 = vector.broadcast %6 : vector<1x384xf32> to vector<8x384xf32>
    %102 = arith.addf %100, %101 : vector<8x384xf32>
    %103 = vector.extract_strided_slice %98 {offsets = [0, 0], sizes = [8, 128], strides = [1, 1]} : vector<8x384xf32> to vector<8x128xf32>
    %104 = vector.extract_strided_slice %102 {offsets = [0, 0], sizes = [8, 128], strides = [1, 1]} : vector<8x384xf32> to vector<8x128xf32>
    %105 = arith.addf %103, %104 : vector<8x128xf32>
    %106 = arith.negf %105 : vector<8x128xf32>
    %107 = math.exp %106 : vector<8x128xf32>
    %cst_38 = arith.constant 1.000000e+00 : f32
    %108 = vector.broadcast %cst_38 : f32 to vector<8x128xf32>
    %109 = arith.addf %108, %107 : vector<8x128xf32>
    %110 = arith.divf %108, %109 : vector<8x128xf32>
    %111 = vector.extract_strided_slice %98 {offsets = [0, 128], sizes = [8, 128], strides = [1, 1]} : vector<8x384xf32> to vector<8x128xf32>
    %112 = vector.extract_strided_slice %102 {offsets = [0, 128], sizes = [8, 128], strides = [1, 1]} : vector<8x384xf32> to vector<8x128xf32>
    %113 = arith.addf %111, %112 : vector<8x128xf32>
    %114 = arith.negf %113 : vector<8x128xf32>
    %115 = math.exp %114 : vector<8x128xf32>
    %cst_39 = arith.constant 1.000000e+00 : f32
    %116 = vector.broadcast %cst_39 : f32 to vector<8x128xf32>
    %117 = arith.addf %116, %115 : vector<8x128xf32>
    %118 = arith.divf %116, %117 : vector<8x128xf32>
    %119 = vector.extract_strided_slice %98 {offsets = [0, 256], sizes = [8, 128], strides = [1, 1]} : vector<8x384xf32> to vector<8x128xf32>
    %120 = vector.extract_strided_slice %102 {offsets = [0, 256], sizes = [8, 128], strides = [1, 1]} : vector<8x384xf32> to vector<8x128xf32>
    %121 = arith.mulf %110, %120 : vector<8x128xf32>
    %122 = arith.addf %119, %121 : vector<8x128xf32>
    %123 = math.tanh %122 : vector<8x128xf32>
    %124 = arith.subf %95, %123 : vector<8x128xf32>
    %125 = arith.mulf %118, %124 : vector<8x128xf32>
    %126 = arith.addf %123, %125 : vector<8x128xf32>
    %c0_40 = arith.constant 0 : index
    %c0_41 = arith.constant 0 : index
    %127 = vector.load %arg8[%c0_40, %c0_41] : memref<8x128xf32, #tpu.memory_space<vmem>>, vector<8x128xf32>
    tpu.vector_store %arg8[%c0_40, %c0_41], %126 {strides = array<i32>} : memref<8x128xf32, #tpu.memory_space<vmem>>, vector<8x128xf32>,
    %128 = arith.truncf %126 : vector<8x128xf32> to vector<8x128xbf16>
    %129 = arith.index_cast %94 : i32 to index
    %c0_42 = arith.constant 0 : index
    %c0_43 = arith.constant 0 : index
    %130 = vector.load %arg6[%129, %c0_42, %c0_43] : memref<8x8x128xbf16, #tpu.memory_space<vmem>>, vector<1x8x128xbf16>
    %131 = vector.shape_cast %130 : vector<1x8x128xbf16> to vector<8x128xbf16>
    %132 = vector.shape_cast %128 : vector<8x128xbf16> to vector<1x8x128xbf16>
    tpu.vector_store %arg6[%129, %c0_42, %c0_43], %132 {strides = array<i32>} : memref<8x8x128xbf16, #tpu.memory_space<vmem>>, vector<1x8x128xbf16>,
    %c3_i32 = arith.constant 3 : i32
    %c2_i32_44 = arith.constant 2 : i32
    %133 = arith.muli %c2_i32_44, %c3_i32 : i32
    %c7_i32_45 = arith.constant 7 : i32
    %134 = arith.subi %c7_i32_45, %133 : i32
    %135 = arith.muli %arg0, %134 : i32
    %136 = arith.addi %c3_i32, %135 : i32
    %c0_46 = arith.constant 0 : index
    %c0_47 = arith.constant 0 : index
    %137 = vector.load %arg8[%c0_46, %c0_47] : memref<8x128xf32, #tpu.memory_space<vmem>>, vector<8x128xf32>
    %138 = arith.index_cast %136 : i32 to index
    %c0_48 = arith.constant 0 : index
    %c0_49 = arith.constant 0 : index
    %139 = vector.load %arg2[%138, %c0_48, %c0_49] : memref<8x8x384xf32, #tpu.memory_space<vmem>>, vector<1x8x384xf32>
    %140 = vector.shape_cast %139 : vector<1x8x384xf32> to vector<8x384xf32>
    %141 = arith.truncf %137 : vector<8x128xf32> to vector<8x128xbf16>
    %cst_50 = arith.constant dense<0.000000e+00> : vector<8x384xf32>
    %142 = tpu.matmul %141, %4, %cst_50 {dimension_numbers = #tpu.dot_dimension_numbers<[1], [0], [0], [1], [0, 0, 1, 1], [], []>} : vector<8x128xbf16>, vector<128x384xbf16>, vector<8x384xf32> -> vector<8x384xf32>
    %143 = vector.broadcast %6 : vector<1x384xf32> to vector<8x384xf32>
    %144 = arith.addf %142, %143 : vector<8x384xf32>
    %145 = vector.extract_strided_slice %140 {offsets = [0, 0], sizes = [8, 128], strides = [1, 1]} : vector<8x384xf32> to vector<8x128xf32>
    %146 = vector.extract_strided_slice %144 {offsets = [0, 0], sizes = [8, 128], strides = [1, 1]} : vector<8x384xf32> to vector<8x128xf32>
    %147 = arith.addf %145, %146 : vector<8x128xf32>
    %148 = arith.negf %147 : vector<8x128xf32>
    %149 = math.exp %148 : vector<8x128xf32>
    %cst_51 = arith.constant 1.000000e+00 : f32
    %150 = vector.broadcast %cst_51 : f32 to vector<8x128xf32>
    %151 = arith.addf %150, %149 : vector<8x128xf32>
    %152 = arith.divf %150, %151 : vector<8x128xf32>
    %153 = vector.extract_strided_slice %140 {offsets = [0, 128], sizes = [8, 128], strides = [1, 1]} : vector<8x384xf32> to vector<8x128xf32>
    %154 = vector.extract_strided_slice %144 {offsets = [0, 128], sizes = [8, 128], strides = [1, 1]} : vector<8x384xf32> to vector<8x128xf32>
    %155 = arith.addf %153, %154 : vector<8x128xf32>
    %156 = arith.negf %155 : vector<8x128xf32>
    %157 = math.exp %156 : vector<8x128xf32>
    %cst_52 = arith.constant 1.000000e+00 : f32
    %158 = vector.broadcast %cst_52 : f32 to vector<8x128xf32>
    %159 = arith.addf %158, %157 : vector<8x128xf32>
    %160 = arith.divf %158, %159 : vector<8x128xf32>
    %161 = vector.extract_strided_slice %140 {offsets = [0, 256], sizes = [8, 128], strides = [1, 1]} : vector<8x384xf32> to vector<8x128xf32>
    %162 = vector.extract_strided_slice %144 {offsets = [0, 256], sizes = [8, 128], strides = [1, 1]} : vector<8x384xf32> to vector<8x128xf32>
    %163 = arith.mulf %152, %162 : vector<8x128xf32>
    %164 = arith.addf %161, %163 : vector<8x128xf32>
    %165 = math.tanh %164 : vector<8x128xf32>
    %166 = arith.subf %137, %165 : vector<8x128xf32>
    %167 = arith.mulf %160, %166 : vector<8x128xf32>
    %168 = arith.addf %165, %167 : vector<8x128xf32>
    %c0_53 = arith.constant 0 : index
    %c0_54 = arith.constant 0 : index
    %169 = vector.load %arg8[%c0_53, %c0_54] : memref<8x128xf32, #tpu.memory_space<vmem>>, vector<8x128xf32>
    tpu.vector_store %arg8[%c0_53, %c0_54], %168 {strides = array<i32>} : memref<8x128xf32, #tpu.memory_space<vmem>>, vector<8x128xf32>,
    %170 = arith.truncf %168 : vector<8x128xf32> to vector<8x128xbf16>
    %171 = arith.index_cast %136 : i32 to index
    %c0_55 = arith.constant 0 : index
    %c0_56 = arith.constant 0 : index
    %172 = vector.load %arg6[%171, %c0_55, %c0_56] : memref<8x8x128xbf16, #tpu.memory_space<vmem>>, vector<1x8x128xbf16>
    %173 = vector.shape_cast %172 : vector<1x8x128xbf16> to vector<8x128xbf16>
    %174 = vector.shape_cast %170 : vector<8x128xbf16> to vector<1x8x128xbf16>
    tpu.vector_store %arg6[%171, %c0_55, %c0_56], %174 {strides = array<i32>} : memref<8x8x128xbf16, #tpu.memory_space<vmem>>, vector<1x8x128xbf16>,
    %c4_i32 = arith.constant 4 : i32
    %c2_i32_57 = arith.constant 2 : i32
    %175 = arith.muli %c2_i32_57, %c4_i32 : i32
    %c7_i32_58 = arith.constant 7 : i32
    %176 = arith.subi %c7_i32_58, %175 : i32
    %177 = arith.muli %arg0, %176 : i32
    %178 = arith.addi %c4_i32, %177 : i32
    %c0_59 = arith.constant 0 : index
    %c0_60 = arith.constant 0 : index
    %179 = vector.load %arg8[%c0_59, %c0_60] : memref<8x128xf32, #tpu.memory_space<vmem>>, vector<8x128xf32>
    %180 = arith.index_cast %178 : i32 to index
    %c0_61 = arith.constant 0 : index
    %c0_62 = arith.constant 0 : index
    %181 = vector.load %arg2[%180, %c0_61, %c0_62] : memref<8x8x384xf32, #tpu.memory_space<vmem>>, vector<1x8x384xf32>
    %182 = vector.shape_cast %181 : vector<1x8x384xf32> to vector<8x384xf32>
    %183 = arith.truncf %179 : vector<8x128xf32> to vector<8x128xbf16>
    %cst_63 = arith.constant dense<0.000000e+00> : vector<8x384xf32>
    %184 = tpu.matmul %183, %4, %cst_63 {dimension_numbers = #tpu.dot_dimension_numbers<[1], [0], [0], [1], [0, 0, 1, 1], [], []>} : vector<8x128xbf16>, vector<128x384xbf16>, vector<8x384xf32> -> vector<8x384xf32>
    %185 = vector.broadcast %6 : vector<1x384xf32> to vector<8x384xf32>
    %186 = arith.addf %184, %185 : vector<8x384xf32>
    %187 = vector.extract_strided_slice %182 {offsets = [0, 0], sizes = [8, 128], strides = [1, 1]} : vector<8x384xf32> to vector<8x128xf32>
    %188 = vector.extract_strided_slice %186 {offsets = [0, 0], sizes = [8, 128], strides = [1, 1]} : vector<8x384xf32> to vector<8x128xf32>
    %189 = arith.addf %187, %188 : vector<8x128xf32>
    %190 = arith.negf %189 : vector<8x128xf32>
    %191 = math.exp %190 : vector<8x128xf32>
    %cst_64 = arith.constant 1.000000e+00 : f32
    %192 = vector.broadcast %cst_64 : f32 to vector<8x128xf32>
    %193 = arith.addf %192, %191 : vector<8x128xf32>
    %194 = arith.divf %192, %193 : vector<8x128xf32>
    %195 = vector.extract_strided_slice %182 {offsets = [0, 128], sizes = [8, 128], strides = [1, 1]} : vector<8x384xf32> to vector<8x128xf32>
    %196 = vector.extract_strided_slice %186 {offsets = [0, 128], sizes = [8, 128], strides = [1, 1]} : vector<8x384xf32> to vector<8x128xf32>
    %197 = arith.addf %195, %196 : vector<8x128xf32>
    %198 = arith.negf %197 : vector<8x128xf32>
    %199 = math.exp %198 : vector<8x128xf32>
    %cst_65 = arith.constant 1.000000e+00 : f32
    %200 = vector.broadcast %cst_65 : f32 to vector<8x128xf32>
    %201 = arith.addf %200, %199 : vector<8x128xf32>
    %202 = arith.divf %200, %201 : vector<8x128xf32>
    %203 = vector.extract_strided_slice %182 {offsets = [0, 256], sizes = [8, 128], strides = [1, 1]} : vector<8x384xf32> to vector<8x128xf32>
    %204 = vector.extract_strided_slice %186 {offsets = [0, 256], sizes = [8, 128], strides = [1, 1]} : vector<8x384xf32> to vector<8x128xf32>
    %205 = arith.mulf %194, %204 : vector<8x128xf32>
    %206 = arith.addf %203, %205 : vector<8x128xf32>
    %207 = math.tanh %206 : vector<8x128xf32>
    %208 = arith.subf %179, %207 : vector<8x128xf32>
    %209 = arith.mulf %202, %208 : vector<8x128xf32>
    %210 = arith.addf %207, %209 : vector<8x128xf32>
    %c0_66 = arith.constant 0 : index
    %c0_67 = arith.constant 0 : index
    %211 = vector.load %arg8[%c0_66, %c0_67] : memref<8x128xf32, #tpu.memory_space<vmem>>, vector<8x128xf32>
    tpu.vector_store %arg8[%c0_66, %c0_67], %210 {strides = array<i32>} : memref<8x128xf32, #tpu.memory_space<vmem>>, vector<8x128xf32>,
    %212 = arith.truncf %210 : vector<8x128xf32> to vector<8x128xbf16>
    %213 = arith.index_cast %178 : i32 to index
    %c0_68 = arith.constant 0 : index
    %c0_69 = arith.constant 0 : index
    %214 = vector.load %arg6[%213, %c0_68, %c0_69] : memref<8x8x128xbf16, #tpu.memory_space<vmem>>, vector<1x8x128xbf16>
    %215 = vector.shape_cast %214 : vector<1x8x128xbf16> to vector<8x128xbf16>
    %216 = vector.shape_cast %212 : vector<8x128xbf16> to vector<1x8x128xbf16>
    tpu.vector_store %arg6[%213, %c0_68, %c0_69], %216 {strides = array<i32>} : memref<8x8x128xbf16, #tpu.memory_space<vmem>>, vector<1x8x128xbf16>,
    %c5_i32 = arith.constant 5 : i32
    %c2_i32_70 = arith.constant 2 : i32
    %217 = arith.muli %c2_i32_70, %c5_i32 : i32
    %c7_i32_71 = arith.constant 7 : i32
    %218 = arith.subi %c7_i32_71, %217 : i32
    %219 = arith.muli %arg0, %218 : i32
    %220 = arith.addi %c5_i32, %219 : i32
    %c0_72 = arith.constant 0 : index
    %c0_73 = arith.constant 0 : index
    %221 = vector.load %arg8[%c0_72, %c0_73] : memref<8x128xf32, #tpu.memory_space<vmem>>, vector<8x128xf32>
    %222 = arith.index_cast %220 : i32 to index
    %c0_74 = arith.constant 0 : index
    %c0_75 = arith.constant 0 : index
    %223 = vector.load %arg2[%222, %c0_74, %c0_75] : memref<8x8x384xf32, #tpu.memory_space<vmem>>, vector<1x8x384xf32>
    %224 = vector.shape_cast %223 : vector<1x8x384xf32> to vector<8x384xf32>
    %225 = arith.truncf %221 : vector<8x128xf32> to vector<8x128xbf16>
    %cst_76 = arith.constant dense<0.000000e+00> : vector<8x384xf32>
    %226 = tpu.matmul %225, %4, %cst_76 {dimension_numbers = #tpu.dot_dimension_numbers<[1], [0], [0], [1], [0, 0, 1, 1], [], []>} : vector<8x128xbf16>, vector<128x384xbf16>, vector<8x384xf32> -> vector<8x384xf32>
    %227 = vector.broadcast %6 : vector<1x384xf32> to vector<8x384xf32>
    %228 = arith.addf %226, %227 : vector<8x384xf32>
    %229 = vector.extract_strided_slice %224 {offsets = [0, 0], sizes = [8, 128], strides = [1, 1]} : vector<8x384xf32> to vector<8x128xf32>
    %230 = vector.extract_strided_slice %228 {offsets = [0, 0], sizes = [8, 128], strides = [1, 1]} : vector<8x384xf32> to vector<8x128xf32>
    %231 = arith.addf %229, %230 : vector<8x128xf32>
    %232 = arith.negf %231 : vector<8x128xf32>
    %233 = math.exp %232 : vector<8x128xf32>
    %cst_77 = arith.constant 1.000000e+00 : f32
    %234 = vector.broadcast %cst_77 : f32 to vector<8x128xf32>
    %235 = arith.addf %234, %233 : vector<8x128xf32>
    %236 = arith.divf %234, %235 : vector<8x128xf32>
    %237 = vector.extract_strided_slice %224 {offsets = [0, 128], sizes = [8, 128], strides = [1, 1]} : vector<8x384xf32> to vector<8x128xf32>
    %238 = vector.extract_strided_slice %228 {offsets = [0, 128], sizes = [8, 128], strides = [1, 1]} : vector<8x384xf32> to vector<8x128xf32>
    %239 = arith.addf %237, %238 : vector<8x128xf32>
    %240 = arith.negf %239 : vector<8x128xf32>
    %241 = math.exp %240 : vector<8x128xf32>
    %cst_78 = arith.constant 1.000000e+00 : f32
    %242 = vector.broadcast %cst_78 : f32 to vector<8x128xf32>
    %243 = arith.addf %242, %241 : vector<8x128xf32>
    %244 = arith.divf %242, %243 : vector<8x128xf32>
    %245 = vector.extract_strided_slice %224 {offsets = [0, 256], sizes = [8, 128], strides = [1, 1]} : vector<8x384xf32> to vector<8x128xf32>
    %246 = vector.extract_strided_slice %228 {offsets = [0, 256], sizes = [8, 128], strides = [1, 1]} : vector<8x384xf32> to vector<8x128xf32>
    %247 = arith.mulf %236, %246 : vector<8x128xf32>
    %248 = arith.addf %245, %247 : vector<8x128xf32>
    %249 = math.tanh %248 : vector<8x128xf32>
    %250 = arith.subf %221, %249 : vector<8x128xf32>
    %251 = arith.mulf %244, %250 : vector<8x128xf32>
    %252 = arith.addf %249, %251 : vector<8x128xf32>
    %c0_79 = arith.constant 0 : index
    %c0_80 = arith.constant 0 : index
    %253 = vector.load %arg8[%c0_79, %c0_80] : memref<8x128xf32, #tpu.memory_space<vmem>>, vector<8x128xf32>
    tpu.vector_store %arg8[%c0_79, %c0_80], %252 {strides = array<i32>} : memref<8x128xf32, #tpu.memory_space<vmem>>, vector<8x128xf32>,
    %254 = arith.truncf %252 : vector<8x128xf32> to vector<8x128xbf16>
    %255 = arith.index_cast %220 : i32 to index
    %c0_81 = arith.constant 0 : index
    %c0_82 = arith.constant 0 : index
    %256 = vector.load %arg6[%255, %c0_81, %c0_82] : memref<8x8x128xbf16, #tpu.memory_space<vmem>>, vector<1x8x128xbf16>
    %257 = vector.shape_cast %256 : vector<1x8x128xbf16> to vector<8x128xbf16>
    %258 = vector.shape_cast %254 : vector<8x128xbf16> to vector<1x8x128xbf16>
    tpu.vector_store %arg6[%255, %c0_81, %c0_82], %258 {strides = array<i32>} : memref<8x8x128xbf16, #tpu.memory_space<vmem>>, vector<1x8x128xbf16>,
    %c6_i32 = arith.constant 6 : i32
    %c2_i32_83 = arith.constant 2 : i32
    %259 = arith.muli %c2_i32_83, %c6_i32 : i32
    %c7_i32_84 = arith.constant 7 : i32
    %260 = arith.subi %c7_i32_84, %259 : i32
    %261 = arith.muli %arg0, %260 : i32
    %262 = arith.addi %c6_i32, %261 : i32
    %c0_85 = arith.constant 0 : index
    %c0_86 = arith.constant 0 : index
    %263 = vector.load %arg8[%c0_85, %c0_86] : memref<8x128xf32, #tpu.memory_space<vmem>>, vector<8x128xf32>
    %264 = arith.index_cast %262 : i32 to index
    %c0_87 = arith.constant 0 : index
    %c0_88 = arith.constant 0 : index
    %265 = vector.load %arg2[%264, %c0_87, %c0_88] : memref<8x8x384xf32, #tpu.memory_space<vmem>>, vector<1x8x384xf32>
    %266 = vector.shape_cast %265 : vector<1x8x384xf32> to vector<8x384xf32>
    %267 = arith.truncf %263 : vector<8x128xf32> to vector<8x128xbf16>
    %cst_89 = arith.constant dense<0.000000e+00> : vector<8x384xf32>
    %268 = tpu.matmul %267, %4, %cst_89 {dimension_numbers = #tpu.dot_dimension_numbers<[1], [0], [0], [1], [0, 0, 1, 1], [], []>} : vector<8x128xbf16>, vector<128x384xbf16>, vector<8x384xf32> -> vector<8x384xf32>
    %269 = vector.broadcast %6 : vector<1x384xf32> to vector<8x384xf32>
    %270 = arith.addf %268, %269 : vector<8x384xf32>
    %271 = vector.extract_strided_slice %266 {offsets = [0, 0], sizes = [8, 128], strides = [1, 1]} : vector<8x384xf32> to vector<8x128xf32>
    %272 = vector.extract_strided_slice %270 {offsets = [0, 0], sizes = [8, 128], strides = [1, 1]} : vector<8x384xf32> to vector<8x128xf32>
    %273 = arith.addf %271, %272 : vector<8x128xf32>
    %274 = arith.negf %273 : vector<8x128xf32>
    %275 = math.exp %274 : vector<8x128xf32>
    %cst_90 = arith.constant 1.000000e+00 : f32
    %276 = vector.broadcast %cst_90 : f32 to vector<8x128xf32>
    %277 = arith.addf %276, %275 : vector<8x128xf32>
    %278 = arith.divf %276, %277 : vector<8x128xf32>
    %279 = vector.extract_strided_slice %266 {offsets = [0, 128], sizes = [8, 128], strides = [1, 1]} : vector<8x384xf32> to vector<8x128xf32>
    %280 = vector.extract_strided_slice %270 {offsets = [0, 128], sizes = [8, 128], strides = [1, 1]} : vector<8x384xf32> to vector<8x128xf32>
    %281 = arith.addf %279, %280 : vector<8x128xf32>
    %282 = arith.negf %281 : vector<8x128xf32>
    %283 = math.exp %282 : vector<8x128xf32>
    %cst_91 = arith.constant 1.000000e+00 : f32
    %284 = vector.broadcast %cst_91 : f32 to vector<8x128xf32>
    %285 = arith.addf %284, %283 : vector<8x128xf32>
    %286 = arith.divf %284, %285 : vector<8x128xf32>
    %287 = vector.extract_strided_slice %266 {offsets = [0, 256], sizes = [8, 128], strides = [1, 1]} : vector<8x384xf32> to vector<8x128xf32>
    %288 = vector.extract_strided_slice %270 {offsets = [0, 256], sizes = [8, 128], strides = [1, 1]} : vector<8x384xf32> to vector<8x128xf32>
    %289 = arith.mulf %278, %288 : vector<8x128xf32>
    %290 = arith.addf %287, %289 : vector<8x128xf32>
    %291 = math.tanh %290 : vector<8x128xf32>
    %292 = arith.subf %263, %291 : vector<8x128xf32>
    %293 = arith.mulf %286, %292 : vector<8x128xf32>
    %294 = arith.addf %291, %293 : vector<8x128xf32>
    %c0_92 = arith.constant 0 : index
    %c0_93 = arith.constant 0 : index
    %295 = vector.load %arg8[%c0_92, %c0_93] : memref<8x128xf32, #tpu.memory_space<vmem>>, vector<8x128xf32>
    tpu.vector_store %arg8[%c0_92, %c0_93], %294 {strides = array<i32>} : memref<8x128xf32, #tpu.memory_space<vmem>>, vector<8x128xf32>,
    %296 = arith.truncf %294 : vector<8x128xf32> to vector<8x128xbf16>
    %297 = arith.index_cast %262 : i32 to index
    %c0_94 = arith.constant 0 : index
    %c0_95 = arith.constant 0 : index
    %298 = vector.load %arg6[%297, %c0_94, %c0_95] : memref<8x8x128xbf16, #tpu.memory_space<vmem>>, vector<1x8x128xbf16>
    %299 = vector.shape_cast %298 : vector<1x8x128xbf16> to vector<8x128xbf16>
    %300 = vector.shape_cast %296 : vector<8x128xbf16> to vector<1x8x128xbf16>
    tpu.vector_store %arg6[%297, %c0_94, %c0_95], %300 {strides = array<i32>} : memref<8x8x128xbf16, #tpu.memory_space<vmem>>, vector<1x8x128xbf16>,
    %c7_i32_96 = arith.constant 7 : i32
    %c2_i32_97 = arith.constant 2 : i32
    %301 = arith.muli %c2_i32_97, %c7_i32_96 : i32
    %c7_i32_98 = arith.constant 7 : i32
    %302 = arith.subi %c7_i32_98, %301 : i32
    %303 = arith.muli %arg0, %302 : i32
    %304 = arith.addi %c7_i32_96, %303 : i32
    %c0_99 = arith.constant 0 : index
    %c0_100 = arith.constant 0 : index
    %305 = vector.load %arg8[%c0_99, %c0_100] : memref<8x128xf32, #tpu.memory_space<vmem>>, vector<8x128xf32>
    %306 = arith.index_cast %304 : i32 to index
    %c0_101 = arith.constant 0 : index
    %c0_102 = arith.constant 0 : index
    %307 = vector.load %arg2[%306, %c0_101, %c0_102] : memref<8x8x384xf32, #tpu.memory_space<vmem>>, vector<1x8x384xf32>
    %308 = vector.shape_cast %307 : vector<1x8x384xf32> to vector<8x384xf32>
    %309 = arith.truncf %305 : vector<8x128xf32> to vector<8x128xbf16>
    %cst_103 = arith.constant dense<0.000000e+00> : vector<8x384xf32>
    %310 = tpu.matmul %309, %4, %cst_103 {dimension_numbers = #tpu.dot_dimension_numbers<[1], [0], [0], [1], [0, 0, 1, 1], [], []>} : vector<8x128xbf16>, vector<128x384xbf16>, vector<8x384xf32> -> vector<8x384xf32>
    %311 = vector.broadcast %6 : vector<1x384xf32> to vector<8x384xf32>
    %312 = arith.addf %310, %311 : vector<8x384xf32>
    %313 = vector.extract_strided_slice %308 {offsets = [0, 0], sizes = [8, 128], strides = [1, 1]} : vector<8x384xf32> to vector<8x128xf32>
    %314 = vector.extract_strided_slice %312 {offsets = [0, 0], sizes = [8, 128], strides = [1, 1]} : vector<8x384xf32> to vector<8x128xf32>
    %315 = arith.addf %313, %314 : vector<8x128xf32>
    %316 = arith.negf %315 : vector<8x128xf32>
    %317 = math.exp %316 : vector<8x128xf32>
    %cst_104 = arith.constant 1.000000e+00 : f32
    %318 = vector.broadcast %cst_104 : f32 to vector<8x128xf32>
    %319 = arith.addf %318, %317 : vector<8x128xf32>
    %320 = arith.divf %318, %319 : vector<8x128xf32>
    %321 = vector.extract_strided_slice %308 {offsets = [0, 128], sizes = [8, 128], strides = [1, 1]} : vector<8x384xf32> to vector<8x128xf32>
    %322 = vector.extract_strided_slice %312 {offsets = [0, 128], sizes = [8, 128], strides = [1, 1]} : vector<8x384xf32> to vector<8x128xf32>
    %323 = arith.addf %321, %322 : vector<8x128xf32>
    %324 = arith.negf %323 : vector<8x128xf32>
    %325 = math.exp %324 : vector<8x128xf32>
    %cst_105 = arith.constant 1.000000e+00 : f32
    %326 = vector.broadcast %cst_105 : f32 to vector<8x128xf32>
    %327 = arith.addf %326, %325 : vector<8x128xf32>
    %328 = arith.divf %326, %327 : vector<8x128xf32>
    %329 = vector.extract_strided_slice %308 {offsets = [0, 256], sizes = [8, 128], strides = [1, 1]} : vector<8x384xf32> to vector<8x128xf32>
    %330 = vector.extract_strided_slice %312 {offsets = [0, 256], sizes = [8, 128], strides = [1, 1]} : vector<8x384xf32> to vector<8x128xf32>
    %331 = arith.mulf %320, %330 : vector<8x128xf32>
    %332 = arith.addf %329, %331 : vector<8x128xf32>
    %333 = math.tanh %332 : vector<8x128xf32>
    %334 = arith.subf %305, %333 : vector<8x128xf32>
    %335 = arith.mulf %328, %334 : vector<8x128xf32>
    %336 = arith.addf %333, %335 : vector<8x128xf32>
    %c0_106 = arith.constant 0 : index
    %c0_107 = arith.constant 0 : index
    %337 = vector.load %arg8[%c0_106, %c0_107] : memref<8x128xf32, #tpu.memory_space<vmem>>, vector<8x128xf32>
    tpu.vector_store %arg8[%c0_106, %c0_107], %336 {strides = array<i32>} : memref<8x128xf32, #tpu.memory_space<vmem>>, vector<8x128xf32>,
    %338 = arith.truncf %336 : vector<8x128xf32> to vector<8x128xbf16>
    %339 = arith.index_cast %304 : i32 to index
    %c0_108 = arith.constant 0 : index
    %c0_109 = arith.constant 0 : index
    %340 = vector.load %arg6[%339, %c0_108, %c0_109] : memref<8x8x128xbf16, #tpu.memory_space<vmem>>, vector<1x8x128xbf16>
    %341 = vector.shape_cast %340 : vector<1x8x128xbf16> to vector<8x128xbf16>
    %342 = vector.shape_cast %338 : vector<8x128xbf16> to vector<1x8x128xbf16>
    tpu.vector_store %arg6[%339, %c0_108, %c0_109], %342 {strides = array<i32>} : memref<8x8x128xbf16, #tpu.memory_space<vmem>>, vector<1x8x128xbf16>,
    %c8_i32 = arith.constant 8 : i32
    %c1_i32_110 = arith.constant 1 : i32
    %343 = arith.cmpi eq, %arg1, %c1_i32_110 : i32
    %344 = arith.extui %343 : i1 to i32
    %c0_i32_111 = arith.constant 0 : i32
    %345 = arith.cmpi ne, %344, %c0_i32_111 : i32
    scf.if %345 {
      %c0_112 = arith.constant 0 : index
      %c0_113 = arith.constant 0 : index
      %346 = vector.load %arg8[%c0_112, %c0_113] : memref<8x128xf32, #tpu.memory_space<vmem>>, vector<8x128xf32>
      %c0_114 = arith.constant 0 : index
      %c0_115 = arith.constant 0 : index
      %c0_116 = arith.constant 0 : index
      %347 = vector.load %arg7[%c0_114, %c0_115, %c0_116] : memref<1x8x128xf32, #tpu.memory_space<vmem>>, vector<1x8x128xf32>
      %348 = vector.shape_cast %347 : vector<1x8x128xf32> to vector<8x128xf32>
      %349 = vector.shape_cast %346 : vector<8x128xf32> to vector<1x8x128xf32>
      tpu.vector_store %arg7[%c0_114, %c0_115, %c0_116], %349 {strides = array<i32>} : memref<1x8x128xf32, #tpu.memory_space<vmem>>, vector<1x8x128xf32>,
    } else {
    }
    return
  }
  func.func @transform_0(%arg0: i32, %arg1: i32) -> (i32, i32, i32) {
    %c2_i32 = arith.constant 2 : i32
    %0 = arith.muli %c2_i32, %arg1 : i32
    %c1_i32 = arith.constant 1 : i32
    %1 = arith.subi %c1_i32, %0 : i32
    %2 = arith.muli %arg0, %1 : i32
    %3 = arith.addi %arg1, %2 : i32
    %c0_i32 = arith.constant 0 : i32
    %c0_i32_0 = arith.constant 0 : i32
    return %3, %c0_i32, %arg0 : i32, i32, i32
  }
  func.func @transform_1(%arg0: i32, %arg1: i32) -> (i32, i32, i32) {
    %c0_i32 = arith.constant 0 : i32
    %c0_i32_0 = arith.constant 0 : i32
    %c0_i32_1 = arith.constant 0 : i32
    return %arg0, %c0_i32, %c0_i32_0 : i32, i32, i32
  }
  func.func @transform_2(%arg0: i32, %arg1: i32) -> (i32, i32, i32) {
    %c0_i32 = arith.constant 0 : i32
    %c0_i32_0 = arith.constant 0 : i32
    %c0_i32_1 = arith.constant 0 : i32
    return %arg0, %c0_i32, %c0_i32_0 : i32, i32, i32
  }
  func.func @transform_3(%arg0: i32, %arg1: i32) -> (i32, i32, i32) {
    %c0_i32 = arith.constant 0 : i32
    %c0_i32_0 = arith.constant 0 : i32
    %c0_i32_1 = arith.constant 0 : i32
    return %arg0, %c0_i32, %c0_i32_0 : i32, i32, i32
  }
  func.func @transform_4(%arg0: i32, %arg1: i32) -> (i32, i32, i32) {
    %c2_i32 = arith.constant 2 : i32
    %0 = arith.muli %c2_i32, %arg1 : i32
    %c1_i32 = arith.constant 1 : i32
    %1 = arith.subi %c1_i32, %0 : i32
    %2 = arith.muli %arg0, %1 : i32
    %3 = arith.addi %arg1, %2 : i32
    %c0_i32 = arith.constant 0 : i32
    %c0_i32_0 = arith.constant 0 : i32
    return %3, %c0_i32, %arg0 : i32, i32, i32
  }
  func.func @transform_5(%arg0: i32, %arg1: i32) -> (i32, i32, i32) {
    %c0_i32 = arith.constant 0 : i32
    %c0_i32_0 = arith.constant 0 : i32
    %c0_i32_1 = arith.constant 0 : i32
    return %arg0, %c0_i32, %c0_i32_0 : i32, i32, i32
  }
}

module attributes {stable_mosaic.version = 11 : i64} {
  func.func @_matmul_kernel(%arg0: i32, %arg1: i32, %arg2: i32, %arg3: memref<128x256xbf16, #tpu.memory_space<vmem>>, %arg4: memref<256x256xbf16, #tpu.memory_space<vmem>>, %arg5: memref<1x256xf32, #tpu.memory_space<vmem>>, %arg6: memref<128x256xf32, #tpu.memory_space<vmem>>, %arg7: memref<128x256xf32, #tpu.memory_space<vmem>>) attributes {dimension_semantics = [#tpu.dimension_semantics<parallel>, #tpu.dimension_semantics<parallel>, #tpu.dimension_semantics<arbitrary>], iteration_bounds = array<i64: 1, 3, 1>, scalar_prefetch = 0 : i64, scratch_operands = 1 : i64, tpu.core_type = #tpu.core_type<tc>, window_params = [{transform_indices = @transform_0, window_bounds = array<i64: 128, 256>}, {transform_indices = @transform_1, window_bounds = array<i64: 256, 256>}, {transform_indices = @transform_2, window_bounds = array<i64: 1, 256>}, {transform_indices = @transform_3, window_bounds = array<i64: 128, 256>}]} {
    %c0_i32 = arith.constant 0 : i32
    %0 = arith.cmpi eq, %arg2, %c0_i32 : i32
    %1 = arith.extui %0 : i1 to i32
    %c0_i32_0 = arith.constant 0 : i32
    %2 = arith.cmpi ne, %1, %c0_i32_0 : i32
    scf.if %2 {
      %cst_10 = arith.constant 0.000000e+00 : f32
      %12 = vector.broadcast %cst_10 : f32 to vector<128x256xf32>
      %c0_11 = arith.constant 0 : index
      %c0_12 = arith.constant 0 : index
      %13 = vector.load %arg7[%c0_11, %c0_12] : memref<128x256xf32, #tpu.memory_space<vmem>>, vector<128x256xf32>
      tpu.vector_store %arg7[%c0_11, %c0_12], %12 {strides = array<i32>} : memref<128x256xf32, #tpu.memory_space<vmem>>, vector<128x256xf32>,
    } else {
    }
    %c0 = arith.constant 0 : index
    %c0_1 = arith.constant 0 : index
    %3 = vector.load %arg7[%c0, %c0_1] : memref<128x256xf32, #tpu.memory_space<vmem>>, vector<128x256xf32>
    %c0_2 = arith.constant 0 : index
    %c0_3 = arith.constant 0 : index
    %4 = vector.load %arg3[%c0_2, %c0_3] : memref<128x256xbf16, #tpu.memory_space<vmem>>, vector<128x256xbf16>
    %c0_4 = arith.constant 0 : index
    %c0_5 = arith.constant 0 : index
    %5 = vector.load %arg4[%c0_4, %c0_5] : memref<256x256xbf16, #tpu.memory_space<vmem>>, vector<256x256xbf16>
    %cst = arith.constant dense<0.000000e+00> : vector<128x256xf32>
    %6 = tpu.matmul %4, %5, %cst {dimension_numbers = #tpu.dot_dimension_numbers<[1], [0], [0], [1], [0, 0, 1, 1], [], []>} : vector<128x256xbf16>, vector<256x256xbf16>, vector<128x256xf32> -> vector<128x256xf32>
    %7 = arith.addf %3, %6 : vector<128x256xf32>
    %c0_6 = arith.constant 0 : index
    %c0_7 = arith.constant 0 : index
    %8 = vector.load %arg7[%c0_6, %c0_7] : memref<128x256xf32, #tpu.memory_space<vmem>>, vector<128x256xf32>
    tpu.vector_store %arg7[%c0_6, %c0_7], %7 {strides = array<i32>} : memref<128x256xf32, #tpu.memory_space<vmem>>, vector<128x256xf32>,
    %c0_i32_8 = arith.constant 0 : i32
    %9 = arith.cmpi eq, %arg2, %c0_i32_8 : i32
    %10 = arith.extui %9 : i1 to i32
    %c0_i32_9 = arith.constant 0 : i32
    %11 = arith.cmpi ne, %10, %c0_i32_9 : i32
    scf.if %11 {
      %c0_10 = arith.constant 0 : index
      %c0_11 = arith.constant 0 : index
      %12 = vector.load %arg7[%c0_10, %c0_11] : memref<128x256xf32, #tpu.memory_space<vmem>>, vector<128x256xf32>
      %c0_12 = arith.constant 0 : index
      %c0_13 = arith.constant 0 : index
      %13 = vector.load %arg5[%c0_12, %c0_13] : memref<1x256xf32, #tpu.memory_space<vmem>>, vector<1x256xf32>
      %14 = vector.broadcast %13 : vector<1x256xf32> to vector<128x256xf32>
      %15 = arith.addf %12, %14 : vector<128x256xf32>
      %c0_14 = arith.constant 0 : index
      %c0_15 = arith.constant 0 : index
      %16 = vector.load %arg6[%c0_14, %c0_15] : memref<128x256xf32, #tpu.memory_space<vmem>>, vector<128x256xf32>
      tpu.vector_store %arg6[%c0_14, %c0_15], %15 {strides = array<i32>} : memref<128x256xf32, #tpu.memory_space<vmem>>, vector<128x256xf32>,
    } else {
    }
    return
  }
  func.func @transform_0(%arg0: i32, %arg1: i32, %arg2: i32) -> (i32, i32) {
    %c0_i32 = arith.constant 0 : i32
    return %arg0, %arg2 : i32, i32
  }
  func.func @transform_1(%arg0: i32, %arg1: i32, %arg2: i32) -> (i32, i32) {
    %c0_i32 = arith.constant 0 : i32
    return %arg2, %arg1 : i32, i32
  }
  func.func @transform_2(%arg0: i32, %arg1: i32, %arg2: i32) -> (i32, i32) {
    %c0_i32 = arith.constant 0 : i32
    %c0_i32_0 = arith.constant 0 : i32
    return %c0_i32, %arg1 : i32, i32
  }
  func.func @transform_3(%arg0: i32, %arg1: i32, %arg2: i32) -> (i32, i32) {
    %c0_i32 = arith.constant 0 : i32
    return %arg0, %arg1 : i32, i32
  }
}

module attributes {stable_mosaic.version = 11 : i64} {
  func.func @_matmul_kernel(%arg0: i32, %arg1: i32, %arg2: i32, %arg3: memref<128x256xbf16, #tpu.memory_space<vmem>>, %arg4: memref<256x256xbf16, #tpu.memory_space<vmem>>, %arg5: memref<1x256xf32, #tpu.memory_space<vmem>>, %arg6: memref<128x256xf32, #tpu.memory_space<vmem>>, %arg7: memref<128x256xf32, #tpu.memory_space<vmem>>) attributes {dimension_semantics = [#tpu.dimension_semantics<parallel>, #tpu.dimension_semantics<parallel>, #tpu.dimension_semantics<arbitrary>], iteration_bounds = array<i64: 1, 1, 1>, scalar_prefetch = 0 : i64, scratch_operands = 1 : i64, tpu.core_type = #tpu.core_type<tc>, window_params = [{transform_indices = @transform_0, window_bounds = array<i64: 128, 256>}, {transform_indices = @transform_1, window_bounds = array<i64: 256, 256>}, {transform_indices = @transform_2, window_bounds = array<i64: 1, 256>}, {transform_indices = @transform_3, window_bounds = array<i64: 128, 256>}]} {
    %c0_i32 = arith.constant 0 : i32
    %0 = arith.cmpi eq, %arg2, %c0_i32 : i32
    %1 = arith.extui %0 : i1 to i32
    %c0_i32_0 = arith.constant 0 : i32
    %2 = arith.cmpi ne, %1, %c0_i32_0 : i32
    scf.if %2 {
      %cst_10 = arith.constant 0.000000e+00 : f32
      %12 = vector.broadcast %cst_10 : f32 to vector<128x256xf32>
      %c0_11 = arith.constant 0 : index
      %c0_12 = arith.constant 0 : index
      %13 = vector.load %arg7[%c0_11, %c0_12] : memref<128x256xf32, #tpu.memory_space<vmem>>, vector<128x256xf32>
      tpu.vector_store %arg7[%c0_11, %c0_12], %12 {strides = array<i32>} : memref<128x256xf32, #tpu.memory_space<vmem>>, vector<128x256xf32>,
    } else {
    }
    %c0 = arith.constant 0 : index
    %c0_1 = arith.constant 0 : index
    %3 = vector.load %arg7[%c0, %c0_1] : memref<128x256xf32, #tpu.memory_space<vmem>>, vector<128x256xf32>
    %c0_2 = arith.constant 0 : index
    %c0_3 = arith.constant 0 : index
    %4 = vector.load %arg3[%c0_2, %c0_3] : memref<128x256xbf16, #tpu.memory_space<vmem>>, vector<128x256xbf16>
    %c0_4 = arith.constant 0 : index
    %c0_5 = arith.constant 0 : index
    %5 = vector.load %arg4[%c0_4, %c0_5] : memref<256x256xbf16, #tpu.memory_space<vmem>>, vector<256x256xbf16>
    %cst = arith.constant dense<0.000000e+00> : vector<128x256xf32>
    %6 = tpu.matmul %4, %5, %cst {dimension_numbers = #tpu.dot_dimension_numbers<[1], [0], [0], [1], [0, 0, 1, 1], [], []>} : vector<128x256xbf16>, vector<256x256xbf16>, vector<128x256xf32> -> vector<128x256xf32>
    %7 = arith.addf %3, %6 : vector<128x256xf32>
    %c0_6 = arith.constant 0 : index
    %c0_7 = arith.constant 0 : index
    %8 = vector.load %arg7[%c0_6, %c0_7] : memref<128x256xf32, #tpu.memory_space<vmem>>, vector<128x256xf32>
    tpu.vector_store %arg7[%c0_6, %c0_7], %7 {strides = array<i32>} : memref<128x256xf32, #tpu.memory_space<vmem>>, vector<128x256xf32>,
    %c0_i32_8 = arith.constant 0 : i32
    %9 = arith.cmpi eq, %arg2, %c0_i32_8 : i32
    %10 = arith.extui %9 : i1 to i32
    %c0_i32_9 = arith.constant 0 : i32
    %11 = arith.cmpi ne, %10, %c0_i32_9 : i32
    scf.if %11 {
      %c0_10 = arith.constant 0 : index
      %c0_11 = arith.constant 0 : index
      %12 = vector.load %arg7[%c0_10, %c0_11] : memref<128x256xf32, #tpu.memory_space<vmem>>, vector<128x256xf32>
      %c0_12 = arith.constant 0 : index
      %c0_13 = arith.constant 0 : index
      %13 = vector.load %arg5[%c0_12, %c0_13] : memref<1x256xf32, #tpu.memory_space<vmem>>, vector<1x256xf32>
      %14 = vector.broadcast %13 : vector<1x256xf32> to vector<128x256xf32>
      %15 = arith.addf %12, %14 : vector<128x256xf32>
      %c0_14 = arith.constant 0 : index
      %c0_15 = arith.constant 0 : index
      %16 = vector.load %arg6[%c0_14, %c0_15] : memref<128x256xf32, #tpu.memory_space<vmem>>, vector<128x256xf32>
      tpu.vector_store %arg6[%c0_14, %c0_15], %15 {strides = array<i32>} : memref<128x256xf32, #tpu.memory_space<vmem>>, vector<128x256xf32>,
    } else {
    }
    return
  }
  func.func @transform_0(%arg0: i32, %arg1: i32, %arg2: i32) -> (i32, i32) {
    %c0_i32 = arith.constant 0 : i32
    return %arg0, %arg2 : i32, i32
  }
  func.func @transform_1(%arg0: i32, %arg1: i32, %arg2: i32) -> (i32, i32) {
    %c0_i32 = arith.constant 0 : i32
    return %arg2, %arg1 : i32, i32
  }
  func.func @transform_2(%arg0: i32, %arg1: i32, %arg2: i32) -> (i32, i32) {
    %c0_i32 = arith.constant 0 : i32
    %c0_i32_0 = arith.constant 0 : i32
    return %c0_i32, %arg1 : i32, i32
  }
  func.func @transform_3(%arg0: i32, %arg1: i32, %arg2: i32) -> (i32, i32) {
    %c0_i32 = arith.constant 0 : i32
    return %arg0, %arg1 : i32, i32
  }
}

</mosaic_0001>

<llo_original>
// kernel: generator_forward.8
$region0: #{generator_forward.8}
  #allocation0 [shape = 'u32[]', space=smem, size = 0x4, offset = 0x4, fixed_abs, tag = 'smem constant byte address 0x4 - core index']
  #allocation1 [shape = 'u32[144,128]{1,0:T(1,128)}', space=vmem, size = 0x12000, scoped, tag = 'internal scratch']
  %s0 = inlined_call_operand.vmem [shape: bf16[8,128], index: 0, kind: input, shape index: {}]
  %s1 = inlined_call_operand.vmem [shape: bf16[128,128], index: 1, kind: input, shape index: {}]
  %s2 = inlined_call_operand.vmem [shape: f32[1,128], index: 2, kind: input, shape index: {}]
  %s3 = inlined_call_operand.vmem [shape: f32[8,128], index: 3, kind: output, shape index: {}]
  %s4 = sld [smem:[#allocation0]]
  $region22: #{generator_forward.8} parent=0
    _
  %s6 = ssub.s32 1, %s4
  %s7 = scalar_select 0, %s6, %s4
  // Predicated region
  $region2: #{generator_forward.8} parent=0 // pred_check
    _
  $region3: #{generator_forward.8} parent=0 // pred_check_branch
    %9 = sbr.rel (0) target = $region5
  $region4: #{generator_forward.8} parent=0 // pred_region
    _
  $region5: #{generator_forward.8} parent=0 // pred_fallthru
    _
  // Predicated region
  $region6: #{generator_forward.8} parent=0 // pred_check
    _
  $region7: #{generator_forward.8} parent=0 // pred_check_branch
    %11 = sbr.rel (0) target = $region9
  $region8: #{generator_forward.8} parent=0 // pred_region
    _
  $region9: #{generator_forward.8} parent=0 // pred_fallthru
    _
  // Predicated region
  $region10: #{generator_forward.8} parent=0 // pred_check
    _
  $region11: #{generator_forward.8} parent=0 // pred_check_branch
    %13 = sbr.rel (0) target = $region13
  $region12: #{generator_forward.8} parent=0 // pred_region
    _
  $region13: #{generator_forward.8} parent=0 // pred_fallthru
    _
  %v15 = vld [vmem:[%s0] sm:$0xf]
  %v16 = vld [vmem:[%s1] sm:$0xf]
  %v17 = vld [vmem:[%s1 + $0x4] sm:$0xf]
  %v18 = vld [vmem:[%s1 + $0x8] sm:$0xf]
  %v19 = vld [vmem:[%s1 + $0xc] sm:$0xf]
  %v20 = vld [vmem:[%s1 + $0x10] sm:$0xf]
  %v21 = vld [vmem:[%s1 + $0x14] sm:$0xf]
  %v22 = vld [vmem:[%s1 + $0x18] sm:$0xf]
  %v23 = vld [vmem:[%s1 + $0x1c] sm:$0xf]
  %v24 = vld [vmem:[%s1 + $0x20] sm:$0xf]
  %v25 = vld [vmem:[%s1 + $0x24] sm:$0xf]
  %v26 = vld [vmem:[%s1 + $0x28] sm:$0xf]
  %v27 = vld [vmem:[%s1 + $0x2c] sm:$0xf]
  %v28 = vld [vmem:[%s1 + $0x30] sm:$0xf]
  %v29 = vld [vmem:[%s1 + $0x34] sm:$0xf]
  %v30 = vld [vmem:[%s1 + $0x38] sm:$0xf]
  %v31 = vld [vmem:[%s1 + $0x3c] sm:$0xf]
  %v32 = vld [vmem:[%s2] sm:$0x1]
  %v34 = vlaneseq
  %v35 = vshrl.u32 %v34, 7
  %v36 = vsub.s32 0, %v35
  %v37 = vrot.slane %v32, %v36
  %v55 = vunpack.c.l.b16 %v16
  %v56 = vunpack.c.l.b16 %v17
  %v57 = vunpack.c.l.b16 %v18
  %v58 = vunpack.c.l.b16 %v19
  %v59 = vunpack.c.l.b16 %v20
  %v60 = vunpack.c.l.b16 %v21
  %v61 = vunpack.c.l.b16 %v22
  %v62 = vunpack.c.l.b16 %v23
  %v63 = vunpack.c.l.b16 %v24
  %v64 = vunpack.c.l.b16 %v25
  %v65 = vunpack.c.l.b16 %v26
  %v66 = vunpack.c.l.b16 %v27
  %v67 = vunpack.c.l.b16 %v28
  %v68 = vunpack.c.l.b16 %v29
  %v69 = vunpack.c.l.b16 %v30
  %v70 = vunpack.c.l.b16 %v31
  %v71 = vpack.c.b16 %v56, %v55
  %v72 = vpack.c.b16 %v58, %v57
  %v73 = vpack.c.b16 %v60, %v59
  %v74 = vpack.c.b16 %v62, %v61
  %v75 = vpack.c.b16 %v64, %v63
  %v76 = vpack.c.b16 %v66, %v65
  %v77 = vpack.c.b16 %v68, %v67
  %v78 = vpack.c.b16 %v70, %v69
  %87 = vmatprep.subr.bf16.mxu0 0
  %88 = vmatpush1.bf16.msra.mxu0 %v71
  %89 = vmatprep.subr.bf16.mxu0 0
  %90 = vmatpush1.bf16.msra.mxu0 %v72
  %91 = vmatprep.subr.bf16.mxu0 0
  %92 = vmatpush1.bf16.msra.mxu0 %v73
  %93 = vmatprep.subr.bf16.mxu0 0
  %94 = vmatpush1.bf16.msra.mxu0 %v74
  %95 = vmatprep.subr.bf16.mxu0 0
  %96 = vmatpush1.bf16.msra.mxu0 %v75
  %97 = vmatprep.subr.bf16.mxu0 0
  %98 = vmatpush1.bf16.msra.mxu0 %v76
  %99 = vmatprep.subr.bf16.mxu0 0
  %100 = vmatpush1.bf16.msra.mxu0 %v77
  %101 = vmatprep.subr.bf16.mxu0 0
  %102 = vmatpush1.bf16.msra.mxu0 %v78
  %103 = vmatprep.subr.bf16.mxu0 0
  %104 = vmatpush1.bf16.msra.mxu0 0
  %105 = vmatprep.subr.bf16.mxu0 0
  %106 = vmatpush1.bf16.msra.mxu0 0
  %107 = vmatprep.subr.bf16.mxu0 0
  %108 = vmatpush1.bf16.msra.mxu0 0
  %109 = vmatprep.subr.bf16.mxu0 0
  %110 = vmatpush1.bf16.msra.mxu0 0
  %111 = vmatprep.subr.bf16.mxu0 0
  %112 = vmatpush1.bf16.msra.mxu0 0
  %113 = vmatprep.subr.bf16.mxu0 0
  %114 = vmatpush1.bf16.msra.mxu0 0
  %115 = vmatprep.subr.bf16.mxu0 0
  %116 = vmatpush1.bf16.msra.mxu0 0
  %117 = vmatprep.subr.bf16.mxu0 0
  %118 = vmatpush1.bf16.msra.mxu0 0
  %119 = vmatprep.mubr.bf16.mxu0 0
  %120 = vmatmul.mubr.bf16.gmra.mrb[0].mxu0 %v15
  %v121 = vpop.f32.mrb[0].mxu0
  %v122 = vadd.f32 %v37, %v121
  %v123 = vpop.f32.mrb[0].mxu0
  %v124 = vpop.f32.mrb[0].mxu0
  %v125 = vpop.f32.mrb[0].mxu0
  %126 = vdwg.mxu0
  %v127 = vmax.f32 %v122, 0.0
  %v128 = vpack.c.bf16 %v127, %v127
  %129 = vmatprep.subr.bf16.mxu0 0
  %130 = vmatpush1.bf16.msra.mxu0 %v71
  %131 = vmatprep.subr.bf16.mxu0 0
  %132 = vmatpush1.bf16.msra.mxu0 %v72
  %133 = vmatprep.subr.bf16.mxu0 0
  %134 = vmatpush1.bf16.msra.mxu0 %v73
  %135 = vmatprep.subr.bf16.mxu0 0
  %136 = vmatpush1.bf16.msra.mxu0 %v74
  %137 = vmatprep.subr.bf16.mxu0 0
  %138 = vmatpush1.bf16.msra.mxu0 %v75
  %139 = vmatprep.subr.bf16.mxu0 0
  %140 = vmatpush1.bf16.msra.mxu0 %v76
  %141 = vmatprep.subr.bf16.mxu0 0
  %142 = vmatpush1.bf16.msra.mxu0 %v77
  %143 = vmatprep.subr.bf16.mxu0 0
  %144 = vmatpush1.bf16.msra.mxu0 %v78
  %145 = vmatprep.subr.bf16.mxu0 0
  %146 = vmatpush1.bf16.msra.mxu0 0
  %147 = vmatprep.subr.bf16.mxu0 0
  %148 = vmatpush1.bf16.msra.mxu0 0
  %149 = vmatprep.subr.bf16.mxu0 0
  %150 = vmatpush1.bf16.msra.mxu0 0
  %151 = vmatprep.subr.bf16.mxu0 0
  %152 = vmatpush1.bf16.msra.mxu0 0
  %153 = vmatprep.subr.bf16.mxu0 0
  %154 = vmatpush1.bf16.msra.mxu0 0
  %155 = vmatprep.subr.bf16.mxu0 0
  %156 = vmatpush1.bf16.msra.mxu0 0
  %157 = vmatprep.subr.bf16.mxu0 0
  %158 = vmatpush1.bf16.msra.mxu0 0
  %159 = vmatprep.subr.bf16.mxu0 0
  %160 = vmatpush1.bf16.msra.mxu0 0
  %161 = vmatprep.mubr.bf16.mxu0 0
  %162 = vmatmul.mubr.bf16.gmra.mrb[0].mxu0 %v128
  %v163 = vpop.f32.mrb[0].mxu0
  %v164 = vadd.f32 %v37, %v163
  %v165 = vpop.f32.mrb[0].mxu0
  %v166 = vpop.f32.mrb[0].mxu0
  %v167 = vpop.f32.mrb[0].mxu0
  %168 = vdwg.mxu0
  %v169 = vmax.f32 %v164, 0.0
  %170 = vst [vmem:[%s3] sm:$0xff] %v169
  // Predicated region
  $region14: #{generator_forward.8} parent=0 // pred_check
    _
  $region15: #{generator_forward.8} parent=0 // pred_check_branch
    %172 = sbr.rel (0) target = $region17
  $region16: #{generator_forward.8} parent=0 // pred_region
    _
  $region17: #{generator_forward.8} parent=0 // pred_fallthru
    _
  // Predicated region
  $region18: #{generator_forward.8} parent=0 // pred_check
    _
  $region19: #{generator_forward.8} parent=0 // pred_check_branch
    %174 = sbr.rel (0) target = $region21
  $region20: #{generator_forward.8} parent=0 // pred_region
    _
  $region21: #{generator_forward.8} parent=0 // pred_fallthru
    _

// kernel: generator_forward.9
$region0: #{generator_forward.9}
  #allocation0 [shape = 'u32[]', space=smem, size = 0x4, offset = 0x4, fixed_abs, tag = 'smem constant byte address 0x4 - core index']
  #allocation1 [shape = 'u32[144,128]{1,0:T(1,128)}', space=vmem, size = 0x12000, scoped, tag = 'internal scratch']
  #allocation2 [shape = 'f32[128,256]{1,0:T(8,128)}', space=vmem, size = 0x20000, scoped, tag = 'scratch operand']
  %s0 = inlined_call_operand.vmem [shape: bf16[128,128], index: 0, kind: input, shape index: {}]
  %s1 = inlined_call_operand.vmem [shape: bf16[128,768], index: 1, kind: input, shape index: {}]
  %s2 = inlined_call_operand.vmem [shape: f32[1,768], index: 2, kind: input, shape index: {}]
  %s3 = inlined_call_operand.vmem [shape: f32[128,768], index: 3, kind: output, shape index: {}]
  %s4 = sld [smem:[#allocation0]]
  $region110: #{generator_forward.9} parent=0
    _
  %s6 = ssub.s32 1, %s4
  %s7 = scalar_select 0, %s6, %s4
  $region1: #{generator_forward.9} parent=0
    #allocation3 [shape = 'u8[131072]{0}', space=vmem, size = 0x20000, scoped, tag = 'input window, operand 1']
    #allocation4 [shape = 'u8[262144]{0}', space=vmem, size = 0x40000, scoped, tag = 'output window, operand 0']
    loop: start=0, step=1, limit=5
    $region2: #{generator_forward.9} parent=1 // loop_pre_header
      _
    $region3: #{generator_forward.9} parent=1 // loop_header
      %s9 = sphi 0, %s13
      %p10 = scmp.ge.s32.totalorder %s9, 5
      %s16 = sphi 0, %s35
      %s17 = sphi 0, %s31
      %s18 = sphi 0, %s27
      %s19 = sphi 0, %s16
      %s20 = sphi 0, %s17
      %s21 = sphi 0, %s18
      %s22 = sphi 0, %s19
      %s23 = sphi 0, %s20
      %s24 = sphi 0, %s21
      %s40 = sphi 0, %s42
      %s43 = sphi 0, %s40
      %s44 = sphi 0, %s43
      %s60 = sphi 0, %s44
      %s68 = sphi 0, %s70
      %s71 = sphi 0, %s68
      %s72 = sphi 0, %s71
      %s88 = sphi 0, %s72
      %s94 = sphi 0, %s96
      %s97 = sphi 0, %s94
      %s98 = sphi 0, %s97
      %s114 = sphi 0, %s98
      %s122 = sphi 0, %s124
      %s125 = sphi 0, %s122
      %s126 = sphi 0, %s125
      %s142 = sphi 0, %s126
    $region4: #{generator_forward.9} parent=1 // loop_header_branch
      %12 = sbr.rel (%p10) target = $region8
    $region5: #{generator_forward.9} parent=1 // loop_body
      %s14 = ssub.s32 %s9, 1
      %s15 = ssub.s32 %s9, 2
      %s25 = sadd.s32 1, %s18
      %p26 = scmp.ge.s32.totalorder %s25, 1
      %s27 = scalar_select %p26, 0, %s25
      %s28 = sadd.s32 1, %s17
      %s29 = scalar_select %p26, %s28, %s17
      %p30 = scmp.ge.s32.totalorder %s29, 3
      %s31 = scalar_select %p30, 0, %s29
      %s32 = sadd.s32 1, %s16
      %s33 = scalar_select %p30, %s32, %s16
      %p34 = scmp.ge.s32.totalorder %s33, 1
      %s35 = scalar_select %p34, 0, %s33
      %s36 = ssub.s32 %s16, %s35
      %s37 = ssub.s32 %s18, %s27
      %s38 = sor.u32 %s36, %s37
      %p39 = scmp.eq.s32.totalorder %s38, 0
      %s41 = sadd.s32 %s40, 1
      %s42 = scalar_select %p39, %s40, %s41
      %p45 = pneg %p39
      %p46 = scmp.eq.s32.totalorder %s9, 2
      %p47 = por %p45, %p46
      %p48 = scmp.ne.s32.totalorder %s40, %s43
      %p49 = scmp.eq.s32.totalorder %s9, 0
      %p50 = por %p48, %p49
      %p51 = scmp.ne.s32.totalorder %s40, %s43
      %p52 = scmp.eq.s32.totalorder %s14, 2
      %p53 = por %p51, %p52
      %p54 = scmp.ne.s32.totalorder %s43, %s44
      %p55 = scmp.eq.s32.totalorder %s14, 0
      %p56 = por %p54, %p55
      %p57 = scmp.ne.s32.totalorder %s43, %s44
      %p58 = scmp.eq.s32.totalorder %s15, 2
      %p59 = por %p57, %p58
      %p61 = scmp.ne.s32.totalorder %s44, %s60
      %p62 = scmp.eq.s32.totalorder %s15, 0
      %p63 = por %p61, %p62
      %s64 = ssub.s32 %s18, %s27
      %s65 = ssub.s32 %s17, %s31
      %s66 = sor.u32 %s64, %s65
      %p67 = scmp.eq.s32.totalorder %s66, 0
      %s69 = sadd.s32 %s68, 1
      %s70 = scalar_select %p67, %s68, %s69
      %p73 = pneg %p67
      %p74 = scmp.eq.s32.totalorder %s9, 2
      %p75 = por %p73, %p74
      %p76 = scmp.ne.s32.totalorder %s68, %s71
      %p77 = scmp.eq.s32.totalorder %s9, 0
      %p78 = por %p76, %p77
      %p79 = scmp.ne.s32.totalorder %s68, %s71
      %p80 = scmp.eq.s32.totalorder %s14, 2
      %p81 = por %p79, %p80
      %p82 = scmp.ne.s32.totalorder %s71, %s72
      %p83 = scmp.eq.s32.totalorder %s14, 0
      %p84 = por %p82, %p83
      %p85 = scmp.ne.s32.totalorder %s71, %s72
      %p86 = scmp.eq.s32.totalorder %s15, 2
      %p87 = por %p85, %p86
      %p89 = scmp.ne.s32.totalorder %s72, %s88
      %p90 = scmp.eq.s32.totalorder %s15, 0
      %p91 = por %p89, %p90
      %s92 = ssub.s32 %s17, %s31
      %p93 = scmp.eq.s32.totalorder %s92, 0
      %s95 = sadd.s32 %s94, 1
      %s96 = scalar_select %p93, %s94, %s95
      %p99 = pneg %p93
      %p100 = scmp.eq.s32.totalorder %s9, 2
      %p101 = por %p99, %p100
      %p102 = scmp.ne.s32.totalorder %s94, %s97
      %p103 = scmp.eq.s32.totalorder %s9, 0
      %p104 = por %p102, %p103
      %p105 = scmp.ne.s32.totalorder %s94, %s97
      %p106 = scmp.eq.s32.totalorder %s14, 2
      %p107 = por %p105, %p106
      %p108 = scmp.ne.s32.totalorder %s97, %s98
      %p109 = scmp.eq.s32.totalorder %s14, 0
      %p110 = por %p108, %p109
      %p111 = scmp.ne.s32.totalorder %s97, %s98
      %p112 = scmp.eq.s32.totalorder %s15, 2
      %p113 = por %p111, %p112
      %p115 = scmp.ne.s32.totalorder %s98, %s114
      %p116 = scmp.eq.s32.totalorder %s15, 0
      %p117 = por %p115, %p116
      %s118 = ssub.s32 %s16, %s35
      %s119 = ssub.s32 %s17, %s31
      %s120 = sor.u32 %s118, %s119
      %p121 = scmp.eq.s32.totalorder %s120, 0
      %s123 = sadd.s32 %s122, 1
      %s124 = scalar_select %p121, %s122, %s123
      %p127 = pneg %p121
      %p128 = scmp.eq.s32.totalorder %s9, 2
      %p129 = por %p127, %p128
      %p130 = scmp.ne.s32.totalorder %s122, %s125
      %p131 = scmp.eq.s32.totalorder %s9, 0
      %p132 = por %p130, %p131
      %p133 = scmp.ne.s32.totalorder %s122, %s125
      %p134 = scmp.eq.s32.totalorder %s14, 2
      %p135 = por %p133, %p134
      %p136 = scmp.ne.s32.totalorder %s125, %s126
      %p137 = scmp.eq.s32.totalorder %s14, 0
      %p138 = por %p136, %p137
      %p139 = scmp.ne.s32.totalorder %s125, %s126
      %p140 = scmp.eq.s32.totalorder %s15, 2
      %p141 = por %p139, %p140
      %p143 = scmp.ne.s32.totalorder %s126, %s142
      %p144 = scmp.eq.s32.totalorder %s15, 0
      %p145 = por %p143, %p144
      %p146 = scmp.le.s32.totalorder 1, %s9
      %p147 = scmp.lt.s32.totalorder %s9, 4
      %p148 = pnand %p146, %p147
      %p149 = pneg %p148
      // Predicated region
      $region9: #{generator_forward.9} parent=5 // pred_check
        _
      $region10: #{generator_forward.9} parent=5 // pred_check_branch
        %151 = sbr.rel (%p148) target = $region12
      $region11: #{generator_forward.9} parent=5 // pred_region
        %s152 = ssub.s32 %s9, 1
        // Predicated region
        $region13: #{generator_forward.9} parent=11 // pred_check
          %p153 = pneg %p56
        $region14: #{generator_forward.9} parent=11 // pred_check_branch
          %155 = sbr.rel (%p153) target = $region16
        $region15: #{generator_forward.9} parent=11 // pred_region
          %s156 = smul.u32 16, %s19
          %p157 = scmp.lt.s32.totalorder %s156, 15
          %s158 = scalar_select %p157, %s156, 15
          %p159 = scmp.lt.s32.totalorder %s21, 0
          %s160 = scalar_select %p159, %s21, 0
          %s161 = sadd.s32 %s160, %s158
          %s162 = smul.addr %s161, 4
          %s163 = scalar_lea.vmem %s0, %s162
          %s164 = smul.u32 16, %s19
        $region16: #{generator_forward.9} parent=11 // pred_fallthru
          _
      $region12: #{generator_forward.9} parent=5 // pred_fallthru
        _
      %p165 = scmp.lt.s32.totalorder %s9, 3
      // Predicated region
      $region17: #{generator_forward.9} parent=5 // pred_check
        %p166 = pneg %p165
      $region18: #{generator_forward.9} parent=5 // pred_check_branch
        %168 = sbr.rel (%p166) target = $region20
      $region19: #{generator_forward.9} parent=5 // pred_region
        // Predicated region
        $region21: #{generator_forward.9} parent=19 // pred_check
          %p169 = pneg %p78
        $region22: #{generator_forward.9} parent=19 // pred_check_branch
          %171 = sbr.rel (%p169) target = $region24
        $region23: #{generator_forward.9} parent=19 // pred_region
          %s172 = sand.u32 %s68, 1
          %s173 = sand.u32 %s68, 1
          %s174 = smul.addr %s173, 128
          %s175 = scalar_lea.vmem [#allocation3], %s174
          %s176 = smul.u32 16, %s18
          %s177 = smul.u32 2, %s17
          %s178 = smul.addr %s176, 6
          %s179 = sadd.s32 %s177, %s178
          %s180 = smul.addr %s179, 4
          %s181 = scalar_lea.vmem %s1, %s180
          // Predicated region
          $region25: #{generator_forward.9} parent=23 // pred_check
            _
          $region26: #{generator_forward.9} parent=23 // pred_check_branch
            %183 = sbr.rel (0) target = $region28
          $region27: #{generator_forward.9} parent=23 // pred_region
            // Predicated region
            $region29: #{generator_forward.9} parent=27 // pred_check
              _
            $region30: #{generator_forward.9} parent=27 // pred_check_branch
              %185 = sbr.rel (0) target = $region32
            $region31: #{generator_forward.9} parent=27 // pred_region
              // Predicated region
              $region44: #{generator_forward.9} parent=31 // pred_check
                _
              $region45: #{generator_forward.9} parent=31 // pred_check_branch
                %230 = sbr.rel (0) target = $region47
              $region46: #{generator_forward.9} parent=31 // pred_region
                loop: start=0, step=1, limit=1
                $region48: #{generator_forward.9} parent=46 // loop_pre_header
                  _
                $region49: #{generator_forward.9} parent=46 // loop_header
                  %s232 = sphi 0, %s236
                  %p233 = scmp.ge.s32.totalorder %s232, 1
                  %s237 = sphi %s181, %s181
                  %s238 = sphi %s175, %s175
                $region50: #{generator_forward.9} parent=46 // loop_header_branch
                  %235 = sbr.rel (%p233) target = $region54
                $region51: #{generator_forward.9} parent=46 // loop_body
                  %v239 = vld [vmem:[%s237] sm:$0xff]
                  %240 = vst [vmem:[%s238] sm:$0xff] %v239
                  %v241 = vld [vmem:[%s237 + $0x18] sm:$0xff]
                  %242 = vst [vmem:[%s238 + $0x8] sm:$0xff] %v241
                  %v243 = vld [vmem:[%s237 + $0x30] sm:$0xff]
                  %244 = vst [vmem:[%s238 + $0x10] sm:$0xff] %v243
                  %v245 = vld [vmem:[%s237 + $0x48] sm:$0xff]
                  %246 = vst [vmem:[%s238 + $0x18] sm:$0xff] %v245
                  %v247 = vld [vmem:[%s237 + $0x60] sm:$0xff]
                  %248 = vst [vmem:[%s238 + $0x20] sm:$0xff] %v247
                  %v249 = vld [vmem:[%s237 + $0x78] sm:$0xff]
                  %250 = vst [vmem:[%s238 + $0x28] sm:$0xff] %v249
                  %v251 = vld [vmem:[%s237 + $0x90] sm:$0xff]
                  %252 = vst [vmem:[%s238 + $0x30] sm:$0xff] %v251
                  %v253 = vld [vmem:[%s237 + $0xa8] sm:$0xff]
                  %254 = vst [vmem:[%s238 + $0x38] sm:$0xff] %v253
                  %v255 = vld [vmem:[%s237 + $0xc0] sm:$0xff]
                  %256 = vst [vmem:[%s238 + $0x40] sm:$0xff] %v255
                  %v257 = vld [vmem:[%s237 + $0xd8] sm:$0xff]
                  %258 = vst [vmem:[%s238 + $0x48] sm:$0xff] %v257
                  %v259 = vld [vmem:[%s237 + $0xf0] sm:$0xff]
                  %260 = vst [vmem:[%s238 + $0x50] sm:$0xff] %v259
                  %v261 = vld [vmem:[%s237 + $0x108] sm:$0xff]
                  %262 = vst [vmem:[%s238 + $0x58] sm:$0xff] %v261
                  %v263 = vld [vmem:[%s237 + $0x120] sm:$0xff]
                  %264 = vst [vmem:[%s238 + $0x60] sm:$0xff] %v263
                  %v265 = vld [vmem:[%s237 + $0x138] sm:$0xff]
                  %266 = vst [vmem:[%s238 + $0x68] sm:$0xff] %v265
                  %v267 = vld [vmem:[%s237 + $0x150] sm:$0xff]
                  %268 = vst [vmem:[%s238 + $0x70] sm:$0xff] %v267
                  %v269 = vld [vmem:[%s237 + $0x168] sm:$0xff]
                  %270 = vst [vmem:[%s238 + $0x78] sm:$0xff] %v269
                $region52: #{generator_forward.9} parent=46 // loop_footer
                  %s236 = sadd.s32 1, %s232
                $region53: #{generator_forward.9} parent=46 // loop_footer_branch
                  %231 = sbr.rel target = $region49
                $region54: #{generator_forward.9} parent=46 // loop_exit
                  _
              $region47: #{generator_forward.9} parent=31 // pred_fallthru
                _
              // Predicated region
              $region55: #{generator_forward.9} parent=31 // pred_check
                _
              $region56: #{generator_forward.9} parent=31 // pred_check_branch
                %272 = sbr.rel target = $region58
              $region57: #{generator_forward.9} parent=31 // pred_region
                _
              $region58: #{generator_forward.9} parent=31 // pred_fallthru
                _
            $region32: #{generator_forward.9} parent=27 // pred_fallthru
              _
            // Predicated region
            $region33: #{generator_forward.9} parent=27 // pred_check
              _
            $region34: #{generator_forward.9} parent=27 // pred_check_branch
              %187 = sbr.rel target = $region36
            $region35: #{generator_forward.9} parent=27 // pred_region
              loop: start=0, step=1, limit=1
              $region37: #{generator_forward.9} parent=35 // loop_pre_header
                _
              $region38: #{generator_forward.9} parent=35 // loop_header
                %s190 = sphi 0, %s194
                %p191 = scmp.ge.s32.totalorder %s190, 1
                %s195 = sphi %s181, %s181
                %s196 = sphi %s175, %s175
              $region39: #{generator_forward.9} parent=35 // loop_header_branch
                %193 = sbr.rel (%p191) target = $region43
              $region40: #{generator_forward.9} parent=35 // loop_body
                %v197 = vld [vmem:[%s195] sm:$0xff]
                %198 = vst [vmem:[%s196] sm:$0xff] %v197
                %v199 = vld [vmem:[%s195 + $0x18] sm:$0xff]
                %200 = vst [vmem:[%s196 + $0x8] sm:$0xff] %v199
                %v201 = vld [vmem:[%s195 + $0x30] sm:$0xff]
                %202 = vst [vmem:[%s196 + $0x10] sm:$0xff] %v201
                %v203 = vld [vmem:[%s195 + $0x48] sm:$0xff]
                %204 = vst [vmem:[%s196 + $0x18] sm:$0xff] %v203
                %v205 = vld [vmem:[%s195 + $0x60] sm:$0xff]
                %206 = vst [vmem:[%s196 + $0x20] sm:$0xff] %v205
                %v207 = vld [vmem:[%s195 + $0x78] sm:$0xff]
                %208 = vst [vmem:[%s196 + $0x28] sm:$0xff] %v207
                %v209 = vld [vmem:[%s195 + $0x90] sm:$0xff]
                %210 = vst [vmem:[%s196 + $0x30] sm:$0xff] %v209
                %v211 = vld [vmem:[%s195 + $0xa8] sm:$0xff]
                %212 = vst [vmem:[%s196 + $0x38] sm:$0xff] %v211
                %v213 = vld [vmem:[%s195 + $0xc0] sm:$0xff]
                %214 = vst [vmem:[%s196 + $0x40] sm:$0xff] %v213
                %v215 = vld [vmem:[%s195 + $0xd8] sm:$0xff]
                %216 = vst [vmem:[%s196 + $0x48] sm:$0xff] %v215
                %v217 = vld [vmem:[%s195 + $0xf0] sm:$0xff]
                %218 = vst [vmem:[%s196 + $0x50] sm:$0xff] %v217
                %v219 = vld [vmem:[%s195 + $0x108] sm:$0xff]
                %220 = vst [vmem:[%s196 + $0x58] sm:$0xff] %v219
                %v221 = vld [vmem:[%s195 + $0x120] sm:$0xff]
                %222 = vst [vmem:[%s196 + $0x60] sm:$0xff] %v221
                %v223 = vld [vmem:[%s195 + $0x138] sm:$0xff]
                %224 = vst [vmem:[%s196 + $0x68] sm:$0xff] %v223
                %v225 = vld [vmem:[%s195 + $0x150] sm:$0xff]
                %226 = vst [vmem:[%s196 + $0x70] sm:$0xff] %v225
                %v227 = vld [vmem:[%s195 + $0x168] sm:$0xff]
                %228 = vst [vmem:[%s196 + $0x78] sm:$0xff] %v227
              $region41: #{generator_forward.9} parent=35 // loop_footer
                %s194 = sadd.s32 1, %s190
              $region42: #{generator_forward.9} parent=35 // loop_footer_branch
                %189 = sbr.rel target = $region38
              $region43: #{generator_forward.9} parent=35 // loop_exit
                _
            $region36: #{generator_forward.9} parent=27 // pred_fallthru
              _
          $region28: #{generator_forward.9} parent=23 // pred_fallthru
            _
          %273 = vnop
        $region24: #{generator_forward.9} parent=19 // pred_fallthru
          _
        // Predicated region
        $region59: #{generator_forward.9} parent=19 // pred_check
          %p274 = pneg %p104
        $region60: #{generator_forward.9} parent=19 // pred_check_branch
          %276 = sbr.rel (%p274) target = $region62
        $region61: #{generator_forward.9} parent=19 // pred_region
          %s277 = smul.u32 2, %s17
          %p278 = scmp.lt.s32.totalorder %s277, 5
          %s279 = scalar_select %p278, %s277, 5
          %s280 = scalar_lea.vmem %s2, %s279
          %s281 = smul.u32 2, %s17
        $region62: #{generator_forward.9} parent=19 // pred_fallthru
          _
      $region20: #{generator_forward.9} parent=5 // pred_fallthru
        _
      %p282 = scmp.le.s32.totalorder 1, %s9
      %p283 = scmp.lt.s32.totalorder %s9, 4
      %p284 = pnand %p282, %p283
      %p285 = pneg %p284
      // Predicated region
      $region63: #{generator_forward.9} parent=5 // pred_check
        _
      $region64: #{generator_forward.9} parent=5 // pred_check_branch
        %287 = sbr.rel (%p284) target = $region66
      $region65: #{generator_forward.9} parent=5 // pred_region
        %s288 = ssub.s32 %s9, 1
        %s289 = sand.u32 %s71, 1
        %s290 = sand.u32 %s71, 1
        %s291 = smul.addr %s290, 128
        %s292 = scalar_lea.vmem [#allocation3], %s291
        // Predicated region
        $region67: #{generator_forward.9} parent=65 // pred_check
          %p293 = pneg %p84
        $region68: #{generator_forward.9} parent=65 // pred_check_branch
          %295 = sbr.rel (%p293) target = $region70
        $region69: #{generator_forward.9} parent=65 // pred_region
          _
        $region70: #{generator_forward.9} parent=65 // pred_fallthru
          _
        %s296 = smul.u32 16, %s19
        %p297 = scmp.lt.s32.totalorder %s296, 15
        %s298 = scalar_select %p297, %s296, 15
        %p299 = scmp.lt.s32.totalorder %s21, 0
        %s300 = scalar_select %p299, %s21, 0
        %s301 = sadd.s32 %s300, %s298
        %s302 = smul.addr %s301, 4
        %s303 = scalar_lea.vmem %s0, %s302
        %p304 = pneg %p56
        %p305 = pneg %p53
        %s306 = sand.u32 %s71, 1
        %s307 = sand.u32 %s71, 1
        %s308 = smul.addr %s307, 128
        %s309 = scalar_lea.vmem [#allocation3], %s308
        %p310 = pneg %p84
        %p311 = pneg %p81
        %s312 = smul.u32 2, %s20
        %p313 = scmp.lt.s32.totalorder %s312, 5
        %s314 = scalar_select %p313, %s312, 5
        %s315 = scalar_lea.vmem %s2, %s314
        %p316 = pneg %p110
        %p317 = pneg %p107
        %p318 = pneg %p138
        %p319 = pneg %p135
        %s320 = sand.u32 %s125, 1
        %s321 = sand.u32 %s125, 1
        %s322 = smul.addr %s321, 256
        %s323 = scalar_lea.vmem [#allocation4], %s322
        %s324 = smul.u32 16, %s19
        %p325 = scmp.lt.s32.totalorder %s324, 15
        %s326 = scalar_select %p325, %s324, 15
        %p327 = scmp.lt.s32.totalorder %s21, 0
        %s328 = scalar_select %p327, %s21, 0
        %s329 = sadd.s32 %s328, %s326
        %s330 = smul.addr %s329, 4
        %s331 = scalar_lea.vmem %s0, %s330
        %s332 = smul.u32 16, %s19
        %s333 = smul.u32 16, %s21
        %s334 = smul.u32 2, %s20
        %s335 = smul.u32 2, %s20
        %p336 = scmp.lt.s32.totalorder %s335, 5
        %s337 = scalar_select %p336, %s335, 5
        %s338 = scalar_lea.vmem %s2, %s337
        %s339 = smul.u32 2, %s20
        %s340 = smul.u32 16, %s19
        %s341 = smul.u32 2, %s20
        %p343 = scmp.eq.s32.totalorder %s21, 0
        // Predicated region
        $region71: #{generator_forward.9} parent=65 // pred_check
          %p344 = pneg %p343
        $region72: #{generator_forward.9} parent=65 // pred_check_branch
          %346 = sbr.rel (%p344) target = $region74
        $region73: #{generator_forward.9} parent=65 // pred_region
          %347 = vst [vmem:[#allocation2] sm:$0xff] 0.0
          %348 = vst [vmem:[#allocation2 + $0x8] sm:$0xff] 0.0
          %349 = vst [vmem:[#allocation2 + $0x10] sm:$0xff] 0.0
          %350 = vst [vmem:[#allocation2 + $0x18] sm:$0xff] 0.0
          %351 = vst [vmem:[#allocation2 + $0x20] sm:$0xff] 0.0
          %352 = vst [vmem:[#allocation2 + $0x28] sm:$0xff] 0.0
          %353 = vst [vmem:[#allocation2 + $0x30] sm:$0xff] 0.0
          %354 = vst [vmem:[#allocation2 + $0x38] sm:$0xff] 0.0
          %355 = vst [vmem:[#allocation2 + $0x40] sm:$0xff] 0.0
          %356 = vst [vmem:[#allocation2 + $0x48] sm:$0xff] 0.0
          %357 = vst [vmem:[#allocation2 + $0x50] sm:$0xff] 0.0
          %358 = vst [vmem:[#allocation2 + $0x58] sm:$0xff] 0.0
          %359 = vst [vmem:[#allocation2 + $0x60] sm:$0xff] 0.0
          %360 = vst [vmem:[#allocation2 + $0x68] sm:$0xff] 0.0
          %361 = vst [vmem:[#allocation2 + $0x70] sm:$0xff] 0.0
          %362 = vst [vmem:[#allocation2 + $0x78] sm:$0xff] 0.0
          %363 = vst [vmem:[#allocation2 + $0x80] sm:$0xff] 0.0
          %364 = vst [vmem:[#allocation2 + $0x88] sm:$0xff] 0.0
          %365 = vst [vmem:[#allocation2 + $0x90] sm:$0xff] 0.0
          %366 = vst [vmem:[#allocation2 + $0x98] sm:$0xff] 0.0
          %367 = vst [vmem:[#allocation2 + $0xa0] sm:$0xff] 0.0
          %368 = vst [vmem:[#allocation2 + $0xa8] sm:$0xff] 0.0
          %369 = vst [vmem:[#allocation2 + $0xb0] sm:$0xff] 0.0
          %370 = vst [vmem:[#allocation2 + $0xb8] sm:$0xff] 0.0
          %371 = vst [vmem:[#allocation2 + $0xc0] sm:$0xff] 0.0
          %372 = vst [vmem:[#allocation2 + $0xc8] sm:$0xff] 0.0
          %373 = vst [vmem:[#allocation2 + $0xd0] sm:$0xff] 0.0
          %374 = vst [vmem:[#allocation2 + $0xd8] sm:$0xff] 0.0
          %375 = vst [vmem:[#allocation2 + $0xe0] sm:$0xff] 0.0
          %376 = vst [vmem:[#allocation2 + $0xe8] sm:$0xff] 0.0
          %377 = vst [vmem:[#allocation2 + $0xf0] sm:$0xff] 0.0
          %378 = vst [vmem:[#allocation2 + $0xf8] sm:$0xff] 0.0
        $region74: #{generator_forward.9} parent=65 // pred_fallthru
          _
        %v379 = vld [vmem:[#allocation2] sm:$0xff]
        %v380 = vld [vmem:[#allocation2 + $0x8] sm:$0xff]
        %v381 = vld [vmem:[#allocation2 + $0x10] sm:$0xff]
        %v382 = vld [vmem:[#allocation2 + $0x18] sm:$0xff]
        %v383 = vld [vmem:[#allocation2 + $0x20] sm:$0xff]
        %v384 = vld [vmem:[#allocation2 + $0x28] sm:$0xff]
        %v385 = vld [vmem:[#allocation2 + $0x30] sm:$0xff]
        %v386 = vld [vmem:[#allocation2 + $0x38] sm:$0xff]
        %v387 = vld [vmem:[#allocation2 + $0x40] sm:$0xff]
        %v388 = vld [vmem:[#allocation2 + $0x48] sm:$0xff]
        %v389 = vld [vmem:[#allocation2 + $0x50] sm:$0xff]
        %v390 = vld [vmem:[#allocation2 + $0x58] sm:$0xff]
        %v391 = vld [vmem:[#allocation2 + $0x60] sm:$0xff]
        %v392 = vld [vmem:[#allocation2 + $0x68] sm:$0xff]
        %v393 = vld [vmem:[#allocation2 + $0x70] sm:$0xff]
        %v394 = vld [vmem:[#allocation2 + $0x78] sm:$0xff]
        %v395 = vld [vmem:[#allocation2 + $0x80] sm:$0xff]
        %v396 = vld [vmem:[#allocation2 + $0x88] sm:$0xff]
        %v397 = vld [vmem:[#allocation2 + $0x90] sm:$0xff]
        %v398 = vld [vmem:[#allocation2 + $0x98] sm:$0xff]
        %v399 = vld [vmem:[#allocation2 + $0xa0] sm:$0xff]
        %v400 = vld [vmem:[#allocation2 + $0xa8] sm:$0xff]
        %v401 = vld [vmem:[#allocation2 + $0xb0] sm:$0xff]
        %v402 = vld [vmem:[#allocation2 + $0xb8] sm:$0xff]
        %v403 = vld [vmem:[#allocation2 + $0xc0] sm:$0xff]
        %v404 = vld [vmem:[#allocation2 + $0xc8] sm:$0xff]
        %v405 = vld [vmem:[#allocation2 + $0xd0] sm:$0xff]
        %v406 = vld [vmem:[#allocation2 + $0xd8] sm:$0xff]
        %v407 = vld [vmem:[#allocation2 + $0xe0] sm:$0xff]
        %v408 = vld [vmem:[#allocation2 + $0xe8] sm:$0xff]
        %v409 = vld [vmem:[#allocation2 + $0xf0] sm:$0xff]
        %v410 = vld [vmem:[#allocation2 + $0xf8] sm:$0xff]
        %v411 = vld [vmem:[%s331] sm:$0xf]
        %v412 = vld [vmem:[%s331 + $0x4] sm:$0xf]
        %v413 = vld [vmem:[%s331 + $0x8] sm:$0xf]
        %v414 = vld [vmem:[%s331 + $0xc] sm:$0xf]
        %v415 = vld [vmem:[%s331 + $0x10] sm:$0xf]
        %v416 = vld [vmem:[%s331 + $0x14] sm:$0xf]
        %v417 = vld [vmem:[%s331 + $0x18] sm:$0xf]
        %v418 = vld [vmem:[%s331 + $0x1c] sm:$0xf]
        %v419 = vld [vmem:[%s331 + $0x20] sm:$0xf]
        %v420 = vld [vmem:[%s331 + $0x24] sm:$0xf]
        %v421 = vld [vmem:[%s331 + $0x28] sm:$0xf]
        %v422 = vld [vmem:[%s331 + $0x2c] sm:$0xf]
        %v423 = vld [vmem:[%s331 + $0x30] sm:$0xf]
        %v424 = vld [vmem:[%s331 + $0x34] sm:$0xf]
        %v425 = vld [vmem:[%s331 + $0x38] sm:$0xf]
        %v426 = vld [vmem:[%s331 + $0x3c] sm:$0xf]
        %v427 = vld [vmem:[%s292] sm:$0xff]
        %v428 = vld [vmem:[%s292 + $0x8] sm:$0xff]
        %v429 = vld [vmem:[%s292 + $0x10] sm:$0xff]
        %v430 = vld [vmem:[%s292 + $0x18] sm:$0xff]
        %v431 = vld [vmem:[%s292 + $0x20] sm:$0xff]
        %v432 = vld [vmem:[%s292 + $0x28] sm:$0xff]
        %v433 = vld [vmem:[%s292 + $0x30] sm:$0xff]
        %v434 = vld [vmem:[%s292 + $0x38] sm:$0xff]
        %v435 = vld [vmem:[%s292 + $0x40] sm:$0xff]
        %v436 = vld [vmem:[%s292 + $0x48] sm:$0xff]
        %v437 = vld [vmem:[%s292 + $0x50] sm:$0xff]
        %v438 = vld [vmem:[%s292 + $0x58] sm:$0xff]
        %v439 = vld [vmem:[%s292 + $0x60] sm:$0xff]
        %v440 = vld [vmem:[%s292 + $0x68] sm:$0xff]
        %v441 = vld [vmem:[%s292 + $0x70] sm:$0xff]
        %v442 = vld [vmem:[%s292 + $0x78] sm:$0xff]
        %v459 = vunpack.c.l.b16 %v411
        %v460 = vunpack.c.l.b16 %v412
        %v461 = vunpack.c.l.b16 %v413
        %v462 = vunpack.c.l.b16 %v414
        %v463 = vunpack.c.l.b16 %v415
        %v464 = vunpack.c.l.b16 %v416
        %v465 = vunpack.c.l.b16 %v417
        %v466 = vunpack.c.l.b16 %v418
        %v467 = vunpack.c.l.b16 %v419
        %v468 = vunpack.c.l.b16 %v420
        %v469 = vunpack.c.l.b16 %v421
        %v470 = vunpack.c.l.b16 %v422
        %v471 = vunpack.c.l.b16 %v423
        %v472 = vunpack.c.l.b16 %v424
        %v473 = vunpack.c.l.b16 %v425
        %v474 = vunpack.c.l.b16 %v426
        %v475 = vpack.c.b16 %v460, %v459
        %v476 = vpack.c.b16 %v462, %v461
        %v477 = vpack.c.b16 %v464, %v463
        %v478 = vpack.c.b16 %v466, %v465
        %v479 = vpack.c.b16 %v468, %v467
        %v480 = vpack.c.b16 %v470, %v469
        %v481 = vpack.c.b16 %v472, %v471
        %v482 = vpack.c.b16 %v474, %v473
        %v507 = vunpack.c.l.b16 %v427
        %v508 = vunpack.c.h.b16 %v427
        %v509 = vunpack.c.l.b16 %v428
        %v510 = vunpack.c.h.b16 %v428
        %v511 = vunpack.c.l.b16 %v429
        %v512 = vunpack.c.h.b16 %v429
        %v513 = vunpack.c.l.b16 %v430
        %v514 = vunpack.c.h.b16 %v430
        %v515 = vunpack.c.l.b16 %v431
        %v516 = vunpack.c.h.b16 %v431
        %v517 = vunpack.c.l.b16 %v432
        %v518 = vunpack.c.h.b16 %v432
        %v519 = vunpack.c.l.b16 %v433
        %v520 = vunpack.c.h.b16 %v433
        %v521 = vunpack.c.l.b16 %v434
        %v522 = vunpack.c.h.b16 %v434
        %v523 = vunpack.c.l.b16 %v435
        %v524 = vunpack.c.h.b16 %v435
        %v525 = vunpack.c.l.b16 %v436
        %v526 = vunpack.c.h.b16 %v436
        %v527 = vunpack.c.l.b16 %v437
        %v528 = vunpack.c.h.b16 %v437
        %v529 = vunpack.c.l.b16 %v438
        %v530 = vunpack.c.h.b16 %v438
        %v531 = vunpack.c.l.b16 %v439
        %v532 = vunpack.c.h.b16 %v439
        %v533 = vunpack.c.l.b16 %v440
        %v534 = vunpack.c.h.b16 %v440
        %v535 = vunpack.c.l.b16 %v441
        %v536 = vunpack.c.h.b16 %v441
        %v537 = vunpack.c.l.b16 %v442
        %v538 = vunpack.c.h.b16 %v442
        %v539 = vpack.c.b16 %v509, %v507
        %v540 = vpack.c.b16 %v510, %v508
        %v541 = vpack.c.b16 %v513, %v511
        %v542 = vpack.c.b16 %v514, %v512
        %v543 = vpack.c.b16 %v517, %v515
        %v544 = vpack.c.b16 %v518, %v516
        %v545 = vpack.c.b16 %v521, %v519
        %v546 = vpack.c.b16 %v522, %v520
        %v547 = vpack.c.b16 %v525, %v523
        %v548 = vpack.c.b16 %v526, %v524
        %v549 = vpack.c.b16 %v529, %v527
        %v550 = vpack.c.b16 %v530, %v528
        %v551 = vpack.c.b16 %v533, %v531
        %v552 = vpack.c.b16 %v534, %v532
        %v553 = vpack.c.b16 %v537, %v535
        %v554 = vpack.c.b16 %v538, %v536
        %571 = vmatprep.subr.bf16.mxu0 %v540
        %572 = vmatpush1.bf16.msra.mxu0 %v539
        %573 = vmatprep.subr.bf16.mxu0 %v542
        %574 = vmatpush1.bf16.msra.mxu0 %v541
        %575 = vmatprep.subr.bf16.mxu0 %v544
        %576 = vmatpush1.bf16.msra.mxu0 %v543
        %577 = vmatprep.subr.bf16.mxu0 %v546
        %578 = vmatpush1.bf16.msra.mxu0 %v545
        %579 = vmatprep.subr.bf16.mxu0 %v548
        %580 = vmatpush1.bf16.msra.mxu0 %v547
        %581 = vmatprep.subr.bf16.mxu0 %v550
        %582 = vmatpush1.bf16.msra.mxu0 %v549
        %583 = vmatprep.subr.bf16.mxu0 %v552
        %584 = vmatpush1.bf16.msra.mxu0 %v551
        %585 = vmatprep.subr.bf16.mxu0 %v554
        %586 = vmatpush1.bf16.msra.mxu0 %v553
        %587 = vmatprep.subr.bf16.mxu0 0
        %588 = vmatpush1.bf16.msra.mxu0 0
        %589 = vmatprep.subr.bf16.mxu0 0
        %590 = vmatpush1.bf16.msra.mxu0 0
        %591 = vmatprep.subr.bf16.mxu0 0
        %592 = vmatpush1.bf16.msra.mxu0 0
        %593 = vmatprep.subr.bf16.mxu0 0
        %594 = vmatpush1.bf16.msra.mxu0 0
        %595 = vmatprep.subr.bf16.mxu0 0
        %596 = vmatpush1.bf16.msra.mxu0 0
        %597 = vmatprep.subr.bf16.mxu0 0
        %598 = vmatpush1.bf16.msra.mxu0 0
        %599 = vmatprep.subr.bf16.mxu0 0
        %600 = vmatpush1.bf16.msra.mxu0 0
        %601 = vmatprep.subr.bf16.mxu0 0
        %602 = vmatpush1.bf16.msra.mxu0 0
        %603 = vmatprep.mubr.bf16.mxu0 0
        %604 = vmatmul.mubr.bf16.gmra.mrb[0].mxu0 %v475
        %v605 = vpop.f32.mrb[0].mxu0
        %v606 = vadd.f32 0.0, %v605
        %v607 = vpop.f32.mrb[0].mxu0
        %v608 = vadd.f32 0.0, %v607
        %v609 = vpop.f32.mrb[0].mxu0
        %v610 = vadd.f32 0.0, %v609
        %v611 = vpop.f32.mrb[0].mxu0
        %v612 = vadd.f32 0.0, %v611
        %613 = vmatprep.mubr.bf16.mxu0 0
        %614 = vmatmul.mubr.bf16.gmra.mrb[0].mxu0 %v476
        %v615 = vpop.f32.mrb[0].mxu0
        %v616 = vadd.f32 0.0, %v615
        %v617 = vpop.f32.mrb[0].mxu0
        %v618 = vadd.f32 0.0, %v617
        %v619 = vpop.f32.mrb[0].mxu0
        %v620 = vadd.f32 0.0, %v619
        %v621 = vpop.f32.mrb[0].mxu0
        %v622 = vadd.f32 0.0, %v621
        %623 = vmatprep.mubr.bf16.mxu0 0
        %624 = vmatmul.mubr.bf16.gmra.mrb[0].mxu0 %v477
        %v625 = vpop.f32.mrb[0].mxu0
        %v626 = vadd.f32 0.0, %v625
        %v627 = vpop.f32.mrb[0].mxu0
        %v628 = vadd.f32 0.0, %v627
        %v629 = vpop.f32.mrb[0].mxu0
        %v630 = vadd.f32 0.0, %v629
        %v631 = vpop.f32.mrb[0].mxu0
        %v632 = vadd.f32 0.0, %v631
        %633 = vmatprep.mubr.bf16.mxu0 0
        %634 = vmatmul.mubr.bf16.gmra.mrb[0].mxu0 %v478
        %v635 = vpop.f32.mrb[0].mxu0
        %v636 = vadd.f32 0.0, %v635
        %v637 = vpop.f32.mrb[0].mxu0
        %v638 = vadd.f32 0.0, %v637
        %v639 = vpop.f32.mrb[0].mxu0
        %v640 = vadd.f32 0.0, %v639
        %v641 = vpop.f32.mrb[0].mxu0
        %v642 = vadd.f32 0.0, %v641
        %643 = vmatprep.mubr.bf16.mxu0 0
        %644 = vmatmul.mubr.bf16.gmra.mrb[0].mxu0 %v479
        %v645 = vpop.f32.mrb[0].mxu0
        %v646 = vadd.f32 0.0, %v645
        %v647 = vpop.f32.mrb[0].mxu0
        %v648 = vadd.f32 0.0, %v647
        %v649 = vpop.f32.mrb[0].mxu0
        %v650 = vadd.f32 0.0, %v649
        %v651 = vpop.f32.mrb[0].mxu0
        %v652 = vadd.f32 0.0, %v651
        %653 = vmatprep.mubr.bf16.mxu0 0
        %654 = vmatmul.mubr.bf16.gmra.mrb[0].mxu0 %v480
        %v655 = vpop.f32.mrb[0].mxu0
        %v656 = vadd.f32 0.0, %v655
        %v657 = vpop.f32.mrb[0].mxu0
        %v658 = vadd.f32 0.0, %v657
        %v659 = vpop.f32.mrb[0].mxu0
        %v660 = vadd.f32 0.0, %v659
        %v661 = vpop.f32.mrb[0].mxu0
        %v662 = vadd.f32 0.0, %v661
        %663 = vmatprep.mubr.bf16.mxu0 0
        %664 = vmatmul.mubr.bf16.gmra.mrb[0].mxu0 %v481
        %v665 = vpop.f32.mrb[0].mxu0
        %v666 = vadd.f32 0.0, %v665
        %v667 = vpop.f32.mrb[0].mxu0
        %v668 = vadd.f32 0.0, %v667
        %v669 = vpop.f32.mrb[0].mxu0
        %v670 = vadd.f32 0.0, %v669
        %v671 = vpop.f32.mrb[0].mxu0
        %v672 = vadd.f32 0.0, %v671
        %673 = vmatprep.mubr.bf16.mxu0 0
        %674 = vmatmul.mubr.bf16.gmra.mrb[0].mxu0 %v482
        %v675 = vpop.f32.mrb[0].mxu0
        %v676 = vadd.f32 0.0, %v675
        %v677 = vpop.f32.mrb[0].mxu0
        %v678 = vadd.f32 0.0, %v677
        %v679 = vpop.f32.mrb[0].mxu0
        %v680 = vadd.f32 0.0, %v679
        %v681 = vpop.f32.mrb[0].mxu0
        %v682 = vadd.f32 0.0, %v681
        %683 = vdwg.mxu0
        %v684 = vadd.f32 %v379, %v606
        %v685 = vadd.f32 %v380, %v608
        %v686 = vadd.f32 %v381, %v610
        %v687 = vadd.f32 %v382, %v612
        %v688 = vadd.f32 %v383, %v616
        %v689 = vadd.f32 %v384, %v618
        %v690 = vadd.f32 %v385, %v620
        %v691 = vadd.f32 %v386, %v622
        %v692 = vadd.f32 %v387, %v626
        %v693 = vadd.f32 %v388, %v628
        %v694 = vadd.f32 %v389, %v630
        %v695 = vadd.f32 %v390, %v632
        %v696 = vadd.f32 %v391, %v636
        %v697 = vadd.f32 %v392, %v638
        %v698 = vadd.f32 %v393, %v640
        %v699 = vadd.f32 %v394, %v642
        %v700 = vadd.f32 %v395, %v646
        %v701 = vadd.f32 %v396, %v648
        %v702 = vadd.f32 %v397, %v650
        %v703 = vadd.f32 %v398, %v652
        %v704 = vadd.f32 %v399, %v656
        %v705 = vadd.f32 %v400, %v658
        %v706 = vadd.f32 %v401, %v660
        %v707 = vadd.f32 %v402, %v662
        %v708 = vadd.f32 %v403, %v666
        %v709 = vadd.f32 %v404, %v668
        %v710 = vadd.f32 %v405, %v670
        %v711 = vadd.f32 %v406, %v672
        %v712 = vadd.f32 %v407, %v676
        %v713 = vadd.f32 %v408, %v678
        %v714 = vadd.f32 %v409, %v680
        %v715 = vadd.f32 %v410, %v682
        %716 = vst [vmem:[#allocation2] sm:$0xff] %v684
        %717 = vst [vmem:[#allocation2 + $0x8] sm:$0xff] %v685
        %718 = vst [vmem:[#allocation2 + $0x10] sm:$0xff] %v686
        %719 = vst [vmem:[#allocation2 + $0x18] sm:$0xff] %v687
        %720 = vst [vmem:[#allocation2 + $0x20] sm:$0xff] %v688
        %721 = vst [vmem:[#allocation2 + $0x28] sm:$0xff] %v689
        %722 = vst [vmem:[#allocation2 + $0x30] sm:$0xff] %v690
        %723 = vst [vmem:[#allocation2 + $0x38] sm:$0xff] %v691
        %724 = vst [vmem:[#allocation2 + $0x40] sm:$0xff] %v692
        %725 = vst [vmem:[#allocation2 + $0x48] sm:$0xff] %v693
        %726 = vst [vmem:[#allocation2 + $0x50] sm:$0xff] %v694
        %727 = vst [vmem:[#allocation2 + $0x58] sm:$0xff] %v695
        %728 = vst [vmem:[#allocation2 + $0x60] sm:$0xff] %v696
        %729 = vst [vmem:[#allocation2 + $0x68] sm:$0xff] %v697
        %730 = vst [vmem:[#allocation2 + $0x70] sm:$0xff] %v698
        %731 = vst [vmem:[#allocation2 + $0x78] sm:$0xff] %v699
        %732 = vst [vmem:[#allocation2 + $0x80] sm:$0xff] %v700
        %733 = vst [vmem:[#allocation2 + $0x88] sm:$0xff] %v701
        %734 = vst [vmem:[#allocation2 + $0x90] sm:$0xff] %v702
        %735 = vst [vmem:[#allocation2 + $0x98] sm:$0xff] %v703
        %736 = vst [vmem:[#allocation2 + $0xa0] sm:$0xff] %v704
        %737 = vst [vmem:[#allocation2 + $0xa8] sm:$0xff] %v705
        %738 = vst [vmem:[#allocation2 + $0xb0] sm:$0xff] %v706
        %739 = vst [vmem:[#allocation2 + $0xb8] sm:$0xff] %v707
        %740 = vst [vmem:[#allocation2 + $0xc0] sm:$0xff] %v708
        %741 = vst [vmem:[#allocation2 + $0xc8] sm:$0xff] %v709
        %742 = vst [vmem:[#allocation2 + $0xd0] sm:$0xff] %v710
        %743 = vst [vmem:[#allocation2 + $0xd8] sm:$0xff] %v711
        %744 = vst [vmem:[#allocation2 + $0xe0] sm:$0xff] %v712
        %745 = vst [vmem:[#allocation2 + $0xe8] sm:$0xff] %v713
        %746 = vst [vmem:[#allocation2 + $0xf0] sm:$0xff] %v714
        %747 = vst [vmem:[#allocation2 + $0xf8] sm:$0xff] %v715
        // Predicated region
        $region75: #{generator_forward.9} parent=65 // pred_check
          %p748 = pneg %p343
        $region76: #{generator_forward.9} parent=65 // pred_check_branch
          %750 = sbr.rel (%p748) target = $region78
        $region77: #{generator_forward.9} parent=65 // pred_region
          %v751 = vld [vmem:[#allocation2] sm:$0xff]
          %v752 = vld [vmem:[#allocation2 + $0x8] sm:$0xff]
          %v753 = vld [vmem:[#allocation2 + $0x10] sm:$0xff]
          %v754 = vld [vmem:[#allocation2 + $0x18] sm:$0xff]
          %v755 = vld [vmem:[#allocation2 + $0x20] sm:$0xff]
          %v756 = vld [vmem:[#allocation2 + $0x28] sm:$0xff]
          %v757 = vld [vmem:[#allocation2 + $0x30] sm:$0xff]
          %v758 = vld [vmem:[#allocation2 + $0x38] sm:$0xff]
          %v759 = vld [vmem:[#allocation2 + $0x40] sm:$0xff]
          %v760 = vld [vmem:[#allocation2 + $0x48] sm:$0xff]
          %v761 = vld [vmem:[#allocation2 + $0x50] sm:$0xff]
          %v762 = vld [vmem:[#allocation2 + $0x58] sm:$0xff]
          %v763 = vld [vmem:[#allocation2 + $0x60] sm:$0xff]
          %v764 = vld [vmem:[#allocation2 + $0x68] sm:$0xff]
          %v765 = vld [vmem:[#allocation2 + $0x70] sm:$0xff]
          %v766 = vld [vmem:[#allocation2 + $0x78] sm:$0xff]
          %v767 = vld [vmem:[#allocation2 + $0x80] sm:$0xff]
          %v768 = vld [vmem:[#allocation2 + $0x88] sm:$0xff]
          %v769 = vld [vmem:[#allocation2 + $0x90] sm:$0xff]
          %v770 = vld [vmem:[#allocation2 + $0x98] sm:$0xff]
          %v771 = vld [vmem:[#allocation2 + $0xa0] sm:$0xff]
          %v772 = vld [vmem:[#allocation2 + $0xa8] sm:$0xff]
          %v773 = vld [vmem:[#allocation2 + $0xb0] sm:$0xff]
          %v774 = vld [vmem:[#allocation2 + $0xb8] sm:$0xff]
          %v775 = vld [vmem:[#allocation2 + $0xc0] sm:$0xff]
          %v776 = vld [vmem:[#allocation2 + $0xc8] sm:$0xff]
          %v777 = vld [vmem:[#allocation2 + $0xd0] sm:$0xff]
          %v778 = vld [vmem:[#allocation2 + $0xd8] sm:$0xff]
          %v779 = vld [vmem:[#allocation2 + $0xe0] sm:$0xff]
          %v780 = vld [vmem:[#allocation2 + $0xe8] sm:$0xff]
          %v781 = vld [vmem:[#allocation2 + $0xf0] sm:$0xff]
          %v782 = vld [vmem:[#allocation2 + $0xf8] sm:$0xff]
          %v783 = vld [vmem:[%s338] sm:$0x3]
          %v785 = vlaneseq
          %v786 = vshrl.u32 %v785, 7
          %v787 = vsub.s32 0, %v786
          %v788 = vrot.slane %v783, %v787
          %v789 = vlaneseq
          %v790 = vshrl.u32 %v789, 7
          %v791 = vsub.s32 1, %v790
          %v792 = vrot.slane %v783, %v791
          %v795 = vadd.f32 %v751, %v788
          %v796 = vadd.f32 %v752, %v792
          %v797 = vadd.f32 %v753, %v788
          %v798 = vadd.f32 %v754, %v792
          %v799 = vadd.f32 %v755, %v788
          %v800 = vadd.f32 %v756, %v792
          %v801 = vadd.f32 %v757, %v788
          %v802 = vadd.f32 %v758, %v792
          %v803 = vadd.f32 %v759, %v788
          %v804 = vadd.f32 %v760, %v792
          %v805 = vadd.f32 %v761, %v788
          %v806 = vadd.f32 %v762, %v792
          %v807 = vadd.f32 %v763, %v788
          %v808 = vadd.f32 %v764, %v792
          %v809 = vadd.f32 %v765, %v788
          %v810 = vadd.f32 %v766, %v792
          %v811 = vadd.f32 %v767, %v788
          %v812 = vadd.f32 %v768, %v792
          %v813 = vadd.f32 %v769, %v788
          %v814 = vadd.f32 %v770, %v792
          %v815 = vadd.f32 %v771, %v788
          %v816 = vadd.f32 %v772, %v792
          %v817 = vadd.f32 %v773, %v788
          %v818 = vadd.f32 %v774, %v792
          %v819 = vadd.f32 %v775, %v788
          %v820 = vadd.f32 %v776, %v792
          %v821 = vadd.f32 %v777, %v788
          %v822 = vadd.f32 %v778, %v792
          %v823 = vadd.f32 %v779, %v788
          %v824 = vadd.f32 %v780, %v792
          %v825 = vadd.f32 %v781, %v788
          %v826 = vadd.f32 %v782, %v792
          %827 = vst [vmem:[%s323] sm:$0xff] %v795
          %828 = vst [vmem:[%s323 + $0x8] sm:$0xff] %v796
          %829 = vst [vmem:[%s323 + $0x10] sm:$0xff] %v797
          %830 = vst [vmem:[%s323 + $0x18] sm:$0xff] %v798
          %831 = vst [vmem:[%s323 + $0x20] sm:$0xff] %v799
          %832 = vst [vmem:[%s323 + $0x28] sm:$0xff] %v800
          %833 = vst [vmem:[%s323 + $0x30] sm:$0xff] %v801
          %834 = vst [vmem:[%s323 + $0x38] sm:$0xff] %v802
          %835 = vst [vmem:[%s323 + $0x40] sm:$0xff] %v803
          %836 = vst [vmem:[%s323 + $0x48] sm:$0xff] %v804
          %837 = vst [vmem:[%s323 + $0x50] sm:$0xff] %v805
          %838 = vst [vmem:[%s323 + $0x58] sm:$0xff] %v806
          %839 = vst [vmem:[%s323 + $0x60] sm:$0xff] %v807
          %840 = vst [vmem:[%s323 + $0x68] sm:$0xff] %v808
          %841 = vst [vmem:[%s323 + $0x70] sm:$0xff] %v809
          %842 = vst [vmem:[%s323 + $0x78] sm:$0xff] %v810
          %843 = vst [vmem:[%s323 + $0x80] sm:$0xff] %v811
          %844 = vst [vmem:[%s323 + $0x88] sm:$0xff] %v812
          %845 = vst [vmem:[%s323 + $0x90] sm:$0xff] %v813
          %846 = vst [vmem:[%s323 + $0x98] sm:$0xff] %v814
          %847 = vst [vmem:[%s323 + $0xa0] sm:$0xff] %v815
          %848 = vst [vmem:[%s323 + $0xa8] sm:$0xff] %v816
          %849 = vst [vmem:[%s323 + $0xb0] sm:$0xff] %v817
          %850 = vst [vmem:[%s323 + $0xb8] sm:$0xff] %v818
          %851 = vst [vmem:[%s323 + $0xc0] sm:$0xff] %v819
          %852 = vst [vmem:[%s323 + $0xc8] sm:$0xff] %v820
          %853 = vst [vmem:[%s323 + $0xd0] sm:$0xff] %v821
          %854 = vst [vmem:[%s323 + $0xd8] sm:$0xff] %v822
          %855 = vst [vmem:[%s323 + $0xe0] sm:$0xff] %v823
          %856 = vst [vmem:[%s323 + $0xe8] sm:$0xff] %v824
          %857 = vst [vmem:[%s323 + $0xf0] sm:$0xff] %v825
          %858 = vst [vmem:[%s323 + $0xf8] sm:$0xff] %v826
        $region78: #{generator_forward.9} parent=65 // pred_fallthru
          _
        %s859 = sand.u32 %s125, 1
        %s860 = sand.u32 %s125, 1
        %s861 = smul.addr %s860, 256
        %s862 = scalar_lea.vmem [#allocation4], %s861
        // Predicated region
        $region79: #{generator_forward.9} parent=65 // pred_check
          %p863 = pneg %p135
        $region80: #{generator_forward.9} parent=65 // pred_check_branch
          %865 = sbr.rel (%p863) target = $region82
        $region81: #{generator_forward.9} parent=65 // pred_region
          %s866 = smul.u32 16, %s19
          %s867 = smul.u32 2, %s20
          %s868 = smul.addr %s866, 6
          %s869 = sadd.s32 %s867, %s868
          %s870 = smul.addr %s869, 8
          %s871 = scalar_lea.vmem %s3, %s870
          // Predicated region
          $region83: #{generator_forward.9} parent=81 // pred_check
            _
          $region84: #{generator_forward.9} parent=81 // pred_check_branch
            %873 = sbr.rel (0) target = $region86
          $region85: #{generator_forward.9} parent=81 // pred_region
            // Predicated region
            $region87: #{generator_forward.9} parent=85 // pred_check
              _
            $region88: #{generator_forward.9} parent=85 // pred_check_branch
              %875 = sbr.rel (0) target = $region90
            $region89: #{generator_forward.9} parent=85 // pred_region
              loop: start=0, step=1, limit=1
              $region91: #{generator_forward.9} parent=89 // loop_pre_header
                _
              $region92: #{generator_forward.9} parent=89 // loop_header
                %s877 = sphi 0, %s881
                %p878 = scmp.ge.s32.totalorder %s877, 1
                %s882 = sphi %s862, %s862
                %s883 = sphi %s871, %s871
              $region93: #{generator_forward.9} parent=89 // loop_header_branch
                %880 = sbr.rel (%p878) target = $region97
              $region94: #{generator_forward.9} parent=89 // loop_body
                %v884 = vld [vmem:[%s882] sm:$0xff]
                %885 = vst [vmem:[%s883] sm:$0xff] %v884
                %v886 = vld [vmem:[%s882 + $0x8] sm:$0xff]
                %887 = vst [vmem:[%s883 + $0x8] sm:$0xff] %v886
                %v888 = vld [vmem:[%s882 + $0x10] sm:$0xff]
                %889 = vst [vmem:[%s883 + $0x30] sm:$0xff] %v888
                %v890 = vld [vmem:[%s882 + $0x18] sm:$0xff]
                %891 = vst [vmem:[%s883 + $0x38] sm:$0xff] %v890
                %v892 = vld [vmem:[%s882 + $0x20] sm:$0xff]
                %893 = vst [vmem:[%s883 + $0x60] sm:$0xff] %v892
                %v894 = vld [vmem:[%s882 + $0x28] sm:$0xff]
                %895 = vst [vmem:[%s883 + $0x68] sm:$0xff] %v894
                %v896 = vld [vmem:[%s882 + $0x30] sm:$0xff]
                %897 = vst [vmem:[%s883 + $0x90] sm:$0xff] %v896
                %v898 = vld [vmem:[%s882 + $0x38] sm:$0xff]
                %899 = vst [vmem:[%s883 + $0x98] sm:$0xff] %v898
                %v900 = vld [vmem:[%s882 + $0x40] sm:$0xff]
                %901 = vst [vmem:[%s883 + $0xc0] sm:$0xff] %v900
                %v902 = vld [vmem:[%s882 + $0x48] sm:$0xff]
                %903 = vst [vmem:[%s883 + $0xc8] sm:$0xff] %v902
                %v904 = vld [vmem:[%s882 + $0x50] sm:$0xff]
                %905 = vst [vmem:[%s883 + $0xf0] sm:$0xff] %v904
                %v906 = vld [vmem:[%s882 + $0x58] sm:$0xff]
                %907 = vst [vmem:[%s883 + $0xf8] sm:$0xff] %v906
                %v908 = vld [vmem:[%s882 + $0x60] sm:$0xff]
                %909 = vst [vmem:[%s883 + $0x120] sm:$0xff] %v908
                %v910 = vld [vmem:[%s882 + $0x68] sm:$0xff]
                %911 = vst [vmem:[%s883 + $0x128] sm:$0xff] %v910
                %v912 = vld [vmem:[%s882 + $0x70] sm:$0xff]
                %913 = vst [vmem:[%s883 + $0x150] sm:$0xff] %v912
                %v914 = vld [vmem:[%s882 + $0x78] sm:$0xff]
                %915 = vst [vmem:[%s883 + $0x158] sm:$0xff] %v914
                %v916 = vld [vmem:[%s882 + $0x80] sm:$0xff]
                %917 = vst [vmem:[%s883 + $0x180] sm:$0xff] %v916
                %v918 = vld [vmem:[%s882 + $0x88] sm:$0xff]
                %919 = vst [vmem:[%s883 + $0x188] sm:$0xff] %v918
                %v920 = vld [vmem:[%s882 + $0x90] sm:$0xff]
                %921 = vst [vmem:[%s883 + $0x1b0] sm:$0xff] %v920
                %v922 = vld [vmem:[%s882 + $0x98] sm:$0xff]
                %923 = vst [vmem:[%s883 + $0x1b8] sm:$0xff] %v922
                %v924 = vld [vmem:[%s882 + $0xa0] sm:$0xff]
                %925 = vst [vmem:[%s883 + $0x1e0] sm:$0xff] %v924
                %v926 = vld [vmem:[%s882 + $0xa8] sm:$0xff]
                %927 = vst [vmem:[%s883 + $0x1e8] sm:$0xff] %v926
                %v928 = vld [vmem:[%s882 + $0xb0] sm:$0xff]
                %929 = vst [vmem:[%s883 + $0x210] sm:$0xff] %v928
                %v930 = vld [vmem:[%s882 + $0xb8] sm:$0xff]
                %931 = vst [vmem:[%s883 + $0x218] sm:$0xff] %v930
                %v932 = vld [vmem:[%s882 + $0xc0] sm:$0xff]
                %933 = vst [vmem:[%s883 + $0x240] sm:$0xff] %v932
                %v934 = vld [vmem:[%s882 + $0xc8] sm:$0xff]
                %935 = vst [vmem:[%s883 + $0x248] sm:$0xff] %v934
                %v936 = vld [vmem:[%s882 + $0xd0] sm:$0xff]
                %937 = vst [vmem:[%s883 + $0x270] sm:$0xff] %v936
                %v938 = vld [vmem:[%s882 + $0xd8] sm:$0xff]
                %939 = vst [vmem:[%s883 + $0x278] sm:$0xff] %v938
                %v940 = vld [vmem:[%s882 + $0xe0] sm:$0xff]
                %941 = vst [vmem:[%s883 + $0x2a0] sm:$0xff] %v940
                %v942 = vld [vmem:[%s882 + $0xe8] sm:$0xff]
                %943 = vst [vmem:[%s883 + $0x2a8] sm:$0xff] %v942
                %v944 = vld [vmem:[%s882 + $0xf0] sm:$0xff]
                %945 = vst [vmem:[%s883 + $0x2d0] sm:$0xff] %v944
                %v946 = vld [vmem:[%s882 + $0xf8] sm:$0xff]
                %947 = vst [vmem:[%s883 + $0x2d8] sm:$0xff] %v946
              $region95: #{generator_forward.9} parent=89 // loop_footer
                %s881 = sadd.s32 1, %s877
              $region96: #{generator_forward.9} parent=89 // loop_footer_branch
                %876 = sbr.rel target = $region92
              $region97: #{generator_forward.9} parent=89 // loop_exit
                _
            $region90: #{generator_forward.9} parent=85 // pred_fallthru
              _
            // Predicated region
            $region98: #{generator_forward.9} parent=85 // pred_check
              _
            $region99: #{generator_forward.9} parent=85 // pred_check_branch
              %949 = sbr.rel target = $region101
            $region100: #{generator_forward.9} parent=85 // pred_region
              _
            $region101: #{generator_forward.9} parent=85 // pred_fallthru
              _
          $region86: #{generator_forward.9} parent=81 // pred_fallthru
            _
          %950 = vnop
        $region82: #{generator_forward.9} parent=65 // pred_fallthru
          _
      $region66: #{generator_forward.9} parent=5 // pred_fallthru
        _
      %p951 = scmp.le.s32.totalorder 2, %s9
      // Predicated region
      $region102: #{generator_forward.9} parent=5 // pred_check
        %p952 = pneg %p951
      $region103: #{generator_forward.9} parent=5 // pred_check_branch
        %954 = sbr.rel (%p952) target = $region105
      $region104: #{generator_forward.9} parent=5 // pred_region
        %s955 = ssub.s32 %s9, 2
        // Predicated region
        $region106: #{generator_forward.9} parent=104 // pred_check
          %p956 = pneg %p141
        $region107: #{generator_forward.9} parent=104 // pred_check_branch
          %958 = sbr.rel (%p956) target = $region109
        $region108: #{generator_forward.9} parent=104 // pred_region
          %s959 = sand.u32 %s126, 1
          %s960 = sand.u32 %s126, 1
          %s961 = smul.addr %s960, 256
          %s962 = scalar_lea.vmem [#allocation4], %s961
        $region109: #{generator_forward.9} parent=104 // pred_fallthru
          _
      $region105: #{generator_forward.9} parent=5 // pred_fallthru
        _
    $region6: #{generator_forward.9} parent=1 // loop_footer
      %s13 = sadd.s32 1, %s9
    $region7: #{generator_forward.9} parent=1 // loop_footer_branch
      %8 = sbr.rel target = $region3
    $region8: #{generator_forward.9} parent=1 // loop_exit
      _

// kernel: generator_forward.11
$region0: #{generator_forward.11}
  #allocation0 [shape = 'u32[]', space=smem, size = 0x4, offset = 0x4, fixed_abs, tag = 'smem constant byte address 0x4 - core index']
  #allocation1 [shape = 'u32[144,128]{1,0:T(1,128)}', space=vmem, size = 0x12000, scoped, tag = 'internal scratch']
  #allocation2 [shape = 'f32[128,256]{1,0:T(8,128)}', space=vmem, size = 0x20000, scoped, tag = 'scratch operand']
  %s0 = inlined_call_operand.vmem [shape: bf16[128,256], index: 0, kind: input, shape index: {}]
  %s1 = inlined_call_operand.vmem [shape: bf16[256,768], index: 1, kind: input, shape index: {}]
  %s2 = inlined_call_operand.vmem [shape: f32[1,768], index: 2, kind: input, shape index: {}]
  %s3 = inlined_call_operand.vmem [shape: f32[128,768], index: 3, kind: output, shape index: {}]
  %s4 = sld [smem:[#allocation0]]
  $region110: #{generator_forward.11} parent=0
    _
  %s6 = ssub.s32 1, %s4
  %s7 = scalar_select 0, %s6, %s4
  $region1: #{generator_forward.11} parent=0
    #allocation3 [shape = 'u8[262144]{0}', space=vmem, size = 0x40000, scoped, tag = 'input window, operand 1']
    #allocation4 [shape = 'u8[262144]{0}', space=vmem, size = 0x40000, scoped, tag = 'output window, operand 0']
    loop: start=0, step=1, limit=5
    $region2: #{generator_forward.11} parent=1 // loop_pre_header
      _
    $region3: #{generator_forward.11} parent=1 // loop_header
      %s9 = sphi 0, %s13
      %p10 = scmp.ge.s32.totalorder %s9, 5
      %s16 = sphi 0, %s35
      %s17 = sphi 0, %s31
      %s18 = sphi 0, %s27
      %s19 = sphi 0, %s16
      %s20 = sphi 0, %s17
      %s21 = sphi 0, %s18
      %s22 = sphi 0, %s19
      %s23 = sphi 0, %s20
      %s24 = sphi 0, %s21
      %s40 = sphi 0, %s42
      %s43 = sphi 0, %s40
      %s44 = sphi 0, %s43
      %s60 = sphi 0, %s44
      %s68 = sphi 0, %s70
      %s71 = sphi 0, %s68
      %s72 = sphi 0, %s71
      %s88 = sphi 0, %s72
      %s94 = sphi 0, %s96
      %s97 = sphi 0, %s94
      %s98 = sphi 0, %s97
      %s114 = sphi 0, %s98
      %s122 = sphi 0, %s124
      %s125 = sphi 0, %s122
      %s126 = sphi 0, %s125
      %s142 = sphi 0, %s126
    $region4: #{generator_forward.11} parent=1 // loop_header_branch
      %12 = sbr.rel (%p10) target = $region8
    $region5: #{generator_forward.11} parent=1 // loop_body
      %s14 = ssub.s32 %s9, 1
      %s15 = ssub.s32 %s9, 2
      %s25 = sadd.s32 1, %s18
      %p26 = scmp.ge.s32.totalorder %s25, 1
      %s27 = scalar_select %p26, 0, %s25
      %s28 = sadd.s32 1, %s17
      %s29 = scalar_select %p26, %s28, %s17
      %p30 = scmp.ge.s32.totalorder %s29, 3
      %s31 = scalar_select %p30, 0, %s29
      %s32 = sadd.s32 1, %s16
      %s33 = scalar_select %p30, %s32, %s16
      %p34 = scmp.ge.s32.totalorder %s33, 1
      %s35 = scalar_select %p34, 0, %s33
      %s36 = ssub.s32 %s16, %s35
      %s37 = ssub.s32 %s18, %s27
      %s38 = sor.u32 %s36, %s37
      %p39 = scmp.eq.s32.totalorder %s38, 0
      %s41 = sadd.s32 %s40, 1
      %s42 = scalar_select %p39, %s40, %s41
      %p45 = pneg %p39
      %p46 = scmp.eq.s32.totalorder %s9, 2
      %p47 = por %p45, %p46
      %p48 = scmp.ne.s32.totalorder %s40, %s43
      %p49 = scmp.eq.s32.totalorder %s9, 0
      %p50 = por %p48, %p49
      %p51 = scmp.ne.s32.totalorder %s40, %s43
      %p52 = scmp.eq.s32.totalorder %s14, 2
      %p53 = por %p51, %p52
      %p54 = scmp.ne.s32.totalorder %s43, %s44
      %p55 = scmp.eq.s32.totalorder %s14, 0
      %p56 = por %p54, %p55
      %p57 = scmp.ne.s32.totalorder %s43, %s44
      %p58 = scmp.eq.s32.totalorder %s15, 2
      %p59 = por %p57, %p58
      %p61 = scmp.ne.s32.totalorder %s44, %s60
      %p62 = scmp.eq.s32.totalorder %s15, 0
      %p63 = por %p61, %p62
      %s64 = ssub.s32 %s18, %s27
      %s65 = ssub.s32 %s17, %s31
      %s66 = sor.u32 %s64, %s65
      %p67 = scmp.eq.s32.totalorder %s66, 0
      %s69 = sadd.s32 %s68, 1
      %s70 = scalar_select %p67, %s68, %s69
      %p73 = pneg %p67
      %p74 = scmp.eq.s32.totalorder %s9, 2
      %p75 = por %p73, %p74
      %p76 = scmp.ne.s32.totalorder %s68, %s71
      %p77 = scmp.eq.s32.totalorder %s9, 0
      %p78 = por %p76, %p77
      %p79 = scmp.ne.s32.totalorder %s68, %s71
      %p80 = scmp.eq.s32.totalorder %s14, 2
      %p81 = por %p79, %p80
      %p82 = scmp.ne.s32.totalorder %s71, %s72
      %p83 = scmp.eq.s32.totalorder %s14, 0
      %p84 = por %p82, %p83
      %p85 = scmp.ne.s32.totalorder %s71, %s72
      %p86 = scmp.eq.s32.totalorder %s15, 2
      %p87 = por %p85, %p86
      %p89 = scmp.ne.s32.totalorder %s72, %s88
      %p90 = scmp.eq.s32.totalorder %s15, 0
      %p91 = por %p89, %p90
      %s92 = ssub.s32 %s17, %s31
      %p93 = scmp.eq.s32.totalorder %s92, 0
      %s95 = sadd.s32 %s94, 1
      %s96 = scalar_select %p93, %s94, %s95
      %p99 = pneg %p93
      %p100 = scmp.eq.s32.totalorder %s9, 2
      %p101 = por %p99, %p100
      %p102 = scmp.ne.s32.totalorder %s94, %s97
      %p103 = scmp.eq.s32.totalorder %s9, 0
      %p104 = por %p102, %p103
      %p105 = scmp.ne.s32.totalorder %s94, %s97
      %p106 = scmp.eq.s32.totalorder %s14, 2
      %p107 = por %p105, %p106
      %p108 = scmp.ne.s32.totalorder %s97, %s98
      %p109 = scmp.eq.s32.totalorder %s14, 0
      %p110 = por %p108, %p109
      %p111 = scmp.ne.s32.totalorder %s97, %s98
      %p112 = scmp.eq.s32.totalorder %s15, 2
      %p113 = por %p111, %p112
      %p115 = scmp.ne.s32.totalorder %s98, %s114
      %p116 = scmp.eq.s32.totalorder %s15, 0
      %p117 = por %p115, %p116
      %s118 = ssub.s32 %s16, %s35
      %s119 = ssub.s32 %s17, %s31
      %s120 = sor.u32 %s118, %s119
      %p121 = scmp.eq.s32.totalorder %s120, 0
      %s123 = sadd.s32 %s122, 1
      %s124 = scalar_select %p121, %s122, %s123
      %p127 = pneg %p121
      %p128 = scmp.eq.s32.totalorder %s9, 2
      %p129 = por %p127, %p128
      %p130 = scmp.ne.s32.totalorder %s122, %s125
      %p131 = scmp.eq.s32.totalorder %s9, 0
      %p132 = por %p130, %p131
      %p133 = scmp.ne.s32.totalorder %s122, %s125
      %p134 = scmp.eq.s32.totalorder %s14, 2
      %p135 = por %p133, %p134
      %p136 = scmp.ne.s32.totalorder %s125, %s126
      %p137 = scmp.eq.s32.totalorder %s14, 0
      %p138 = por %p136, %p137
      %p139 = scmp.ne.s32.totalorder %s125, %s126
      %p140 = scmp.eq.s32.totalorder %s15, 2
      %p141 = por %p139, %p140
      %p143 = scmp.ne.s32.totalorder %s126, %s142
      %p144 = scmp.eq.s32.totalorder %s15, 0
      %p145 = por %p143, %p144
      %p146 = scmp.le.s32.totalorder 1, %s9
      %p147 = scmp.lt.s32.totalorder %s9, 4
      %p148 = pnand %p146, %p147
      %p149 = pneg %p148
      // Predicated region
      $region9: #{generator_forward.11} parent=5 // pred_check
        _
      $region10: #{generator_forward.11} parent=5 // pred_check_branch
        %151 = sbr.rel (%p148) target = $region12
      $region11: #{generator_forward.11} parent=5 // pred_region
        %s152 = ssub.s32 %s9, 1
        // Predicated region
        $region13: #{generator_forward.11} parent=11 // pred_check
          %p153 = pneg %p56
        $region14: #{generator_forward.11} parent=11 // pred_check_branch
          %155 = sbr.rel (%p153) target = $region16
        $region15: #{generator_forward.11} parent=11 // pred_region
          %s156 = smul.u32 16, %s19
          %s157 = smul.u32 2, %s21
          %p158 = scmp.lt.s32.totalorder %s156, 15
          %s159 = scalar_select %p158, %s156, 15
          %p160 = scmp.lt.s32.totalorder %s157, 1
          %s161 = scalar_select %p160, %s157, 1
          %s162 = smul.addr %s159, 2
          %s163 = sadd.s32 %s161, %s162
          %s164 = smul.addr %s163, 4
          %s165 = scalar_lea.vmem %s0, %s164
          %s166 = smul.u32 16, %s19
          %s167 = smul.u32 2, %s21
        $region16: #{generator_forward.11} parent=11 // pred_fallthru
          _
      $region12: #{generator_forward.11} parent=5 // pred_fallthru
        _
      %p168 = scmp.lt.s32.totalorder %s9, 3
      // Predicated region
      $region17: #{generator_forward.11} parent=5 // pred_check
        %p169 = pneg %p168
      $region18: #{generator_forward.11} parent=5 // pred_check_branch
        %171 = sbr.rel (%p169) target = $region20
      $region19: #{generator_forward.11} parent=5 // pred_region
        // Predicated region
        $region21: #{generator_forward.11} parent=19 // pred_check
          %p172 = pneg %p78
        $region22: #{generator_forward.11} parent=19 // pred_check_branch
          %174 = sbr.rel (%p172) target = $region24
        $region23: #{generator_forward.11} parent=19 // pred_region
          %s175 = sand.u32 %s68, 1
          %s176 = sand.u32 %s68, 1
          %s177 = smul.addr %s176, 256
          %s178 = scalar_lea.vmem [#allocation3], %s177
          %s179 = smul.u32 32, %s18
          %s180 = smul.u32 2, %s17
          %s181 = smul.addr %s179, 6
          %s182 = sadd.s32 %s180, %s181
          %s183 = smul.addr %s182, 4
          %s184 = scalar_lea.vmem %s1, %s183
          // Predicated region
          $region25: #{generator_forward.11} parent=23 // pred_check
            _
          $region26: #{generator_forward.11} parent=23 // pred_check_branch
            %186 = sbr.rel (0) target = $region28
          $region27: #{generator_forward.11} parent=23 // pred_region
            // Predicated region
            $region29: #{generator_forward.11} parent=27 // pred_check
              _
            $region30: #{generator_forward.11} parent=27 // pred_check_branch
              %188 = sbr.rel (0) target = $region32
            $region31: #{generator_forward.11} parent=27 // pred_region
              // Predicated region
              $region44: #{generator_forward.11} parent=31 // pred_check
                _
              $region45: #{generator_forward.11} parent=31 // pred_check_branch
                %265 = sbr.rel (0) target = $region47
              $region46: #{generator_forward.11} parent=31 // pred_region
                loop: start=0, step=1, limit=1
                $region48: #{generator_forward.11} parent=46 // loop_pre_header
                  _
                $region49: #{generator_forward.11} parent=46 // loop_header
                  %s267 = sphi 0, %s271
                  %p268 = scmp.ge.s32.totalorder %s267, 1
                  %s272 = sphi %s184, %s184
                  %s273 = sphi %s178, %s178
                $region50: #{generator_forward.11} parent=46 // loop_header_branch
                  %270 = sbr.rel (%p268) target = $region54
                $region51: #{generator_forward.11} parent=46 // loop_body
                  %v274 = vld [vmem:[%s272] sm:$0xff]
                  %275 = vst [vmem:[%s273] sm:$0xff] %v274
                  %v276 = vld [vmem:[%s272 + $0x18] sm:$0xff]
                  %277 = vst [vmem:[%s273 + $0x8] sm:$0xff] %v276
                  %v278 = vld [vmem:[%s272 + $0x30] sm:$0xff]
                  %279 = vst [vmem:[%s273 + $0x10] sm:$0xff] %v278
                  %v280 = vld [vmem:[%s272 + $0x48] sm:$0xff]
                  %281 = vst [vmem:[%s273 + $0x18] sm:$0xff] %v280
                  %v282 = vld [vmem:[%s272 + $0x60] sm:$0xff]
                  %283 = vst [vmem:[%s273 + $0x20] sm:$0xff] %v282
                  %v284 = vld [vmem:[%s272 + $0x78] sm:$0xff]
                  %285 = vst [vmem:[%s273 + $0x28] sm:$0xff] %v284
                  %v286 = vld [vmem:[%s272 + $0x90] sm:$0xff]
                  %287 = vst [vmem:[%s273 + $0x30] sm:$0xff] %v286
                  %v288 = vld [vmem:[%s272 + $0xa8] sm:$0xff]
                  %289 = vst [vmem:[%s273 + $0x38] sm:$0xff] %v288
                  %v290 = vld [vmem:[%s272 + $0xc0] sm:$0xff]
                  %291 = vst [vmem:[%s273 + $0x40] sm:$0xff] %v290
                  %v292 = vld [vmem:[%s272 + $0xd8] sm:$0xff]
                  %293 = vst [vmem:[%s273 + $0x48] sm:$0xff] %v292
                  %v294 = vld [vmem:[%s272 + $0xf0] sm:$0xff]
                  %295 = vst [vmem:[%s273 + $0x50] sm:$0xff] %v294
                  %v296 = vld [vmem:[%s272 + $0x108] sm:$0xff]
                  %297 = vst [vmem:[%s273 + $0x58] sm:$0xff] %v296
                  %v298 = vld [vmem:[%s272 + $0x120] sm:$0xff]
                  %299 = vst [vmem:[%s273 + $0x60] sm:$0xff] %v298
                  %v300 = vld [vmem:[%s272 + $0x138] sm:$0xff]
                  %301 = vst [vmem:[%s273 + $0x68] sm:$0xff] %v300
                  %v302 = vld [vmem:[%s272 + $0x150] sm:$0xff]
                  %303 = vst [vmem:[%s273 + $0x70] sm:$0xff] %v302
                  %v304 = vld [vmem:[%s272 + $0x168] sm:$0xff]
                  %305 = vst [vmem:[%s273 + $0x78] sm:$0xff] %v304
                  %v306 = vld [vmem:[%s272 + $0x180] sm:$0xff]
                  %307 = vst [vmem:[%s273 + $0x80] sm:$0xff] %v306
                  %v308 = vld [vmem:[%s272 + $0x198] sm:$0xff]
                  %309 = vst [vmem:[%s273 + $0x88] sm:$0xff] %v308
                  %v310 = vld [vmem:[%s272 + $0x1b0] sm:$0xff]
                  %311 = vst [vmem:[%s273 + $0x90] sm:$0xff] %v310
                  %v312 = vld [vmem:[%s272 + $0x1c8] sm:$0xff]
                  %313 = vst [vmem:[%s273 + $0x98] sm:$0xff] %v312
                  %v314 = vld [vmem:[%s272 + $0x1e0] sm:$0xff]
                  %315 = vst [vmem:[%s273 + $0xa0] sm:$0xff] %v314
                  %v316 = vld [vmem:[%s272 + $0x1f8] sm:$0xff]
                  %317 = vst [vmem:[%s273 + $0xa8] sm:$0xff] %v316
                  %v318 = vld [vmem:[%s272 + $0x210] sm:$0xff]
                  %319 = vst [vmem:[%s273 + $0xb0] sm:$0xff] %v318
                  %v320 = vld [vmem:[%s272 + $0x228] sm:$0xff]
                  %321 = vst [vmem:[%s273 + $0xb8] sm:$0xff] %v320
                  %v322 = vld [vmem:[%s272 + $0x240] sm:$0xff]
                  %323 = vst [vmem:[%s273 + $0xc0] sm:$0xff] %v322
                  %v324 = vld [vmem:[%s272 + $0x258] sm:$0xff]
                  %325 = vst [vmem:[%s273 + $0xc8] sm:$0xff] %v324
                  %v326 = vld [vmem:[%s272 + $0x270] sm:$0xff]
                  %327 = vst [vmem:[%s273 + $0xd0] sm:$0xff] %v326
                  %v328 = vld [vmem:[%s272 + $0x288] sm:$0xff]
                  %329 = vst [vmem:[%s273 + $0xd8] sm:$0xff] %v328
                  %v330 = vld [vmem:[%s272 + $0x2a0] sm:$0xff]
                  %331 = vst [vmem:[%s273 + $0xe0] sm:$0xff] %v330
                  %v332 = vld [vmem:[%s272 + $0x2b8] sm:$0xff]
                  %333 = vst [vmem:[%s273 + $0xe8] sm:$0xff] %v332
                  %v334 = vld [vmem:[%s272 + $0x2d0] sm:$0xff]
                  %335 = vst [vmem:[%s273 + $0xf0] sm:$0xff] %v334
                  %v336 = vld [vmem:[%s272 + $0x2e8] sm:$0xff]
                  %337 = vst [vmem:[%s273 + $0xf8] sm:$0xff] %v336
                $region52: #{generator_forward.11} parent=46 // loop_footer
                  %s271 = sadd.s32 1, %s267
                $region53: #{generator_forward.11} parent=46 // loop_footer_branch
                  %266 = sbr.rel target = $region49
                $region54: #{generator_forward.11} parent=46 // loop_exit
                  _
              $region47: #{generator_forward.11} parent=31 // pred_fallthru
                _
              // Predicated region
              $region55: #{generator_forward.11} parent=31 // pred_check
                _
              $region56: #{generator_forward.11} parent=31 // pred_check_branch
                %339 = sbr.rel target = $region58
              $region57: #{generator_forward.11} parent=31 // pred_region
                _
              $region58: #{generator_forward.11} parent=31 // pred_fallthru
                _
            $region32: #{generator_forward.11} parent=27 // pred_fallthru
              _
            // Predicated region
            $region33: #{generator_forward.11} parent=27 // pred_check
              _
            $region34: #{generator_forward.11} parent=27 // pred_check_branch
              %190 = sbr.rel target = $region36
            $region35: #{generator_forward.11} parent=27 // pred_region
              loop: start=0, step=1, limit=1
              $region37: #{generator_forward.11} parent=35 // loop_pre_header
                _
              $region38: #{generator_forward.11} parent=35 // loop_header
                %s193 = sphi 0, %s197
                %p194 = scmp.ge.s32.totalorder %s193, 1
                %s198 = sphi %s184, %s184
                %s199 = sphi %s178, %s178
              $region39: #{generator_forward.11} parent=35 // loop_header_branch
                %196 = sbr.rel (%p194) target = $region43
              $region40: #{generator_forward.11} parent=35 // loop_body
                %v200 = vld [vmem:[%s198] sm:$0xff]
                %201 = vst [vmem:[%s199] sm:$0xff] %v200
                %v202 = vld [vmem:[%s198 + $0x18] sm:$0xff]
                %203 = vst [vmem:[%s199 + $0x8] sm:$0xff] %v202
                %v204 = vld [vmem:[%s198 + $0x30] sm:$0xff]
                %205 = vst [vmem:[%s199 + $0x10] sm:$0xff] %v204
                %v206 = vld [vmem:[%s198 + $0x48] sm:$0xff]
                %207 = vst [vmem:[%s199 + $0x18] sm:$0xff] %v206
                %v208 = vld [vmem:[%s198 + $0x60] sm:$0xff]
                %209 = vst [vmem:[%s199 + $0x20] sm:$0xff] %v208
                %v210 = vld [vmem:[%s198 + $0x78] sm:$0xff]
                %211 = vst [vmem:[%s199 + $0x28] sm:$0xff] %v210
                %v212 = vld [vmem:[%s198 + $0x90] sm:$0xff]
                %213 = vst [vmem:[%s199 + $0x30] sm:$0xff] %v212
                %v214 = vld [vmem:[%s198 + $0xa8] sm:$0xff]
                %215 = vst [vmem:[%s199 + $0x38] sm:$0xff] %v214
                %v216 = vld [vmem:[%s198 + $0xc0] sm:$0xff]
                %217 = vst [vmem:[%s199 + $0x40] sm:$0xff] %v216
                %v218 = vld [vmem:[%s198 + $0xd8] sm:$0xff]
                %219 = vst [vmem:[%s199 + $0x48] sm:$0xff] %v218
                %v220 = vld [vmem:[%s198 + $0xf0] sm:$0xff]
                %221 = vst [vmem:[%s199 + $0x50] sm:$0xff] %v220
                %v222 = vld [vmem:[%s198 + $0x108] sm:$0xff]
                %223 = vst [vmem:[%s199 + $0x58] sm:$0xff] %v222
                %v224 = vld [vmem:[%s198 + $0x120] sm:$0xff]
                %225 = vst [vmem:[%s199 + $0x60] sm:$0xff] %v224
                %v226 = vld [vmem:[%s198 + $0x138] sm:$0xff]
                %227 = vst [vmem:[%s199 + $0x68] sm:$0xff] %v226
                %v228 = vld [vmem:[%s198 + $0x150] sm:$0xff]
                %229 = vst [vmem:[%s199 + $0x70] sm:$0xff] %v228
                %v230 = vld [vmem:[%s198 + $0x168] sm:$0xff]
                %231 = vst [vmem:[%s199 + $0x78] sm:$0xff] %v230
                %v232 = vld [vmem:[%s198 + $0x180] sm:$0xff]
                %233 = vst [vmem:[%s199 + $0x80] sm:$0xff] %v232
                %v234 = vld [vmem:[%s198 + $0x198] sm:$0xff]
                %235 = vst [vmem:[%s199 + $0x88] sm:$0xff] %v234
                %v236 = vld [vmem:[%s198 + $0x1b0] sm:$0xff]
                %237 = vst [vmem:[%s199 + $0x90] sm:$0xff] %v236
                %v238 = vld [vmem:[%s198 + $0x1c8] sm:$0xff]
                %239 = vst [vmem:[%s199 + $0x98] sm:$0xff] %v238
                %v240 = vld [vmem:[%s198 + $0x1e0] sm:$0xff]
                %241 = vst [vmem:[%s199 + $0xa0] sm:$0xff] %v240
                %v242 = vld [vmem:[%s198 + $0x1f8] sm:$0xff]
                %243 = vst [vmem:[%s199 + $0xa8] sm:$0xff] %v242
                %v244 = vld [vmem:[%s198 + $0x210] sm:$0xff]
                %245 = vst [vmem:[%s199 + $0xb0] sm:$0xff] %v244
                %v246 = vld [vmem:[%s198 + $0x228] sm:$0xff]
                %247 = vst [vmem:[%s199 + $0xb8] sm:$0xff] %v246
                %v248 = vld [vmem:[%s198 + $0x240] sm:$0xff]
                %249 = vst [vmem:[%s199 + $0xc0] sm:$0xff] %v248
                %v250 = vld [vmem:[%s198 + $0x258] sm:$0xff]
                %251 = vst [vmem:[%s199 + $0xc8] sm:$0xff] %v250
                %v252 = vld [vmem:[%s198 + $0x270] sm:$0xff]
                %253 = vst [vmem:[%s199 + $0xd0] sm:$0xff] %v252
                %v254 = vld [vmem:[%s198 + $0x288] sm:$0xff]
                %255 = vst [vmem:[%s199 + $0xd8] sm:$0xff] %v254
                %v256 = vld [vmem:[%s198 + $0x2a0] sm:$0xff]
                %257 = vst [vmem:[%s199 + $0xe0] sm:$0xff] %v256
                %v258 = vld [vmem:[%s198 + $0x2b8] sm:$0xff]
                %259 = vst [vmem:[%s199 + $0xe8] sm:$0xff] %v258
                %v260 = vld [vmem:[%s198 + $0x2d0] sm:$0xff]
                %261 = vst [vmem:[%s199 + $0xf0] sm:$0xff] %v260
                %v262 = vld [vmem:[%s198 + $0x2e8] sm:$0xff]
                %263 = vst [vmem:[%s199 + $0xf8] sm:$0xff] %v262
              $region41: #{generator_forward.11} parent=35 // loop_footer
                %s197 = sadd.s32 1, %s193
              $region42: #{generator_forward.11} parent=35 // loop_footer_branch
                %192 = sbr.rel target = $region38
              $region43: #{generator_forward.11} parent=35 // loop_exit
                _
            $region36: #{generator_forward.11} parent=27 // pred_fallthru
              _
          $region28: #{generator_forward.11} parent=23 // pred_fallthru
            _
          %340 = vnop
        $region24: #{generator_forward.11} parent=19 // pred_fallthru
          _
        // Predicated region
        $region59: #{generator_forward.11} parent=19 // pred_check
          %p341 = pneg %p104
        $region60: #{generator_forward.11} parent=19 // pred_check_branch
          %343 = sbr.rel (%p341) target = $region62
        $region61: #{generator_forward.11} parent=19 // pred_region
          %s344 = smul.u32 2, %s17
          %p345 = scmp.lt.s32.totalorder %s344, 5
          %s346 = scalar_select %p345, %s344, 5
          %s347 = scalar_lea.vmem %s2, %s346
          %s348 = smul.u32 2, %s17
        $region62: #{generator_forward.11} parent=19 // pred_fallthru
          _
      $region20: #{generator_forward.11} parent=5 // pred_fallthru
        _
      %p349 = scmp.le.s32.totalorder 1, %s9
      %p350 = scmp.lt.s32.totalorder %s9, 4
      %p351 = pnand %p349, %p350
      %p352 = pneg %p351
      // Predicated region
      $region63: #{generator_forward.11} parent=5 // pred_check
        _
      $region64: #{generator_forward.11} parent=5 // pred_check_branch
        %354 = sbr.rel (%p351) target = $region66
      $region65: #{generator_forward.11} parent=5 // pred_region
        %s355 = ssub.s32 %s9, 1
        %s356 = sand.u32 %s71, 1
        %s357 = sand.u32 %s71, 1
        %s358 = smul.addr %s357, 256
        %s359 = scalar_lea.vmem [#allocation3], %s358
        // Predicated region
        $region67: #{generator_forward.11} parent=65 // pred_check
          %p360 = pneg %p84
        $region68: #{generator_forward.11} parent=65 // pred_check_branch
          %362 = sbr.rel (%p360) target = $region70
        $region69: #{generator_forward.11} parent=65 // pred_region
          _
        $region70: #{generator_forward.11} parent=65 // pred_fallthru
          _
        %s363 = smul.u32 16, %s19
        %s364 = smul.u32 2, %s21
        %p365 = scmp.lt.s32.totalorder %s363, 15
        %s366 = scalar_select %p365, %s363, 15
        %p367 = scmp.lt.s32.totalorder %s364, 1
        %s368 = scalar_select %p367, %s364, 1
        %s369 = smul.addr %s366, 2
        %s370 = sadd.s32 %s368, %s369
        %s371 = smul.addr %s370, 4
        %s372 = scalar_lea.vmem %s0, %s371
        %p373 = pneg %p56
        %p374 = pneg %p53
        %s375 = sand.u32 %s71, 1
        %s376 = sand.u32 %s71, 1
        %s377 = smul.addr %s376, 256
        %s378 = scalar_lea.vmem [#allocation3], %s377
        %p379 = pneg %p84
        %p380 = pneg %p81
        %s381 = smul.u32 2, %s20
        %p382 = scmp.lt.s32.totalorder %s381, 5
        %s383 = scalar_select %p382, %s381, 5
        %s384 = scalar_lea.vmem %s2, %s383
        %p385 = pneg %p110
        %p386 = pneg %p107
        %p387 = pneg %p138
        %p388 = pneg %p135
        %s389 = sand.u32 %s125, 1
        %s390 = sand.u32 %s125, 1
        %s391 = smul.addr %s390, 256
        %s392 = scalar_lea.vmem [#allocation4], %s391
        %s393 = smul.u32 16, %s19
        %s394 = smul.u32 2, %s21
        %p395 = scmp.lt.s32.totalorder %s393, 15
        %s396 = scalar_select %p395, %s393, 15
        %p397 = scmp.lt.s32.totalorder %s394, 1
        %s398 = scalar_select %p397, %s394, 1
        %s399 = smul.addr %s396, 2
        %s400 = sadd.s32 %s398, %s399
        %s401 = smul.addr %s400, 4
        %s402 = scalar_lea.vmem %s0, %s401
        %s403 = smul.u32 16, %s19
        %s404 = smul.u32 2, %s21
        %s405 = smul.u32 32, %s21
        %s406 = smul.u32 2, %s20
        %s407 = smul.u32 2, %s20
        %p408 = scmp.lt.s32.totalorder %s407, 5
        %s409 = scalar_select %p408, %s407, 5
        %s410 = scalar_lea.vmem %s2, %s409
        %s411 = smul.u32 2, %s20
        %s412 = smul.u32 16, %s19
        %s413 = smul.u32 2, %s20
        %p414 = scmp.eq.s32.totalorder %s21, 0
        // Predicated region
        $region71: #{generator_forward.11} parent=65 // pred_check
          %p415 = pneg %p414
        $region72: #{generator_forward.11} parent=65 // pred_check_branch
          %417 = sbr.rel (%p415) target = $region74
        $region73: #{generator_forward.11} parent=65 // pred_region
          %418 = vst [vmem:[#allocation2] sm:$0xff] 0.0
          %419 = vst [vmem:[#allocation2 + $0x8] sm:$0xff] 0.0
          %420 = vst [vmem:[#allocation2 + $0x10] sm:$0xff] 0.0
          %421 = vst [vmem:[#allocation2 + $0x18] sm:$0xff] 0.0
          %422 = vst [vmem:[#allocation2 + $0x20] sm:$0xff] 0.0
          %423 = vst [vmem:[#allocation2 + $0x28] sm:$0xff] 0.0
          %424 = vst [vmem:[#allocation2 + $0x30] sm:$0xff] 0.0
          %425 = vst [vmem:[#allocation2 + $0x38] sm:$0xff] 0.0
          %426 = vst [vmem:[#allocation2 + $0x40] sm:$0xff] 0.0
          %427 = vst [vmem:[#allocation2 + $0x48] sm:$0xff] 0.0
          %428 = vst [vmem:[#allocation2 + $0x50] sm:$0xff] 0.0
          %429 = vst [vmem:[#allocation2 + $0x58] sm:$0xff] 0.0
          %430 = vst [vmem:[#allocation2 + $0x60] sm:$0xff] 0.0
          %431 = vst [vmem:[#allocation2 + $0x68] sm:$0xff] 0.0
          %432 = vst [vmem:[#allocation2 + $0x70] sm:$0xff] 0.0
          %433 = vst [vmem:[#allocation2 + $0x78] sm:$0xff] 0.0
          %434 = vst [vmem:[#allocation2 + $0x80] sm:$0xff] 0.0
          %435 = vst [vmem:[#allocation2 + $0x88] sm:$0xff] 0.0
          %436 = vst [vmem:[#allocation2 + $0x90] sm:$0xff] 0.0
          %437 = vst [vmem:[#allocation2 + $0x98] sm:$0xff] 0.0
          %438 = vst [vmem:[#allocation2 + $0xa0] sm:$0xff] 0.0
          %439 = vst [vmem:[#allocation2 + $0xa8] sm:$0xff] 0.0
          %440 = vst [vmem:[#allocation2 + $0xb0] sm:$0xff] 0.0
          %441 = vst [vmem:[#allocation2 + $0xb8] sm:$0xff] 0.0
          %442 = vst [vmem:[#allocation2 + $0xc0] sm:$0xff] 0.0
          %443 = vst [vmem:[#allocation2 + $0xc8] sm:$0xff] 0.0
          %444 = vst [vmem:[#allocation2 + $0xd0] sm:$0xff] 0.0
          %445 = vst [vmem:[#allocation2 + $0xd8] sm:$0xff] 0.0
          %446 = vst [vmem:[#allocation2 + $0xe0] sm:$0xff] 0.0
          %447 = vst [vmem:[#allocation2 + $0xe8] sm:$0xff] 0.0
          %448 = vst [vmem:[#allocation2 + $0xf0] sm:$0xff] 0.0
          %449 = vst [vmem:[#allocation2 + $0xf8] sm:$0xff] 0.0
        $region74: #{generator_forward.11} parent=65 // pred_fallthru
          _
        %v450 = vld [vmem:[#allocation2] sm:$0xff]
        %v451 = vld [vmem:[#allocation2 + $0x8] sm:$0xff]
        %v452 = vld [vmem:[#allocation2 + $0x10] sm:$0xff]
        %v453 = vld [vmem:[#allocation2 + $0x18] sm:$0xff]
        %v454 = vld [vmem:[#allocation2 + $0x20] sm:$0xff]
        %v455 = vld [vmem:[#allocation2 + $0x28] sm:$0xff]
        %v456 = vld [vmem:[#allocation2 + $0x30] sm:$0xff]
        %v457 = vld [vmem:[#allocation2 + $0x38] sm:$0xff]
        %v458 = vld [vmem:[#allocation2 + $0x40] sm:$0xff]
        %v459 = vld [vmem:[#allocation2 + $0x48] sm:$0xff]
        %v460 = vld [vmem:[#allocation2 + $0x50] sm:$0xff]
        %v461 = vld [vmem:[#allocation2 + $0x58] sm:$0xff]
        %v462 = vld [vmem:[#allocation2 + $0x60] sm:$0xff]
        %v463 = vld [vmem:[#allocation2 + $0x68] sm:$0xff]
        %v464 = vld [vmem:[#allocation2 + $0x70] sm:$0xff]
        %v465 = vld [vmem:[#allocation2 + $0x78] sm:$0xff]
        %v466 = vld [vmem:[#allocation2 + $0x80] sm:$0xff]
        %v467 = vld [vmem:[#allocation2 + $0x88] sm:$0xff]
        %v468 = vld [vmem:[#allocation2 + $0x90] sm:$0xff]
        %v469 = vld [vmem:[#allocation2 + $0x98] sm:$0xff]
        %v470 = vld [vmem:[#allocation2 + $0xa0] sm:$0xff]
        %v471 = vld [vmem:[#allocation2 + $0xa8] sm:$0xff]
        %v472 = vld [vmem:[#allocation2 + $0xb0] sm:$0xff]
        %v473 = vld [vmem:[#allocation2 + $0xb8] sm:$0xff]
        %v474 = vld [vmem:[#allocation2 + $0xc0] sm:$0xff]
        %v475 = vld [vmem:[#allocation2 + $0xc8] sm:$0xff]
        %v476 = vld [vmem:[#allocation2 + $0xd0] sm:$0xff]
        %v477 = vld [vmem:[#allocation2 + $0xd8] sm:$0xff]
        %v478 = vld [vmem:[#allocation2 + $0xe0] sm:$0xff]
        %v479 = vld [vmem:[#allocation2 + $0xe8] sm:$0xff]
        %v480 = vld [vmem:[#allocation2 + $0xf0] sm:$0xff]
        %v481 = vld [vmem:[#allocation2 + $0xf8] sm:$0xff]
        %v482 = vld [vmem:[%s402] sm:$0xff]
        %v483 = vld [vmem:[%s402 + $0x8] sm:$0xff]
        %v484 = vld [vmem:[%s402 + $0x10] sm:$0xff]
        %v485 = vld [vmem:[%s402 + $0x18] sm:$0xff]
        %v486 = vld [vmem:[%s402 + $0x20] sm:$0xff]
        %v487 = vld [vmem:[%s402 + $0x28] sm:$0xff]
        %v488 = vld [vmem:[%s402 + $0x30] sm:$0xff]
        %v489 = vld [vmem:[%s402 + $0x38] sm:$0xff]
        %v490 = vld [vmem:[%s402 + $0x40] sm:$0xff]
        %v491 = vld [vmem:[%s402 + $0x48] sm:$0xff]
        %v492 = vld [vmem:[%s402 + $0x50] sm:$0xff]
        %v493 = vld [vmem:[%s402 + $0x58] sm:$0xff]
        %v494 = vld [vmem:[%s402 + $0x60] sm:$0xff]
        %v495 = vld [vmem:[%s402 + $0x68] sm:$0xff]
        %v496 = vld [vmem:[%s402 + $0x70] sm:$0xff]
        %v497 = vld [vmem:[%s402 + $0x78] sm:$0xff]
        %v498 = vld [vmem:[%s359] sm:$0xff]
        %v499 = vld [vmem:[%s359 + $0x8] sm:$0xff]
        %v500 = vld [vmem:[%s359 + $0x10] sm:$0xff]
        %v501 = vld [vmem:[%s359 + $0x18] sm:$0xff]
        %v502 = vld [vmem:[%s359 + $0x20] sm:$0xff]
        %v503 = vld [vmem:[%s359 + $0x28] sm:$0xff]
        %v504 = vld [vmem:[%s359 + $0x30] sm:$0xff]
        %v505 = vld [vmem:[%s359 + $0x38] sm:$0xff]
        %v506 = vld [vmem:[%s359 + $0x40] sm:$0xff]
        %v507 = vld [vmem:[%s359 + $0x48] sm:$0xff]
        %v508 = vld [vmem:[%s359 + $0x50] sm:$0xff]
        %v509 = vld [vmem:[%s359 + $0x58] sm:$0xff]
        %v510 = vld [vmem:[%s359 + $0x60] sm:$0xff]
        %v511 = vld [vmem:[%s359 + $0x68] sm:$0xff]
        %v512 = vld [vmem:[%s359 + $0x70] sm:$0xff]
        %v513 = vld [vmem:[%s359 + $0x78] sm:$0xff]
        %v514 = vld [vmem:[%s359 + $0x80] sm:$0xff]
        %v515 = vld [vmem:[%s359 + $0x88] sm:$0xff]
        %v516 = vld [vmem:[%s359 + $0x90] sm:$0xff]
        %v517 = vld [vmem:[%s359 + $0x98] sm:$0xff]
        %v518 = vld [vmem:[%s359 + $0xa0] sm:$0xff]
        %v519 = vld [vmem:[%s359 + $0xa8] sm:$0xff]
        %v520 = vld [vmem:[%s359 + $0xb0] sm:$0xff]
        %v521 = vld [vmem:[%s359 + $0xb8] sm:$0xff]
        %v522 = vld [vmem:[%s359 + $0xc0] sm:$0xff]
        %v523 = vld [vmem:[%s359 + $0xc8] sm:$0xff]
        %v524 = vld [vmem:[%s359 + $0xd0] sm:$0xff]
        %v525 = vld [vmem:[%s359 + $0xd8] sm:$0xff]
        %v526 = vld [vmem:[%s359 + $0xe0] sm:$0xff]
        %v527 = vld [vmem:[%s359 + $0xe8] sm:$0xff]
        %v528 = vld [vmem:[%s359 + $0xf0] sm:$0xff]
        %v529 = vld [vmem:[%s359 + $0xf8] sm:$0xff]
        %v546 = vunpack.c.l.b16 %v482
        %v547 = vunpack.c.h.b16 %v482
        %v548 = vunpack.c.l.b16 %v483
        %v549 = vunpack.c.h.b16 %v483
        %v550 = vunpack.c.l.b16 %v484
        %v551 = vunpack.c.h.b16 %v484
        %v552 = vunpack.c.l.b16 %v485
        %v553 = vunpack.c.h.b16 %v485
        %v554 = vunpack.c.l.b16 %v486
        %v555 = vunpack.c.h.b16 %v486
        %v556 = vunpack.c.l.b16 %v487
        %v557 = vunpack.c.h.b16 %v487
        %v558 = vunpack.c.l.b16 %v488
        %v559 = vunpack.c.h.b16 %v488
        %v560 = vunpack.c.l.b16 %v489
        %v561 = vunpack.c.h.b16 %v489
        %v562 = vunpack.c.l.b16 %v490
        %v563 = vunpack.c.h.b16 %v490
        %v564 = vunpack.c.l.b16 %v491
        %v565 = vunpack.c.h.b16 %v491
        %v566 = vunpack.c.l.b16 %v492
        %v567 = vunpack.c.h.b16 %v492
        %v568 = vunpack.c.l.b16 %v493
        %v569 = vunpack.c.h.b16 %v493
        %v570 = vunpack.c.l.b16 %v494
        %v571 = vunpack.c.h.b16 %v494
        %v572 = vunpack.c.l.b16 %v495
        %v573 = vunpack.c.h.b16 %v495
        %v574 = vunpack.c.l.b16 %v496
        %v575 = vunpack.c.h.b16 %v496
        %v576 = vunpack.c.l.b16 %v497
        %v577 = vunpack.c.h.b16 %v497
        %v578 = vpack.c.b16 %v548, %v546
        %v579 = vpack.c.b16 %v549, %v547
        %v580 = vpack.c.b16 %v552, %v550
        %v581 = vpack.c.b16 %v553, %v551
        %v582 = vpack.c.b16 %v556, %v554
        %v583 = vpack.c.b16 %v557, %v555
        %v584 = vpack.c.b16 %v560, %v558
        %v585 = vpack.c.b16 %v561, %v559
        %v586 = vpack.c.b16 %v564, %v562
        %v587 = vpack.c.b16 %v565, %v563
        %v588 = vpack.c.b16 %v568, %v566
        %v589 = vpack.c.b16 %v569, %v567
        %v590 = vpack.c.b16 %v572, %v570
        %v591 = vpack.c.b16 %v573, %v571
        %v592 = vpack.c.b16 %v576, %v574
        %v593 = vpack.c.b16 %v577, %v575
        %v642 = vunpack.c.l.b16 %v498
        %v643 = vunpack.c.h.b16 %v498
        %v644 = vunpack.c.l.b16 %v499
        %v645 = vunpack.c.h.b16 %v499
        %v646 = vunpack.c.l.b16 %v500
        %v647 = vunpack.c.h.b16 %v500
        %v648 = vunpack.c.l.b16 %v501
        %v649 = vunpack.c.h.b16 %v501
        %v650 = vunpack.c.l.b16 %v502
        %v651 = vunpack.c.h.b16 %v502
        %v652 = vunpack.c.l.b16 %v503
        %v653 = vunpack.c.h.b16 %v503
        %v654 = vunpack.c.l.b16 %v504
        %v655 = vunpack.c.h.b16 %v504
        %v656 = vunpack.c.l.b16 %v505
        %v657 = vunpack.c.h.b16 %v505
        %v658 = vunpack.c.l.b16 %v506
        %v659 = vunpack.c.h.b16 %v506
        %v660 = vunpack.c.l.b16 %v507
        %v661 = vunpack.c.h.b16 %v507
        %v662 = vunpack.c.l.b16 %v508
        %v663 = vunpack.c.h.b16 %v508
        %v664 = vunpack.c.l.b16 %v509
        %v665 = vunpack.c.h.b16 %v509
        %v666 = vunpack.c.l.b16 %v510
        %v667 = vunpack.c.h.b16 %v510
        %v668 = vunpack.c.l.b16 %v511
        %v669 = vunpack.c.h.b16 %v511
        %v670 = vunpack.c.l.b16 %v512
        %v671 = vunpack.c.h.b16 %v512
        %v672 = vunpack.c.l.b16 %v513
        %v673 = vunpack.c.h.b16 %v513
        %v674 = vunpack.c.l.b16 %v514
        %v675 = vunpack.c.h.b16 %v514
        %v676 = vunpack.c.l.b16 %v515
        %v677 = vunpack.c.h.b16 %v515
        %v678 = vunpack.c.l.b16 %v516
        %v679 = vunpack.c.h.b16 %v516
        %v680 = vunpack.c.l.b16 %v517
        %v681 = vunpack.c.h.b16 %v517
        %v682 = vunpack.c.l.b16 %v518
        %v683 = vunpack.c.h.b16 %v518
        %v684 = vunpack.c.l.b16 %v519
        %v685 = vunpack.c.h.b16 %v519
        %v686 = vunpack.c.l.b16 %v520
        %v687 = vunpack.c.h.b16 %v520
        %v688 = vunpack.c.l.b16 %v521
        %v689 = vunpack.c.h.b16 %v521
        %v690 = vunpack.c.l.b16 %v522
        %v691 = vunpack.c.h.b16 %v522
        %v692 = vunpack.c.l.b16 %v523
        %v693 = vunpack.c.h.b16 %v523
        %v694 = vunpack.c.l.b16 %v524
        %v695 = vunpack.c.h.b16 %v524
        %v696 = vunpack.c.l.b16 %v525
        %v697 = vunpack.c.h.b16 %v525
        %v698 = vunpack.c.l.b16 %v526
        %v699 = vunpack.c.h.b16 %v526
        %v700 = vunpack.c.l.b16 %v527
        %v701 = vunpack.c.h.b16 %v527
        %v702 = vunpack.c.l.b16 %v528
        %v703 = vunpack.c.h.b16 %v528
        %v704 = vunpack.c.l.b16 %v529
        %v705 = vunpack.c.h.b16 %v529
        %v706 = vpack.c.b16 %v644, %v642
        %v707 = vpack.c.b16 %v645, %v643
        %v708 = vpack.c.b16 %v648, %v646
        %v709 = vpack.c.b16 %v649, %v647
        %v710 = vpack.c.b16 %v652, %v650
        %v711 = vpack.c.b16 %v653, %v651
        %v712 = vpack.c.b16 %v656, %v654
        %v713 = vpack.c.b16 %v657, %v655
        %v714 = vpack.c.b16 %v660, %v658
        %v715 = vpack.c.b16 %v661, %v659
        %v716 = vpack.c.b16 %v664, %v662
        %v717 = vpack.c.b16 %v665, %v663
        %v718 = vpack.c.b16 %v668, %v666
        %v719 = vpack.c.b16 %v669, %v667
        %v720 = vpack.c.b16 %v672, %v670
        %v721 = vpack.c.b16 %v673, %v671
        %v722 = vpack.c.b16 %v676, %v674
        %v723 = vpack.c.b16 %v677, %v675
        %v724 = vpack.c.b16 %v680, %v678
        %v725 = vpack.c.b16 %v681, %v679
        %v726 = vpack.c.b16 %v684, %v682
        %v727 = vpack.c.b16 %v685, %v683
        %v728 = vpack.c.b16 %v688, %v686
        %v729 = vpack.c.b16 %v689, %v687
        %v730 = vpack.c.b16 %v692, %v690
        %v731 = vpack.c.b16 %v693, %v691
        %v732 = vpack.c.b16 %v696, %v694
        %v733 = vpack.c.b16 %v697, %v695
        %v734 = vpack.c.b16 %v700, %v698
        %v735 = vpack.c.b16 %v701, %v699
        %v736 = vpack.c.b16 %v704, %v702
        %v737 = vpack.c.b16 %v705, %v703
        %770 = vmatprep.subr.bf16.mxu0 %v707
        %771 = vmatpush1.bf16.msra.mxu0 %v706
        %772 = vmatprep.subr.bf16.mxu0 %v709
        %773 = vmatpush1.bf16.msra.mxu0 %v708
        %774 = vmatprep.subr.bf16.mxu0 %v711
        %775 = vmatpush1.bf16.msra.mxu0 %v710
        %776 = vmatprep.subr.bf16.mxu0 %v713
        %777 = vmatpush1.bf16.msra.mxu0 %v712
        %778 = vmatprep.subr.bf16.mxu0 %v715
        %779 = vmatpush1.bf16.msra.mxu0 %v714
        %780 = vmatprep.subr.bf16.mxu0 %v717
        %781 = vmatpush1.bf16.msra.mxu0 %v716
        %782 = vmatprep.subr.bf16.mxu0 %v719
        %783 = vmatpush1.bf16.msra.mxu0 %v718
        %784 = vmatprep.subr.bf16.mxu0 %v721
        %785 = vmatpush1.bf16.msra.mxu0 %v720
        %786 = vmatprep.subr.bf16.mxu0 %v723
        %787 = vmatpush1.bf16.msra.mxu0 %v722
        %788 = vmatprep.subr.bf16.mxu0 %v725
        %789 = vmatpush1.bf16.msra.mxu0 %v724
        %790 = vmatprep.subr.bf16.mxu0 %v727
        %791 = vmatpush1.bf16.msra.mxu0 %v726
        %792 = vmatprep.subr.bf16.mxu0 %v729
        %793 = vmatpush1.bf16.msra.mxu0 %v728
        %794 = vmatprep.subr.bf16.mxu0 %v731
        %795 = vmatpush1.bf16.msra.mxu0 %v730
        %796 = vmatprep.subr.bf16.mxu0 %v733
        %797 = vmatpush1.bf16.msra.mxu0 %v732
        %798 = vmatprep.subr.bf16.mxu0 %v735
        %799 = vmatpush1.bf16.msra.mxu0 %v734
        %800 = vmatprep.subr.bf16.mxu0 %v737
        %801 = vmatpush1.bf16.msra.mxu0 %v736
        %802 = vmatprep.mubr.bf16.mxu0 %v579
        %803 = vmatmul.mubr.bf16.gmra.mrb[0].mxu0 %v578
        %v804 = vpop.f32.mrb[0].mxu0
        %v805 = vadd.f32 0.0, %v804
        %v806 = vpop.f32.mrb[0].mxu0
        %v807 = vadd.f32 0.0, %v806
        %v808 = vpop.f32.mrb[0].mxu0
        %v809 = vadd.f32 0.0, %v808
        %v810 = vpop.f32.mrb[0].mxu0
        %v811 = vadd.f32 0.0, %v810
        %812 = vmatprep.mubr.bf16.mxu0 %v581
        %813 = vmatmul.mubr.bf16.gmra.mrb[0].mxu0 %v580
        %v814 = vpop.f32.mrb[0].mxu0
        %v815 = vadd.f32 0.0, %v814
        %v816 = vpop.f32.mrb[0].mxu0
        %v817 = vadd.f32 0.0, %v816
        %v818 = vpop.f32.mrb[0].mxu0
        %v819 = vadd.f32 0.0, %v818
        %v820 = vpop.f32.mrb[0].mxu0
        %v821 = vadd.f32 0.0, %v820
        %822 = vmatprep.mubr.bf16.mxu0 %v583
        %823 = vmatmul.mubr.bf16.gmra.mrb[0].mxu0 %v582
        %v824 = vpop.f32.mrb[0].mxu0
        %v825 = vadd.f32 0.0, %v824
        %v826 = vpop.f32.mrb[0].mxu0
        %v827 = vadd.f32 0.0, %v826
        %v828 = vpop.f32.mrb[0].mxu0
        %v829 = vadd.f32 0.0, %v828
        %v830 = vpop.f32.mrb[0].mxu0
        %v831 = vadd.f32 0.0, %v830
        %832 = vmatprep.mubr.bf16.mxu0 %v585
        %833 = vmatmul.mubr.bf16.gmra.mrb[0].mxu0 %v584
        %v834 = vpop.f32.mrb[0].mxu0
        %v835 = vadd.f32 0.0, %v834
        %v836 = vpop.f32.mrb[0].mxu0
        %v837 = vadd.f32 0.0, %v836
        %v838 = vpop.f32.mrb[0].mxu0
        %v839 = vadd.f32 0.0, %v838
        %v840 = vpop.f32.mrb[0].mxu0
        %v841 = vadd.f32 0.0, %v840
        %842 = vmatprep.mubr.bf16.mxu0 %v587
        %843 = vmatmul.mubr.bf16.gmra.mrb[0].mxu0 %v586
        %v844 = vpop.f32.mrb[0].mxu0
        %v845 = vadd.f32 0.0, %v844
        %v846 = vpop.f32.mrb[0].mxu0
        %v847 = vadd.f32 0.0, %v846
        %v848 = vpop.f32.mrb[0].mxu0
        %v849 = vadd.f32 0.0, %v848
        %v850 = vpop.f32.mrb[0].mxu0
        %v851 = vadd.f32 0.0, %v850
        %852 = vmatprep.mubr.bf16.mxu0 %v589
        %853 = vmatmul.mubr.bf16.gmra.mrb[0].mxu0 %v588
        %v854 = vpop.f32.mrb[0].mxu0
        %v855 = vadd.f32 0.0, %v854
        %v856 = vpop.f32.mrb[0].mxu0
        %v857 = vadd.f32 0.0, %v856
        %v858 = vpop.f32.mrb[0].mxu0
        %v859 = vadd.f32 0.0, %v858
        %v860 = vpop.f32.mrb[0].mxu0
        %v861 = vadd.f32 0.0, %v860
        %862 = vmatprep.mubr.bf16.mxu0 %v591
        %863 = vmatmul.mubr.bf16.gmra.mrb[0].mxu0 %v590
        %v864 = vpop.f32.mrb[0].mxu0
        %v865 = vadd.f32 0.0, %v864
        %v866 = vpop.f32.mrb[0].mxu0
        %v867 = vadd.f32 0.0, %v866
        %v868 = vpop.f32.mrb[0].mxu0
        %v869 = vadd.f32 0.0, %v868
        %v870 = vpop.f32.mrb[0].mxu0
        %v871 = vadd.f32 0.0, %v870
        %872 = vmatprep.mubr.bf16.mxu0 %v593
        %873 = vmatmul.mubr.bf16.gmra.mrb[0].mxu0 %v592
        %v874 = vpop.f32.mrb[0].mxu0
        %v875 = vadd.f32 0.0, %v874
        %v876 = vpop.f32.mrb[0].mxu0
        %v877 = vadd.f32 0.0, %v876
        %v878 = vpop.f32.mrb[0].mxu0
        %v879 = vadd.f32 0.0, %v878
        %v880 = vpop.f32.mrb[0].mxu0
        %v881 = vadd.f32 0.0, %v880
        %882 = vdwg.mxu0
        %v883 = vadd.f32 %v450, %v805
        %v884 = vadd.f32 %v451, %v807
        %v885 = vadd.f32 %v452, %v809
        %v886 = vadd.f32 %v453, %v811
        %v887 = vadd.f32 %v454, %v815
        %v888 = vadd.f32 %v455, %v817
        %v889 = vadd.f32 %v456, %v819
        %v890 = vadd.f32 %v457, %v821
        %v891 = vadd.f32 %v458, %v825
        %v892 = vadd.f32 %v459, %v827
        %v893 = vadd.f32 %v460, %v829
        %v894 = vadd.f32 %v461, %v831
        %v895 = vadd.f32 %v462, %v835
        %v896 = vadd.f32 %v463, %v837
        %v897 = vadd.f32 %v464, %v839
        %v898 = vadd.f32 %v465, %v841
        %v899 = vadd.f32 %v466, %v845
        %v900 = vadd.f32 %v467, %v847
        %v901 = vadd.f32 %v468, %v849
        %v902 = vadd.f32 %v469, %v851
        %v903 = vadd.f32 %v470, %v855
        %v904 = vadd.f32 %v471, %v857
        %v905 = vadd.f32 %v472, %v859
        %v906 = vadd.f32 %v473, %v861
        %v907 = vadd.f32 %v474, %v865
        %v908 = vadd.f32 %v475, %v867
        %v909 = vadd.f32 %v476, %v869
        %v910 = vadd.f32 %v477, %v871
        %v911 = vadd.f32 %v478, %v875
        %v912 = vadd.f32 %v479, %v877
        %v913 = vadd.f32 %v480, %v879
        %v914 = vadd.f32 %v481, %v881
        %915 = vst [vmem:[#allocation2] sm:$0xff] %v883
        %916 = vst [vmem:[#allocation2 + $0x8] sm:$0xff] %v884
        %917 = vst [vmem:[#allocation2 + $0x10] sm:$0xff] %v885
        %918 = vst [vmem:[#allocation2 + $0x18] sm:$0xff] %v886
        %919 = vst [vmem:[#allocation2 + $0x20] sm:$0xff] %v887
        %920 = vst [vmem:[#allocation2 + $0x28] sm:$0xff] %v888
        %921 = vst [vmem:[#allocation2 + $0x30] sm:$0xff] %v889
        %922 = vst [vmem:[#allocation2 + $0x38] sm:$0xff] %v890
        %923 = vst [vmem:[#allocation2 + $0x40] sm:$0xff] %v891
        %924 = vst [vmem:[#allocation2 + $0x48] sm:$0xff] %v892
        %925 = vst [vmem:[#allocation2 + $0x50] sm:$0xff] %v893
        %926 = vst [vmem:[#allocation2 + $0x58] sm:$0xff] %v894
        %927 = vst [vmem:[#allocation2 + $0x60] sm:$0xff] %v895
        %928 = vst [vmem:[#allocation2 + $0x68] sm:$0xff] %v896
        %929 = vst [vmem:[#allocation2 + $0x70] sm:$0xff] %v897
        %930 = vst [vmem:[#allocation2 + $0x78] sm:$0xff] %v898
        %931 = vst [vmem:[#allocation2 + $0x80] sm:$0xff] %v899
        %932 = vst [vmem:[#allocation2 + $0x88] sm:$0xff] %v900
        %933 = vst [vmem:[#allocation2 + $0x90] sm:$0xff] %v901
        %934 = vst [vmem:[#allocation2 + $0x98] sm:$0xff] %v902
        %935 = vst [vmem:[#allocation2 + $0xa0] sm:$0xff] %v903
        %936 = vst [vmem:[#allocation2 + $0xa8] sm:$0xff] %v904
        %937 = vst [vmem:[#allocation2 + $0xb0] sm:$0xff] %v905
        %938 = vst [vmem:[#allocation2 + $0xb8] sm:$0xff] %v906
        %939 = vst [vmem:[#allocation2 + $0xc0] sm:$0xff] %v907
        %940 = vst [vmem:[#allocation2 + $0xc8] sm:$0xff] %v908
        %941 = vst [vmem:[#allocation2 + $0xd0] sm:$0xff] %v909
        %942 = vst [vmem:[#allocation2 + $0xd8] sm:$0xff] %v910
        %943 = vst [vmem:[#allocation2 + $0xe0] sm:$0xff] %v911
        %944 = vst [vmem:[#allocation2 + $0xe8] sm:$0xff] %v912
        %945 = vst [vmem:[#allocation2 + $0xf0] sm:$0xff] %v913
        %946 = vst [vmem:[#allocation2 + $0xf8] sm:$0xff] %v914
        // Predicated region
        $region75: #{generator_forward.11} parent=65 // pred_check
          %p947 = pneg %p414
        $region76: #{generator_forward.11} parent=65 // pred_check_branch
          %949 = sbr.rel (%p947) target = $region78
        $region77: #{generator_forward.11} parent=65 // pred_region
          %v950 = vld [vmem:[#allocation2] sm:$0xff]
          %v951 = vld [vmem:[#allocation2 + $0x8] sm:$0xff]
          %v952 = vld [vmem:[#allocation2 + $0x10] sm:$0xff]
          %v953 = vld [vmem:[#allocation2 + $0x18] sm:$0xff]
          %v954 = vld [vmem:[#allocation2 + $0x20] sm:$0xff]
          %v955 = vld [vmem:[#allocation2 + $0x28] sm:$0xff]
          %v956 = vld [vmem:[#allocation2 + $0x30] sm:$0xff]
          %v957 = vld [vmem:[#allocation2 + $0x38] sm:$0xff]
          %v958 = vld [vmem:[#allocation2 + $0x40] sm:$0xff]
          %v959 = vld [vmem:[#allocation2 + $0x48] sm:$0xff]
          %v960 = vld [vmem:[#allocation2 + $0x50] sm:$0xff]
          %v961 = vld [vmem:[#allocation2 + $0x58] sm:$0xff]
          %v962 = vld [vmem:[#allocation2 + $0x60] sm:$0xff]
          %v963 = vld [vmem:[#allocation2 + $0x68] sm:$0xff]
          %v964 = vld [vmem:[#allocation2 + $0x70] sm:$0xff]
          %v965 = vld [vmem:[#allocation2 + $0x78] sm:$0xff]
          %v966 = vld [vmem:[#allocation2 + $0x80] sm:$0xff]
          %v967 = vld [vmem:[#allocation2 + $0x88] sm:$0xff]
          %v968 = vld [vmem:[#allocation2 + $0x90] sm:$0xff]
          %v969 = vld [vmem:[#allocation2 + $0x98] sm:$0xff]
          %v970 = vld [vmem:[#allocation2 + $0xa0] sm:$0xff]
          %v971 = vld [vmem:[#allocation2 + $0xa8] sm:$0xff]
          %v972 = vld [vmem:[#allocation2 + $0xb0] sm:$0xff]
          %v973 = vld [vmem:[#allocation2 + $0xb8] sm:$0xff]
          %v974 = vld [vmem:[#allocation2 + $0xc0] sm:$0xff]
          %v975 = vld [vmem:[#allocation2 + $0xc8] sm:$0xff]
          %v976 = vld [vmem:[#allocation2 + $0xd0] sm:$0xff]
          %v977 = vld [vmem:[#allocation2 + $0xd8] sm:$0xff]
          %v978 = vld [vmem:[#allocation2 + $0xe0] sm:$0xff]
          %v979 = vld [vmem:[#allocation2 + $0xe8] sm:$0xff]
          %v980 = vld [vmem:[#allocation2 + $0xf0] sm:$0xff]
          %v981 = vld [vmem:[#allocation2 + $0xf8] sm:$0xff]
          %v982 = vld [vmem:[%s410] sm:$0x3]
          %v984 = vlaneseq
          %v985 = vshrl.u32 %v984, 7
          %v986 = vsub.s32 0, %v985
          %v987 = vrot.slane %v982, %v986
          %v988 = vlaneseq
          %v989 = vshrl.u32 %v988, 7
          %v990 = vsub.s32 1, %v989
          %v991 = vrot.slane %v982, %v990
          %v994 = vadd.f32 %v950, %v987
          %v995 = vadd.f32 %v951, %v991
          %v996 = vadd.f32 %v952, %v987
          %v997 = vadd.f32 %v953, %v991
          %v998 = vadd.f32 %v954, %v987
          %v999 = vadd.f32 %v955, %v991
          %v1000 = vadd.f32 %v956, %v987
          %v1001 = vadd.f32 %v957, %v991
          %v1002 = vadd.f32 %v958, %v987
          %v1003 = vadd.f32 %v959, %v991
          %v1004 = vadd.f32 %v960, %v987
          %v1005 = vadd.f32 %v961, %v991
          %v1006 = vadd.f32 %v962, %v987
          %v1007 = vadd.f32 %v963, %v991
          %v1008 = vadd.f32 %v964, %v987
          %v1009 = vadd.f32 %v965, %v991
          %v1010 = vadd.f32 %v966, %v987
          %v1011 = vadd.f32 %v967, %v991
          %v1012 = vadd.f32 %v968, %v987
          %v1013 = vadd.f32 %v969, %v991
          %v1014 = vadd.f32 %v970, %v987
          %v1015 = vadd.f32 %v971, %v991
          %v1016 = vadd.f32 %v972, %v987
          %v1017 = vadd.f32 %v973, %v991
          %v1018 = vadd.f32 %v974, %v987
          %v1019 = vadd.f32 %v975, %v991
          %v1020 = vadd.f32 %v976, %v987
          %v1021 = vadd.f32 %v977, %v991
          %v1022 = vadd.f32 %v978, %v987
          %v1023 = vadd.f32 %v979, %v991
          %v1024 = vadd.f32 %v980, %v987
          %v1025 = vadd.f32 %v981, %v991
          %1026 = vst [vmem:[%s392] sm:$0xff] %v994
          %1027 = vst [vmem:[%s392 + $0x8] sm:$0xff] %v995
          %1028 = vst [vmem:[%s392 + $0x10] sm:$0xff] %v996
          %1029 = vst [vmem:[%s392 + $0x18] sm:$0xff] %v997
          %1030 = vst [vmem:[%s392 + $0x20] sm:$0xff] %v998
          %1031 = vst [vmem:[%s392 + $0x28] sm:$0xff] %v999
          %1032 = vst [vmem:[%s392 + $0x30] sm:$0xff] %v1000
          %1033 = vst [vmem:[%s392 + $0x38] sm:$0xff] %v1001
          %1034 = vst [vmem:[%s392 + $0x40] sm:$0xff] %v1002
          %1035 = vst [vmem:[%s392 + $0x48] sm:$0xff] %v1003
          %1036 = vst [vmem:[%s392 + $0x50] sm:$0xff] %v1004
          %1037 = vst [vmem:[%s392 + $0x58] sm:$0xff] %v1005
          %1038 = vst [vmem:[%s392 + $0x60] sm:$0xff] %v1006
          %1039 = vst [vmem:[%s392 + $0x68] sm:$0xff] %v1007
          %1040 = vst [vmem:[%s392 + $0x70] sm:$0xff] %v1008
          %1041 = vst [vmem:[%s392 + $0x78] sm:$0xff] %v1009
          %1042 = vst [vmem:[%s392 + $0x80] sm:$0xff] %v1010
          %1043 = vst [vmem:[%s392 + $0x88] sm:$0xff] %v1011
          %1044 = vst [vmem:[%s392 + $0x90] sm:$0xff] %v1012
          %1045 = vst [vmem:[%s392 + $0x98] sm:$0xff] %v1013
          %1046 = vst [vmem:[%s392 + $0xa0] sm:$0xff] %v1014
          %1047 = vst [vmem:[%s392 + $0xa8] sm:$0xff] %v1015
          %1048 = vst [vmem:[%s392 + $0xb0] sm:$0xff] %v1016
          %1049 = vst [vmem:[%s392 + $0xb8] sm:$0xff] %v1017
          %1050 = vst [vmem:[%s392 + $0xc0] sm:$0xff] %v1018
          %1051 = vst [vmem:[%s392 + $0xc8] sm:$0xff] %v1019
          %1052 = vst [vmem:[%s392 + $0xd0] sm:$0xff] %v1020
          %1053 = vst [vmem:[%s392 + $0xd8] sm:$0xff] %v1021
          %1054 = vst [vmem:[%s392 + $0xe0] sm:$0xff] %v1022
          %1055 = vst [vmem:[%s392 + $0xe8] sm:$0xff] %v1023
          %1056 = vst [vmem:[%s392 + $0xf0] sm:$0xff] %v1024
          %1057 = vst [vmem:[%s392 + $0xf8] sm:$0xff] %v1025
        $region78: #{generator_forward.11} parent=65 // pred_fallthru
          _
        %s1058 = sand.u32 %s125, 1
        %s1059 = sand.u32 %s125, 1
        %s1060 = smul.addr %s1059, 256
        %s1061 = scalar_lea.vmem [#allocation4], %s1060
        // Predicated region
        $region79: #{generator_forward.11} parent=65 // pred_check
          %p1062 = pneg %p135
        $region80: #{generator_forward.11} parent=65 // pred_check_branch
          %1064 = sbr.rel (%p1062) target = $region82
        $region81: #{generator_forward.11} parent=65 // pred_region
          %s1065 = smul.u32 16, %s19
          %s1066 = smul.u32 2, %s20
          %s1067 = smul.addr %s1065, 6
          %s1068 = sadd.s32 %s1066, %s1067
          %s1069 = smul.addr %s1068, 8
          %s1070 = scalar_lea.vmem %s3, %s1069
          // Predicated region
          $region83: #{generator_forward.11} parent=81 // pred_check
            _
          $region84: #{generator_forward.11} parent=81 // pred_check_branch
            %1072 = sbr.rel (0) target = $region86
          $region85: #{generator_forward.11} parent=81 // pred_region
            // Predicated region
            $region87: #{generator_forward.11} parent=85 // pred_check
              _
            $region88: #{generator_forward.11} parent=85 // pred_check_branch
              %1074 = sbr.rel (0) target = $region90
            $region89: #{generator_forward.11} parent=85 // pred_region
              loop: start=0, step=1, limit=1
              $region91: #{generator_forward.11} parent=89 // loop_pre_header
                _
              $region92: #{generator_forward.11} parent=89 // loop_header
                %s1076 = sphi 0, %s1080
                %p1077 = scmp.ge.s32.totalorder %s1076, 1
                %s1081 = sphi %s1061, %s1061
                %s1082 = sphi %s1070, %s1070
              $region93: #{generator_forward.11} parent=89 // loop_header_branch
                %1079 = sbr.rel (%p1077) target = $region97
              $region94: #{generator_forward.11} parent=89 // loop_body
                %v1083 = vld [vmem:[%s1081] sm:$0xff]
                %1084 = vst [vmem:[%s1082] sm:$0xff] %v1083
                %v1085 = vld [vmem:[%s1081 + $0x8] sm:$0xff]
                %1086 = vst [vmem:[%s1082 + $0x8] sm:$0xff] %v1085
                %v1087 = vld [vmem:[%s1081 + $0x10] sm:$0xff]
                %1088 = vst [vmem:[%s1082 + $0x30] sm:$0xff] %v1087
                %v1089 = vld [vmem:[%s1081 + $0x18] sm:$0xff]
                %1090 = vst [vmem:[%s1082 + $0x38] sm:$0xff] %v1089
                %v1091 = vld [vmem:[%s1081 + $0x20] sm:$0xff]
                %1092 = vst [vmem:[%s1082 + $0x60] sm:$0xff] %v1091
                %v1093 = vld [vmem:[%s1081 + $0x28] sm:$0xff]
                %1094 = vst [vmem:[%s1082 + $0x68] sm:$0xff] %v1093
                %v1095 = vld [vmem:[%s1081 + $0x30] sm:$0xff]
                %1096 = vst [vmem:[%s1082 + $0x90] sm:$0xff] %v1095
                %v1097 = vld [vmem:[%s1081 + $0x38] sm:$0xff]
                %1098 = vst [vmem:[%s1082 + $0x98] sm:$0xff] %v1097
                %v1099 = vld [vmem:[%s1081 + $0x40] sm:$0xff]
                %1100 = vst [vmem:[%s1082 + $0xc0] sm:$0xff] %v1099
                %v1101 = vld [vmem:[%s1081 + $0x48] sm:$0xff]
                %1102 = vst [vmem:[%s1082 + $0xc8] sm:$0xff] %v1101
                %v1103 = vld [vmem:[%s1081 + $0x50] sm:$0xff]
                %1104 = vst [vmem:[%s1082 + $0xf0] sm:$0xff] %v1103
                %v1105 = vld [vmem:[%s1081 + $0x58] sm:$0xff]
                %1106 = vst [vmem:[%s1082 + $0xf8] sm:$0xff] %v1105
                %v1107 = vld [vmem:[%s1081 + $0x60] sm:$0xff]
                %1108 = vst [vmem:[%s1082 + $0x120] sm:$0xff] %v1107
                %v1109 = vld [vmem:[%s1081 + $0x68] sm:$0xff]
                %1110 = vst [vmem:[%s1082 + $0x128] sm:$0xff] %v1109
                %v1111 = vld [vmem:[%s1081 + $0x70] sm:$0xff]
                %1112 = vst [vmem:[%s1082 + $0x150] sm:$0xff] %v1111
                %v1113 = vld [vmem:[%s1081 + $0x78] sm:$0xff]
                %1114 = vst [vmem:[%s1082 + $0x158] sm:$0xff] %v1113
                %v1115 = vld [vmem:[%s1081 + $0x80] sm:$0xff]
                %1116 = vst [vmem:[%s1082 + $0x180] sm:$0xff] %v1115
                %v1117 = vld [vmem:[%s1081 + $0x88] sm:$0xff]
                %1118 = vst [vmem:[%s1082 + $0x188] sm:$0xff] %v1117
                %v1119 = vld [vmem:[%s1081 + $0x90] sm:$0xff]
                %1120 = vst [vmem:[%s1082 + $0x1b0] sm:$0xff] %v1119
                %v1121 = vld [vmem:[%s1081 + $0x98] sm:$0xff]
                %1122 = vst [vmem:[%s1082 + $0x1b8] sm:$0xff] %v1121
                %v1123 = vld [vmem:[%s1081 + $0xa0] sm:$0xff]
                %1124 = vst [vmem:[%s1082 + $0x1e0] sm:$0xff] %v1123
                %v1125 = vld [vmem:[%s1081 + $0xa8] sm:$0xff]
                %1126 = vst [vmem:[%s1082 + $0x1e8] sm:$0xff] %v1125
                %v1127 = vld [vmem:[%s1081 + $0xb0] sm:$0xff]
                %1128 = vst [vmem:[%s1082 + $0x210] sm:$0xff] %v1127
                %v1129 = vld [vmem:[%s1081 + $0xb8] sm:$0xff]
                %1130 = vst [vmem:[%s1082 + $0x218] sm:$0xff] %v1129
                %v1131 = vld [vmem:[%s1081 + $0xc0] sm:$0xff]
                %1132 = vst [vmem:[%s1082 + $0x240] sm:$0xff] %v1131
                %v1133 = vld [vmem:[%s1081 + $0xc8] sm:$0xff]
                %1134 = vst [vmem:[%s1082 + $0x248] sm:$0xff] %v1133
                %v1135 = vld [vmem:[%s1081 + $0xd0] sm:$0xff]
                %1136 = vst [vmem:[%s1082 + $0x270] sm:$0xff] %v1135
                %v1137 = vld [vmem:[%s1081 + $0xd8] sm:$0xff]
                %1138 = vst [vmem:[%s1082 + $0x278] sm:$0xff] %v1137
                %v1139 = vld [vmem:[%s1081 + $0xe0] sm:$0xff]
                %1140 = vst [vmem:[%s1082 + $0x2a0] sm:$0xff] %v1139
                %v1141 = vld [vmem:[%s1081 + $0xe8] sm:$0xff]
                %1142 = vst [vmem:[%s1082 + $0x2a8] sm:$0xff] %v1141
                %v1143 = vld [vmem:[%s1081 + $0xf0] sm:$0xff]
                %1144 = vst [vmem:[%s1082 + $0x2d0] sm:$0xff] %v1143
                %v1145 = vld [vmem:[%s1081 + $0xf8] sm:$0xff]
                %1146 = vst [vmem:[%s1082 + $0x2d8] sm:$0xff] %v1145
              $region95: #{generator_forward.11} parent=89 // loop_footer
                %s1080 = sadd.s32 1, %s1076
              $region96: #{generator_forward.11} parent=89 // loop_footer_branch
                %1075 = sbr.rel target = $region92
              $region97: #{generator_forward.11} parent=89 // loop_exit
                _
            $region90: #{generator_forward.11} parent=85 // pred_fallthru
              _
            // Predicated region
            $region98: #{generator_forward.11} parent=85 // pred_check
              _
            $region99: #{generator_forward.11} parent=85 // pred_check_branch
              %1148 = sbr.rel target = $region101
            $region100: #{generator_forward.11} parent=85 // pred_region
              _
            $region101: #{generator_forward.11} parent=85 // pred_fallthru
              _
          $region86: #{generator_forward.11} parent=81 // pred_fallthru
            _
          %1149 = vnop
        $region82: #{generator_forward.11} parent=65 // pred_fallthru
          _
      $region66: #{generator_forward.11} parent=5 // pred_fallthru
        _
      %p1150 = scmp.le.s32.totalorder 2, %s9
      // Predicated region
      $region102: #{generator_forward.11} parent=5 // pred_check
        %p1151 = pneg %p1150
      $region103: #{generator_forward.11} parent=5 // pred_check_branch
        %1153 = sbr.rel (%p1151) target = $region105
      $region104: #{generator_forward.11} parent=5 // pred_region
        %s1154 = ssub.s32 %s9, 2
        // Predicated region
        $region106: #{generator_forward.11} parent=104 // pred_check
          %p1155 = pneg %p141
        $region107: #{generator_forward.11} parent=104 // pred_check_branch
          %1157 = sbr.rel (%p1155) target = $region109
        $region108: #{generator_forward.11} parent=104 // pred_region
          %s1158 = sand.u32 %s126, 1
          %s1159 = sand.u32 %s126, 1
          %s1160 = smul.addr %s1159, 256
          %s1161 = scalar_lea.vmem [#allocation4], %s1160
        $region109: #{generator_forward.11} parent=104 // pred_fallthru
          _
      $region105: #{generator_forward.11} parent=5 // pred_fallthru
        _
    $region6: #{generator_forward.11} parent=1 // loop_footer
      %s13 = sadd.s32 1, %s9
    $region7: #{generator_forward.11} parent=1 // loop_footer_branch
      %8 = sbr.rel target = $region3
    $region8: #{generator_forward.11} parent=1 // loop_exit
      _

// kernel: generator_forward.10
$region0: #{generator_forward.10}
  #allocation0 [shape = 'u32[]', space=smem, size = 0x4, offset = 0x4, fixed_abs, tag = 'smem constant byte address 0x4 - core index']
  #allocation1 [shape = 'u32[144,128]{1,0:T(1,128)}', space=vmem, size = 0x12000, scoped, tag = 'internal scratch']
  #allocation2 [shape = 'f32[8,128]{1,0:T(8,128)}', space=vmem, size = 0x1000, scoped, tag = 'scratch operand']
  %s0 = inlined_call_operand.vmem [shape: f32[16,8,768], index: 0, kind: input, shape index: {}]
  %s1 = inlined_call_operand.vmem [shape: bf16[2,128,384], index: 1, kind: input, shape index: {}]
  %s2 = inlined_call_operand.vmem [shape: f32[2,1,384], index: 2, kind: input, shape index: {}]
  %s3 = inlined_call_operand.vmem [shape: f32[2,8,128], index: 3, kind: input, shape index: {}]
  %s4 = inlined_call_operand.vmem [shape: bf16[16,8,256], index: 4, kind: output, shape index: {0}]
  %s5 = inlined_call_operand.vmem [shape: f32[2,8,128], index: 5, kind: output, shape index: {1}]
  %6 = xla_tuple %s4, %s5
  %s7 = sld [smem:[#allocation0]]
  $region125: #{generator_forward.10} parent=0
    _
  %s9 = ssub.s32 1, %s7
  %s10 = scalar_select 0, %s9, %s7
  $region1: #{generator_forward.10} parent=0
    #allocation3 [shape = 'u8[196608]{0}', space=vmem, size = 0x30000, scoped, tag = 'input window, operand 0']
    #allocation4 [shape = 'u8[32768]{0}', space=vmem, size = 0x8000, scoped, tag = 'output window, operand 0']
    loop: start=0, step=1, limit=6
    $region2: #{generator_forward.10} parent=1 // loop_pre_header
      _
    $region3: #{generator_forward.10} parent=1 // loop_header
      %s12 = sphi 0, %s16
      %p13 = scmp.ge.s32.totalorder %s12, 6
      %s19 = sphi 0, %s31
      %s20 = sphi 0, %s27
      %s21 = sphi 0, %s19
      %s22 = sphi 0, %s20
      %s23 = sphi 0, %s21
      %s24 = sphi 0, %s22
      %s44 = sphi 0, %s46
      %s47 = sphi 0, %s44
      %s48 = sphi 0, %s47
      %s64 = sphi 0, %s48
      %s70 = sphi 0, %s72
      %s73 = sphi 0, %s70
      %s74 = sphi 0, %s73
      %s90 = sphi 0, %s74
      %s96 = sphi 0, %s98
      %s99 = sphi 0, %s96
      %s100 = sphi 0, %s99
      %s116 = sphi 0, %s100
      %s122 = sphi 0, %s124
      %s125 = sphi 0, %s122
      %s126 = sphi 0, %s125
      %s142 = sphi 0, %s126
      %s158 = sphi 0, %s160
      %s161 = sphi 0, %s158
      %s162 = sphi 0, %s161
      %s178 = sphi 0, %s162
      %s184 = sphi 0, %s186
      %s187 = sphi 0, %s184
      %s188 = sphi 0, %s187
      %s204 = sphi 0, %s188
    $region4: #{generator_forward.10} parent=1 // loop_header_branch
      %15 = sbr.rel (%p13) target = $region8
    $region5: #{generator_forward.10} parent=1 // loop_body
      %s17 = ssub.s32 %s12, 1
      %s18 = ssub.s32 %s12, 2
      %s25 = sadd.s32 1, %s20
      %p26 = scmp.ge.s32.totalorder %s25, 2
      %s27 = scalar_select %p26, 0, %s25
      %s28 = sadd.s32 1, %s19
      %s29 = scalar_select %p26, %s28, %s19
      %p30 = scmp.ge.s32.totalorder %s29, 2
      %s31 = scalar_select %p30, 0, %s29
      %s32 = smul.u32 %s20, 2
      %s33 = ssub.s32 1, %s32
      %s34 = smul.u32 %s19, %s33
      %s35 = sadd.s32 %s20, %s34
      %s36 = smul.u32 %s27, 2
      %s37 = ssub.s32 1, %s36
      %s38 = smul.u32 %s31, %s37
      %s39 = sadd.s32 %s27, %s38
      %s40 = ssub.s32 %s35, %s39
      %s41 = ssub.s32 %s19, %s31
      %s42 = sor.u32 %s40, %s41
      %p43 = scmp.eq.s32.totalorder %s42, 0
      %s45 = sadd.s32 %s44, 1
      %s46 = scalar_select %p43, %s44, %s45
      %p49 = pneg %p43
      %p50 = scmp.eq.s32.totalorder %s12, 3
      %p51 = por %p49, %p50
      %p52 = scmp.ne.s32.totalorder %s44, %s47
      %p53 = scmp.eq.s32.totalorder %s12, 0
      %p54 = por %p52, %p53
      %p55 = scmp.ne.s32.totalorder %s44, %s47
      %p56 = scmp.eq.s32.totalorder %s17, 3
      %p57 = por %p55, %p56
      %p58 = scmp.ne.s32.totalorder %s47, %s48
      %p59 = scmp.eq.s32.totalorder %s17, 0
      %p60 = por %p58, %p59
      %p61 = scmp.ne.s32.totalorder %s47, %s48
      %p62 = scmp.eq.s32.totalorder %s18, 3
      %p63 = por %p61, %p62
      %p65 = scmp.ne.s32.totalorder %s48, %s64
      %p66 = scmp.eq.s32.totalorder %s18, 0
      %p67 = por %p65, %p66
      %s68 = ssub.s32 %s19, %s31
      %p69 = scmp.eq.s32.totalorder %s68, 0
      %s71 = sadd.s32 %s70, 1
      %s72 = scalar_select %p69, %s70, %s71
      %p75 = pneg %p69
      %p76 = scmp.eq.s32.totalorder %s12, 3
      %p77 = por %p75, %p76
      %p78 = scmp.ne.s32.totalorder %s70, %s73
      %p79 = scmp.eq.s32.totalorder %s12, 0
      %p80 = por %p78, %p79
      %p81 = scmp.ne.s32.totalorder %s70, %s73
      %p82 = scmp.eq.s32.totalorder %s17, 3
      %p83 = por %p81, %p82
      %p84 = scmp.ne.s32.totalorder %s73, %s74
      %p85 = scmp.eq.s32.totalorder %s17, 0
      %p86 = por %p84, %p85
      %p87 = scmp.ne.s32.totalorder %s73, %s74
      %p88 = scmp.eq.s32.totalorder %s18, 3
      %p89 = por %p87, %p88
      %p91 = scmp.ne.s32.totalorder %s74, %s90
      %p92 = scmp.eq.s32.totalorder %s18, 0
      %p93 = por %p91, %p92
      %s94 = ssub.s32 %s19, %s31
      %p95 = scmp.eq.s32.totalorder %s94, 0
      %s97 = sadd.s32 %s96, 1
      %s98 = scalar_select %p95, %s96, %s97
      %p101 = pneg %p95
      %p102 = scmp.eq.s32.totalorder %s12, 3
      %p103 = por %p101, %p102
      %p104 = scmp.ne.s32.totalorder %s96, %s99
      %p105 = scmp.eq.s32.totalorder %s12, 0
      %p106 = por %p104, %p105
      %p107 = scmp.ne.s32.totalorder %s96, %s99
      %p108 = scmp.eq.s32.totalorder %s17, 3
      %p109 = por %p107, %p108
      %p110 = scmp.ne.s32.totalorder %s99, %s100
      %p111 = scmp.eq.s32.totalorder %s17, 0
      %p112 = por %p110, %p111
      %p113 = scmp.ne.s32.totalorder %s99, %s100
      %p114 = scmp.eq.s32.totalorder %s18, 3
      %p115 = por %p113, %p114
      %p117 = scmp.ne.s32.totalorder %s100, %s116
      %p118 = scmp.eq.s32.totalorder %s18, 0
      %p119 = por %p117, %p118
      %s120 = ssub.s32 %s19, %s31
      %p121 = scmp.eq.s32.totalorder %s120, 0
      %s123 = sadd.s32 %s122, 1
      %s124 = scalar_select %p121, %s122, %s123
      %p127 = pneg %p121
      %p128 = scmp.eq.s32.totalorder %s12, 3
      %p129 = por %p127, %p128
      %p130 = scmp.ne.s32.totalorder %s122, %s125
      %p131 = scmp.eq.s32.totalorder %s12, 0
      %p132 = por %p130, %p131
      %p133 = scmp.ne.s32.totalorder %s122, %s125
      %p134 = scmp.eq.s32.totalorder %s17, 3
      %p135 = por %p133, %p134
      %p136 = scmp.ne.s32.totalorder %s125, %s126
      %p137 = scmp.eq.s32.totalorder %s17, 0
      %p138 = por %p136, %p137
      %p139 = scmp.ne.s32.totalorder %s125, %s126
      %p140 = scmp.eq.s32.totalorder %s18, 3
      %p141 = por %p139, %p140
      %p143 = scmp.ne.s32.totalorder %s126, %s142
      %p144 = scmp.eq.s32.totalorder %s18, 0
      %p145 = por %p143, %p144
      %s146 = smul.u32 %s20, 2
      %s147 = ssub.s32 1, %s146
      %s148 = smul.u32 %s19, %s147
      %s149 = sadd.s32 %s20, %s148
      %s150 = smul.u32 %s27, 2
      %s151 = ssub.s32 1, %s150
      %s152 = smul.u32 %s31, %s151
      %s153 = sadd.s32 %s27, %s152
      %s154 = ssub.s32 %s149, %s153
      %s155 = ssub.s32 %s19, %s31
      %s156 = sor.u32 %s154, %s155
      %p157 = scmp.eq.s32.totalorder %s156, 0
      %s159 = sadd.s32 %s158, 1
      %s160 = scalar_select %p157, %s158, %s159
      %p163 = pneg %p157
      %p164 = scmp.eq.s32.totalorder %s12, 3
      %p165 = por %p163, %p164
      %p166 = scmp.ne.s32.totalorder %s158, %s161
      %p167 = scmp.eq.s32.totalorder %s12, 0
      %p168 = por %p166, %p167
      %p169 = scmp.ne.s32.totalorder %s158, %s161
      %p170 = scmp.eq.s32.totalorder %s17, 3
      %p171 = por %p169, %p170
      %p172 = scmp.ne.s32.totalorder %s161, %s162
      %p173 = scmp.eq.s32.totalorder %s17, 0
      %p174 = por %p172, %p173
      %p175 = scmp.ne.s32.totalorder %s161, %s162
      %p176 = scmp.eq.s32.totalorder %s18, 3
      %p177 = por %p175, %p176
      %p179 = scmp.ne.s32.totalorder %s162, %s178
      %p180 = scmp.eq.s32.totalorder %s18, 0
      %p181 = por %p179, %p180
      %s182 = ssub.s32 %s19, %s31
      %p183 = scmp.eq.s32.totalorder %s182, 0
      %s185 = sadd.s32 %s184, 1
      %s186 = scalar_select %p183, %s184, %s185
      %p189 = pneg %p183
      %p190 = scmp.eq.s32.totalorder %s12, 3
      %p191 = por %p189, %p190
      %p192 = scmp.ne.s32.totalorder %s184, %s187
      %p193 = scmp.eq.s32.totalorder %s12, 0
      %p194 = por %p192, %p193
      %p195 = scmp.ne.s32.totalorder %s184, %s187
      %p196 = scmp.eq.s32.totalorder %s17, 3
      %p197 = por %p195, %p196
      %p198 = scmp.ne.s32.totalorder %s187, %s188
      %p199 = scmp.eq.s32.totalorder %s17, 0
      %p200 = por %p198, %p199
      %p201 = scmp.ne.s32.totalorder %s187, %s188
      %p202 = scmp.eq.s32.totalorder %s18, 3
      %p203 = por %p201, %p202
      %p205 = scmp.ne.s32.totalorder %s188, %s204
      %p206 = scmp.eq.s32.totalorder %s18, 0
      %p207 = por %p205, %p206
      %p208 = scmp.le.s32.totalorder 1, %s12
      %p209 = scmp.lt.s32.totalorder %s12, 5
      %p210 = pnand %p208, %p209
      %p211 = pneg %p210
      // Predicated region
      $region9: #{generator_forward.10} parent=5 // pred_check
        _
      $region10: #{generator_forward.10} parent=5 // pred_check_branch
        %213 = sbr.rel (%p210) target = $region12
      $region11: #{generator_forward.10} parent=5 // pred_region
        %s214 = ssub.s32 %s12, 1
      $region12: #{generator_forward.10} parent=5 // pred_fallthru
        _
      %p215 = scmp.lt.s32.totalorder %s12, 4
      // Predicated region
      $region13: #{generator_forward.10} parent=5 // pred_check
        %p216 = pneg %p215
      $region14: #{generator_forward.10} parent=5 // pred_check_branch
        %218 = sbr.rel (%p216) target = $region16
      $region15: #{generator_forward.10} parent=5 // pred_region
        // Predicated region
        $region17: #{generator_forward.10} parent=15 // pred_check
          %p219 = pneg %p54
        $region18: #{generator_forward.10} parent=15 // pred_check_branch
          %221 = sbr.rel (%p219) target = $region20
        $region19: #{generator_forward.10} parent=15 // pred_region
          %s222 = sand.u32 %s44, 1
          %s223 = sand.u32 %s44, 1
          %s224 = smul.addr %s223, 192
          %s225 = scalar_lea.vmem [#allocation3], %s224
          %s226 = smul.u32 %s20, 2
          %s227 = ssub.s32 1, %s226
          %s228 = smul.u32 %s19, %s227
          %s229 = sadd.s32 %s20, %s228
          %s230 = smul.u32 8, %s229
          %s231 = smul.u32 3, %s19
          %s232 = smul.addr %s230, 6
          %s233 = sadd.s32 %s231, %s232
          %s234 = smul.addr %s233, 8
          %s235 = scalar_lea.vmem %s0, %s234
          // Predicated region
          $region21: #{generator_forward.10} parent=19 // pred_check
            _
          $region22: #{generator_forward.10} parent=19 // pred_check_branch
            %237 = sbr.rel (0) target = $region24
          $region23: #{generator_forward.10} parent=19 // pred_region
            // Predicated region
            $region25: #{generator_forward.10} parent=23 // pred_check
              _
            $region26: #{generator_forward.10} parent=23 // pred_check_branch
              %239 = sbr.rel (0) target = $region28
            $region27: #{generator_forward.10} parent=23 // pred_region
              loop: start=0, step=1, limit=1
              $region29: #{generator_forward.10} parent=27 // loop_pre_header
                _
              $region30: #{generator_forward.10} parent=27 // loop_header
                %s241 = sphi 0, %s245
                %p242 = scmp.ge.s32.totalorder %s241, 1
                %s246 = sphi %s235, %s235
                %s247 = sphi %s225, %s225
              $region31: #{generator_forward.10} parent=27 // loop_header_branch
                %244 = sbr.rel (%p242) target = $region35
              $region32: #{generator_forward.10} parent=27 // loop_body
                %v248 = vld [vmem:[%s246] sm:$0xff]
                %249 = vst [vmem:[%s247] sm:$0xff] %v248
                %v250 = vld [vmem:[%s246 + $0x8] sm:$0xff]
                %251 = vst [vmem:[%s247 + $0x8] sm:$0xff] %v250
                %v252 = vld [vmem:[%s246 + $0x10] sm:$0xff]
                %253 = vst [vmem:[%s247 + $0x10] sm:$0xff] %v252
                %v254 = vld [vmem:[%s246 + $0x30] sm:$0xff]
                %255 = vst [vmem:[%s247 + $0x18] sm:$0xff] %v254
                %v256 = vld [vmem:[%s246 + $0x38] sm:$0xff]
                %257 = vst [vmem:[%s247 + $0x20] sm:$0xff] %v256
                %v258 = vld [vmem:[%s246 + $0x40] sm:$0xff]
                %259 = vst [vmem:[%s247 + $0x28] sm:$0xff] %v258
                %v260 = vld [vmem:[%s246 + $0x60] sm:$0xff]
                %261 = vst [vmem:[%s247 + $0x30] sm:$0xff] %v260
                %v262 = vld [vmem:[%s246 + $0x68] sm:$0xff]
                %263 = vst [vmem:[%s247 + $0x38] sm:$0xff] %v262
                %v264 = vld [vmem:[%s246 + $0x70] sm:$0xff]
                %265 = vst [vmem:[%s247 + $0x40] sm:$0xff] %v264
                %v266 = vld [vmem:[%s246 + $0x90] sm:$0xff]
                %267 = vst [vmem:[%s247 + $0x48] sm:$0xff] %v266
                %v268 = vld [vmem:[%s246 + $0x98] sm:$0xff]
                %269 = vst [vmem:[%s247 + $0x50] sm:$0xff] %v268
                %v270 = vld [vmem:[%s246 + $0xa0] sm:$0xff]
                %271 = vst [vmem:[%s247 + $0x58] sm:$0xff] %v270
                %v272 = vld [vmem:[%s246 + $0xc0] sm:$0xff]
                %273 = vst [vmem:[%s247 + $0x60] sm:$0xff] %v272
                %v274 = vld [vmem:[%s246 + $0xc8] sm:$0xff]
                %275 = vst [vmem:[%s247 + $0x68] sm:$0xff] %v274
                %v276 = vld [vmem:[%s246 + $0xd0] sm:$0xff]
                %277 = vst [vmem:[%s247 + $0x70] sm:$0xff] %v276
                %v278 = vld [vmem:[%s246 + $0xf0] sm:$0xff]
                %279 = vst [vmem:[%s247 + $0x78] sm:$0xff] %v278
                %v280 = vld [vmem:[%s246 + $0xf8] sm:$0xff]
                %281 = vst [vmem:[%s247 + $0x80] sm:$0xff] %v280
                %v282 = vld [vmem:[%s246 + $0x100] sm:$0xff]
                %283 = vst [vmem:[%s247 + $0x88] sm:$0xff] %v282
                %v284 = vld [vmem:[%s246 + $0x120] sm:$0xff]
                %285 = vst [vmem:[%s247 + $0x90] sm:$0xff] %v284
                %v286 = vld [vmem:[%s246 + $0x128] sm:$0xff]
                %287 = vst [vmem:[%s247 + $0x98] sm:$0xff] %v286
                %v288 = vld [vmem:[%s246 + $0x130] sm:$0xff]
                %289 = vst [vmem:[%s247 + $0xa0] sm:$0xff] %v288
                %v290 = vld [vmem:[%s246 + $0x150] sm:$0xff]
                %291 = vst [vmem:[%s247 + $0xa8] sm:$0xff] %v290
                %v292 = vld [vmem:[%s246 + $0x158] sm:$0xff]
                %293 = vst [vmem:[%s247 + $0xb0] sm:$0xff] %v292
                %v294 = vld [vmem:[%s246 + $0x160] sm:$0xff]
                %295 = vst [vmem:[%s247 + $0xb8] sm:$0xff] %v294
              $region33: #{generator_forward.10} parent=27 // loop_footer
                %s245 = sadd.s32 1, %s241
              $region34: #{generator_forward.10} parent=27 // loop_footer_branch
                %240 = sbr.rel target = $region30
              $region35: #{generator_forward.10} parent=27 // loop_exit
                _
            $region28: #{generator_forward.10} parent=23 // pred_fallthru
              _
            // Predicated region
            $region36: #{generator_forward.10} parent=23 // pred_check
              _
            $region37: #{generator_forward.10} parent=23 // pred_check_branch
              %297 = sbr.rel target = $region39
            $region38: #{generator_forward.10} parent=23 // pred_region
              _
            $region39: #{generator_forward.10} parent=23 // pred_fallthru
              _
          $region24: #{generator_forward.10} parent=19 // pred_fallthru
            _
          %298 = vnop
        $region20: #{generator_forward.10} parent=15 // pred_fallthru
          _
        // Predicated region
        $region40: #{generator_forward.10} parent=15 // pred_check
          %p299 = pneg %p80
        $region41: #{generator_forward.10} parent=15 // pred_check_branch
          %301 = sbr.rel (%p299) target = $region43
        $region42: #{generator_forward.10} parent=15 // pred_region
          %p302 = scmp.lt.s32.totalorder %s19, 1
          %s303 = scalar_select %p302, %s19, 1
          %s304 = smul.addr %s303, 48
          %s305 = smul.addr %s304, 4
          %s306 = scalar_lea.vmem %s1, %s305
        $region43: #{generator_forward.10} parent=15 // pred_fallthru
          _
        // Predicated region
        $region44: #{generator_forward.10} parent=15 // pred_check
          %p307 = pneg %p106
        $region45: #{generator_forward.10} parent=15 // pred_check_branch
          %309 = sbr.rel (%p307) target = $region47
        $region46: #{generator_forward.10} parent=15 // pred_region
          %p310 = scmp.lt.s32.totalorder %s19, 1
          %s311 = scalar_select %p310, %s19, 1
          %s312 = smul.addr %s311, 3
          %s313 = scalar_lea.vmem %s2, %s312
        $region47: #{generator_forward.10} parent=15 // pred_fallthru
          _
        // Predicated region
        $region48: #{generator_forward.10} parent=15 // pred_check
          %p314 = pneg %p132
        $region49: #{generator_forward.10} parent=15 // pred_check_branch
          %316 = sbr.rel (%p314) target = $region51
        $region50: #{generator_forward.10} parent=15 // pred_region
          %p317 = scmp.lt.s32.totalorder %s19, 1
          %s318 = scalar_select %p317, %s19, 1
          %s319 = smul.addr %s318, 8
          %s320 = scalar_lea.vmem %s3, %s319
        $region51: #{generator_forward.10} parent=15 // pred_fallthru
          _
      $region16: #{generator_forward.10} parent=5 // pred_fallthru
        _
      %p321 = scmp.le.s32.totalorder 1, %s12
      %p322 = scmp.lt.s32.totalorder %s12, 5
      %p323 = pnand %p321, %p322
      %p324 = pneg %p323
      // Predicated region
      $region52: #{generator_forward.10} parent=5 // pred_check
        _
      $region53: #{generator_forward.10} parent=5 // pred_check_branch
        %326 = sbr.rel (%p323) target = $region55
      $region54: #{generator_forward.10} parent=5 // pred_region
        %s327 = ssub.s32 %s12, 1
        %s328 = sand.u32 %s47, 1
        %s329 = sand.u32 %s47, 1
        %s330 = smul.addr %s329, 192
        %s331 = scalar_lea.vmem [#allocation3], %s330
        // Predicated region
        $region56: #{generator_forward.10} parent=54 // pred_check
          %p332 = pneg %p60
        $region57: #{generator_forward.10} parent=54 // pred_check_branch
          %334 = sbr.rel (%p332) target = $region59
        $region58: #{generator_forward.10} parent=54 // pred_region
          _
        $region59: #{generator_forward.10} parent=54 // pred_fallthru
          _
        %s335 = sand.u32 %s47, 1
        %s336 = sand.u32 %s47, 1
        %s337 = smul.addr %s336, 192
        %s338 = scalar_lea.vmem [#allocation3], %s337
        %p339 = pneg %p60
        %p340 = pneg %p57
        %p341 = scmp.lt.s32.totalorder %s21, 1
        %s342 = scalar_select %p341, %s21, 1
        %s343 = smul.addr %s342, 48
        %s344 = smul.addr %s343, 4
        %s345 = scalar_lea.vmem %s1, %s344
        %p346 = pneg %p86
        %p347 = pneg %p83
        %p348 = scmp.lt.s32.totalorder %s21, 1
        %s349 = scalar_select %p348, %s21, 1
        %s350 = smul.addr %s349, 3
        %s351 = scalar_lea.vmem %s2, %s350
        %p352 = pneg %p112
        %p353 = pneg %p109
        %p354 = scmp.lt.s32.totalorder %s21, 1
        %s355 = scalar_select %p354, %s21, 1
        %s356 = smul.addr %s355, 8
        %s357 = scalar_lea.vmem %s3, %s356
        %p358 = pneg %p138
        %p359 = pneg %p135
        %p360 = pneg %p174
        %p361 = pneg %p171
        %s362 = sand.u32 %s161, 1
        %s363 = sand.u32 %s161, 1
        %s364 = smul.addr %s363, 32
        %s365 = scalar_lea.vmem [#allocation4], %s364
        %p366 = pneg %p200
        %p367 = pneg %p197
        %p368 = scmp.lt.s32.totalorder %s21, 1
        %s369 = scalar_select %p368, %s21, 1
        %s370 = smul.addr %s369, 8
        %s371 = scalar_lea.vmem %s5, %s370
        %s372 = smul.u32 %s22, 2
        %s373 = ssub.s32 1, %s372
        %s374 = smul.u32 %s21, %s373
        %s375 = sadd.s32 %s22, %s374
        %s376 = smul.u32 8, %s375
        %s377 = smul.u32 3, %s21
        %p378 = scmp.lt.s32.totalorder %s21, 1
        %s379 = scalar_select %p378, %s21, 1
        %s380 = smul.addr %s379, 48
        %s381 = smul.addr %s380, 4
        %s382 = scalar_lea.vmem %s1, %s381
        %p383 = scmp.lt.s32.totalorder %s21, 1
        %s384 = scalar_select %p383, %s21, 1
        %s385 = smul.addr %s384, 3
        %s386 = scalar_lea.vmem %s2, %s385
        %p387 = scmp.lt.s32.totalorder %s21, 1
        %s388 = scalar_select %p387, %s21, 1
        %s389 = smul.addr %s388, 8
        %s390 = scalar_lea.vmem %s3, %s389
        %s391 = smul.u32 %s22, 2
        %s392 = ssub.s32 1, %s391
        %s393 = smul.u32 %s21, %s392
        %s394 = sadd.s32 %s22, %s393
        %s395 = smul.u32 8, %s394
        %p396 = scmp.lt.s32.totalorder %s21, 1
        %s397 = scalar_select %p396, %s21, 1
        %s398 = smul.addr %s397, 8
        %s399 = scalar_lea.vmem %s5, %s398
        %p401 = scmp.eq.s32.totalorder %s22, 0
        // Predicated region
        $region60: #{generator_forward.10} parent=54 // pred_check
          %p402 = pneg %p401
        $region61: #{generator_forward.10} parent=54 // pred_check_branch
          %404 = sbr.rel (%p402) target = $region63
        $region62: #{generator_forward.10} parent=54 // pred_region
          %v405 = vld [vmem:[%s390] sm:$0xff]
          %406 = vst [vmem:[#allocation2] sm:$0xff] %v405
        $region63: #{generator_forward.10} parent=54 // pred_fallthru
          _
        %v407 = vld [vmem:[%s382] sm:$0xff]
        %v408 = vld [vmem:[%s382 + $0x8] sm:$0xf]
        %v409 = vld [vmem:[%s382 + $0xc] sm:$0xff]
        %v410 = vld [vmem:[%s382 + $0x14] sm:$0xf]
        %v411 = vld [vmem:[%s382 + $0x18] sm:$0xff]
        %v412 = vld [vmem:[%s382 + $0x20] sm:$0xf]
        %v413 = vld [vmem:[%s382 + $0x24] sm:$0xff]
        %v414 = vld [vmem:[%s382 + $0x2c] sm:$0xf]
        %v415 = vld [vmem:[%s382 + $0x30] sm:$0xff]
        %v416 = vld [vmem:[%s382 + $0x38] sm:$0xf]
        %v417 = vld [vmem:[%s382 + $0x3c] sm:$0xff]
        %v418 = vld [vmem:[%s382 + $0x44] sm:$0xf]
        %v419 = vld [vmem:[%s382 + $0x48] sm:$0xff]
        %v420 = vld [vmem:[%s382 + $0x50] sm:$0xf]
        %v421 = vld [vmem:[%s382 + $0x54] sm:$0xff]
        %v422 = vld [vmem:[%s382 + $0x5c] sm:$0xf]
        %v423 = vld [vmem:[%s382 + $0x60] sm:$0xff]
        %v424 = vld [vmem:[%s382 + $0x68] sm:$0xf]
        %v425 = vld [vmem:[%s382 + $0x6c] sm:$0xff]
        %v426 = vld [vmem:[%s382 + $0x74] sm:$0xf]
        %v427 = vld [vmem:[%s382 + $0x78] sm:$0xff]
        %v428 = vld [vmem:[%s382 + $0x80] sm:$0xf]
        %v429 = vld [vmem:[%s382 + $0x84] sm:$0xff]
        %v430 = vld [vmem:[%s382 + $0x8c] sm:$0xf]
        %v431 = vld [vmem:[%s382 + $0x90] sm:$0xff]
        %v432 = vld [vmem:[%s382 + $0x98] sm:$0xf]
        %v433 = vld [vmem:[%s382 + $0x9c] sm:$0xff]
        %v434 = vld [vmem:[%s382 + $0xa4] sm:$0xf]
        %v435 = vld [vmem:[%s382 + $0xa8] sm:$0xff]
        %v436 = vld [vmem:[%s382 + $0xb0] sm:$0xf]
        %v437 = vld [vmem:[%s382 + $0xb4] sm:$0xff]
        %v438 = vld [vmem:[%s382 + $0xbc] sm:$0xf]
        %v439 = vld [vmem:[%s386] sm:$0x7]
        %s440 = smul.u32 %s21, 7
        %v441 = vld [vmem:[#allocation2] sm:$0xff]
        %s442 = smul.u32 %s440, 3
        %s443 = smul.addr %s442, 8
        %s444 = scalar_lea.vmem %s331, %s443 [#allocation3]
        %v445 = vld [vmem:[%s444] sm:$0xff]
        %v446 = vld [vmem:[%s444 + $0x8] sm:$0xff]
        %v447 = vld [vmem:[%s444 + $0x10] sm:$0xff]
        %v448 = vpack.c.bf16 %v441, %v441
        %v450 = vlaneseq
        %v451 = vshrl.u32 %v450, 7
        %v452 = vsub.s32 0, %v451
        %v453 = vrot.slane %v439, %v452
        %v454 = vlaneseq
        %v455 = vshrl.u32 %v454, 7
        %v456 = vsub.s32 1, %v455
        %v457 = vrot.slane %v439, %v456
        %v458 = vlaneseq
        %v459 = vshrl.u32 %v458, 7
        %v460 = vsub.s32 2, %v459
        %v461 = vrot.slane %v439, %v460
        %v497 = vunpack.c.l.b16 %v407
        %v498 = vunpack.c.h.b16 %v407
        %v499 = vunpack.c.l.b16 %v408
        %v500 = vunpack.c.l.b16 %v409
        %v501 = vunpack.c.h.b16 %v409
        %v502 = vunpack.c.l.b16 %v410
        %v503 = vunpack.c.l.b16 %v411
        %v504 = vunpack.c.h.b16 %v411
        %v505 = vunpack.c.l.b16 %v412
        %v506 = vunpack.c.l.b16 %v413
        %v507 = vunpack.c.h.b16 %v413
        %v508 = vunpack.c.l.b16 %v414
        %v509 = vunpack.c.l.b16 %v415
        %v510 = vunpack.c.h.b16 %v415
        %v511 = vunpack.c.l.b16 %v416
        %v512 = vunpack.c.l.b16 %v417
        %v513 = vunpack.c.h.b16 %v417
        %v514 = vunpack.c.l.b16 %v418
        %v515 = vunpack.c.l.b16 %v419
        %v516 = vunpack.c.h.b16 %v419
        %v517 = vunpack.c.l.b16 %v420
        %v518 = vunpack.c.l.b16 %v421
        %v519 = vunpack.c.h.b16 %v421
        %v520 = vunpack.c.l.b16 %v422
        %v521 = vunpack.c.l.b16 %v423
        %v522 = vunpack.c.h.b16 %v423
        %v523 = vunpack.c.l.b16 %v424
        %v524 = vunpack.c.l.b16 %v425
        %v525 = vunpack.c.h.b16 %v425
        %v526 = vunpack.c.l.b16 %v426
        %v527 = vunpack.c.l.b16 %v427
        %v528 = vunpack.c.h.b16 %v427
        %v529 = vunpack.c.l.b16 %v428
        %v530 = vunpack.c.l.b16 %v429
        %v531 = vunpack.c.h.b16 %v429
        %v532 = vunpack.c.l.b16 %v430
        %v533 = vunpack.c.l.b16 %v431
        %v534 = vunpack.c.h.b16 %v431
        %v535 = vunpack.c.l.b16 %v432
        %v536 = vunpack.c.l.b16 %v433
        %v537 = vunpack.c.h.b16 %v433
        %v538 = vunpack.c.l.b16 %v434
        %v539 = vunpack.c.l.b16 %v435
        %v540 = vunpack.c.h.b16 %v435
        %v541 = vunpack.c.l.b16 %v436
        %v542 = vunpack.c.l.b16 %v437
        %v543 = vunpack.c.h.b16 %v437
        %v544 = vunpack.c.l.b16 %v438
        %v545 = vpack.c.b16 %v500, %v497
        %v546 = vpack.c.b16 %v501, %v498
        %v547 = vpack.c.b16 %v502, %v499
        %v548 = vpack.c.b16 %v506, %v503
        %v549 = vpack.c.b16 %v507, %v504
        %v550 = vpack.c.b16 %v508, %v505
        %v551 = vpack.c.b16 %v512, %v509
        %v552 = vpack.c.b16 %v513, %v510
        %v553 = vpack.c.b16 %v514, %v511
        %v554 = vpack.c.b16 %v518, %v515
        %v555 = vpack.c.b16 %v519, %v516
        %v556 = vpack.c.b16 %v520, %v517
        %v557 = vpack.c.b16 %v524, %v521
        %v558 = vpack.c.b16 %v525, %v522
        %v559 = vpack.c.b16 %v526, %v523
        %v560 = vpack.c.b16 %v530, %v527
        %v561 = vpack.c.b16 %v531, %v528
        %v562 = vpack.c.b16 %v532, %v529
        %v563 = vpack.c.b16 %v536, %v533
        %v564 = vpack.c.b16 %v537, %v534
        %v565 = vpack.c.b16 %v538, %v535
        %v566 = vpack.c.b16 %v542, %v539
        %v567 = vpack.c.b16 %v543, %v540
        %v568 = vpack.c.b16 %v544, %v541
        %593 = vmatprep.subr.bf16.mxu0 %v546
        %594 = vmatpush1.bf16.msra.mxu0 %v545
        %595 = vmatprep.subr.bf16.mxu0 %v549
        %596 = vmatpush1.bf16.msra.mxu0 %v548
        %597 = vmatprep.subr.bf16.mxu0 %v552
        %598 = vmatpush1.bf16.msra.mxu0 %v551
        %599 = vmatprep.subr.bf16.mxu0 %v555
        %600 = vmatpush1.bf16.msra.mxu0 %v554
        %601 = vmatprep.subr.bf16.mxu0 %v558
        %602 = vmatpush1.bf16.msra.mxu0 %v557
        %603 = vmatprep.subr.bf16.mxu0 %v561
        %604 = vmatpush1.bf16.msra.mxu0 %v560
        %605 = vmatprep.subr.bf16.mxu0 %v564
        %606 = vmatpush1.bf16.msra.mxu0 %v563
        %607 = vmatprep.subr.bf16.mxu0 %v567
        %608 = vmatpush1.bf16.msra.mxu0 %v566
        %609 = vmatprep.subr.bf16.mxu0 0
        %610 = vmatpush1.bf16.msra.mxu0 0
        %611 = vmatprep.subr.bf16.mxu0 0
        %612 = vmatpush1.bf16.msra.mxu0 0
        %613 = vmatprep.subr.bf16.mxu0 0
        %614 = vmatpush1.bf16.msra.mxu0 0
        %615 = vmatprep.subr.bf16.mxu0 0
        %616 = vmatpush1.bf16.msra.mxu0 0
        %617 = vmatprep.subr.bf16.mxu0 0
        %618 = vmatpush1.bf16.msra.mxu0 0
        %619 = vmatprep.subr.bf16.mxu0 0
        %620 = vmatpush1.bf16.msra.mxu0 0
        %621 = vmatprep.subr.bf16.mxu0 0
        %622 = vmatpush1.bf16.msra.mxu0 0
        %623 = vmatprep.subr.bf16.mxu0 0
        %624 = vmatpush1.bf16.msra.mxu0 0
        %625 = vmatprep.mubr.bf16.mxu0 0
        %626 = vmatmul.mubr.bf16.gmra.mrb[0].mxu0 %v448
        %v627 = vpop.f32.mrb[0].mxu0
        %v628 = vadd.f32 %v453, %v627
        %v629 = vpop.f32.mrb[0].mxu0
        %v630 = vadd.f32 %v457, %v629
        %v631 = vpop.f32.mrb[0].mxu0
        %v632 = vpop.f32.mrb[0].mxu0
        %633 = vdwg.mxu0
        %634 = vmatprep.subr.bf16.mxu0 0
        %635 = vmatpush1.bf16.msra.mxu0 %v547
        %636 = vmatprep.subr.bf16.mxu0 0
        %637 = vmatpush1.bf16.msra.mxu0 %v550
        %638 = vmatprep.subr.bf16.mxu0 0
        %639 = vmatpush1.bf16.msra.mxu0 %v553
        %640 = vmatprep.subr.bf16.mxu0 0
        %641 = vmatpush1.bf16.msra.mxu0 %v556
        %642 = vmatprep.subr.bf16.mxu0 0
        %643 = vmatpush1.bf16.msra.mxu0 %v559
        %644 = vmatprep.subr.bf16.mxu0 0
        %645 = vmatpush1.bf16.msra.mxu0 %v562
        %646 = vmatprep.subr.bf16.mxu0 0
        %647 = vmatpush1.bf16.msra.mxu0 %v565
        %648 = vmatprep.subr.bf16.mxu0 0
        %649 = vmatpush1.bf16.msra.mxu0 %v568
        %650 = vmatprep.subr.bf16.mxu0 0
        %651 = vmatpush1.bf16.msra.mxu0 0
        %652 = vmatprep.subr.bf16.mxu0 0
        %653 = vmatpush1.bf16.msra.mxu0 0
        %654 = vmatprep.subr.bf16.mxu0 0
        %655 = vmatpush1.bf16.msra.mxu0 0
        %656 = vmatprep.subr.bf16.mxu0 0
        %657 = vmatpush1.bf16.msra.mxu0 0
        %658 = vmatprep.subr.bf16.mxu0 0
        %659 = vmatpush1.bf16.msra.mxu0 0
        %660 = vmatprep.subr.bf16.mxu0 0
        %661 = vmatpush1.bf16.msra.mxu0 0
        %662 = vmatprep.subr.bf16.mxu0 0
        %663 = vmatpush1.bf16.msra.mxu0 0
        %664 = vmatprep.subr.bf16.mxu0 0
        %665 = vmatpush1.bf16.msra.mxu0 0
        %666 = vmatprep.mubr.bf16.mxu0 0
        %667 = vmatmul.mubr.bf16.gmra.mrb[0].mxu0 %v448
        %v668 = vpop.f32.mrb[0].mxu0
        %v669 = vadd.f32 %v461, %v668
        %v670 = vpop.f32.mrb[0].mxu0
        %v671 = vpop.f32.mrb[0].mxu0
        %v672 = vpop.f32.mrb[0].mxu0
        %673 = vdwg.mxu0
        %v674 = vadd.f32 %v445, %v628
        %v675 = vxor.u32 %v674, 2147483648
        %v676 = vmul.f32 %v675, 1.442695
        %v677 = vpow.pop %v676
        %v678 = vadd.f32 %v677, 1.0
        %v679 = vrcp.pop %v678
        %v680 = vmul.f32 1.0, %v679
        %v681 = vadd.f32 %v446, %v630
        %v682 = vxor.u32 %v681, 2147483648
        %v683 = vmul.f32 %v682, 1.442695
        %v684 = vpow.pop %v683
        %v685 = vadd.f32 %v684, 1.0
        %v686 = vrcp.pop %v685
        %v687 = vmul.f32 1.0, %v686
        %v688 = vmul.f32 %v680, %v669
        %v689 = vadd.f32 %v447, %v688
        %v690 = vtanh.pop %v689
        %v691 = vsub.f32 %v441, %v690
        %v692 = vmul.f32 %v687, %v691
        %v693 = vadd.f32 %v690, %v692
        %694 = vst [vmem:[#allocation2] sm:$0xff] %v693
        %v695 = vpack.c.bf16 %v693, %v693
        %s696 = smul.addr %s440, 4
        %s697 = scalar_lea.vmem %s365, %s696 [#allocation4]
        %698 = vst [vmem:[%s697] sm:$0xf] %v695
        %s699 = smul.u32 %s21, 5
        %s700 = sadd.s32 %s699, 1
        %v701 = vld [vmem:[#allocation2] sm:$0xff]
        %s702 = smul.u32 %s700, 3
        %s703 = smul.addr %s702, 8
        %s704 = scalar_lea.vmem %s331, %s703 [#allocation3]
        %v705 = vld [vmem:[%s704] sm:$0xff]
        %v706 = vld [vmem:[%s704 + $0x8] sm:$0xff]
        %v707 = vld [vmem:[%s704 + $0x10] sm:$0xff]
        %v708 = vpack.c.bf16 %v701, %v701
        %709 = vmatprep.subr.bf16.mxu0 %v546
        %710 = vmatpush1.bf16.msra.mxu0 %v545
        %711 = vmatprep.subr.bf16.mxu0 %v549
        %712 = vmatpush1.bf16.msra.mxu0 %v548
        %713 = vmatprep.subr.bf16.mxu0 %v552
        %714 = vmatpush1.bf16.msra.mxu0 %v551
        %715 = vmatprep.subr.bf16.mxu0 %v555
        %716 = vmatpush1.bf16.msra.mxu0 %v554
        %717 = vmatprep.subr.bf16.mxu0 %v558
        %718 = vmatpush1.bf16.msra.mxu0 %v557
        %719 = vmatprep.subr.bf16.mxu0 %v561
        %720 = vmatpush1.bf16.msra.mxu0 %v560
        %721 = vmatprep.subr.bf16.mxu0 %v564
        %722 = vmatpush1.bf16.msra.mxu0 %v563
        %723 = vmatprep.subr.bf16.mxu0 %v567
        %724 = vmatpush1.bf16.msra.mxu0 %v566
        %725 = vmatprep.subr.bf16.mxu0 0
        %726 = vmatpush1.bf16.msra.mxu0 0
        %727 = vmatprep.subr.bf16.mxu0 0
        %728 = vmatpush1.bf16.msra.mxu0 0
        %729 = vmatprep.subr.bf16.mxu0 0
        %730 = vmatpush1.bf16.msra.mxu0 0
        %731 = vmatprep.subr.bf16.mxu0 0
        %732 = vmatpush1.bf16.msra.mxu0 0
        %733 = vmatprep.subr.bf16.mxu0 0
        %734 = vmatpush1.bf16.msra.mxu0 0
        %735 = vmatprep.subr.bf16.mxu0 0
        %736 = vmatpush1.bf16.msra.mxu0 0
        %737 = vmatprep.subr.bf16.mxu0 0
        %738 = vmatpush1.bf16.msra.mxu0 0
        %739 = vmatprep.subr.bf16.mxu0 0
        %740 = vmatpush1.bf16.msra.mxu0 0
        %741 = vmatprep.mubr.bf16.mxu0 0
        %742 = vmatmul.mubr.bf16.gmra.mrb[0].mxu0 %v708
        %v743 = vpop.f32.mrb[0].mxu0
        %v744 = vadd.f32 %v453, %v743
        %v745 = vpop.f32.mrb[0].mxu0
        %v746 = vadd.f32 %v457, %v745
        %v747 = vpop.f32.mrb[0].mxu0
        %v748 = vpop.f32.mrb[0].mxu0
        %749 = vdwg.mxu0
        %750 = vmatprep.subr.bf16.mxu0 0
        %751 = vmatpush1.bf16.msra.mxu0 %v547
        %752 = vmatprep.subr.bf16.mxu0 0
        %753 = vmatpush1.bf16.msra.mxu0 %v550
        %754 = vmatprep.subr.bf16.mxu0 0
        %755 = vmatpush1.bf16.msra.mxu0 %v553
        %756 = vmatprep.subr.bf16.mxu0 0
        %757 = vmatpush1.bf16.msra.mxu0 %v556
        %758 = vmatprep.subr.bf16.mxu0 0
        %759 = vmatpush1.bf16.msra.mxu0 %v559
        %760 = vmatprep.subr.bf16.mxu0 0
        %761 = vmatpush1.bf16.msra.mxu0 %v562
        %762 = vmatprep.subr.bf16.mxu0 0
        %763 = vmatpush1.bf16.msra.mxu0 %v565
        %764 = vmatprep.subr.bf16.mxu0 0
        %765 = vmatpush1.bf16.msra.mxu0 %v568
        %766 = vmatprep.subr.bf16.mxu0 0
        %767 = vmatpush1.bf16.msra.mxu0 0
        %768 = vmatprep.subr.bf16.mxu0 0
        %769 = vmatpush1.bf16.msra.mxu0 0
        %770 = vmatprep.subr.bf16.mxu0 0
        %771 = vmatpush1.bf16.msra.mxu0 0
        %772 = vmatprep.subr.bf16.mxu0 0
        %773 = vmatpush1.bf16.msra.mxu0 0
        %774 = vmatprep.subr.bf16.mxu0 0
        %775 = vmatpush1.bf16.msra.mxu0 0
        %776 = vmatprep.subr.bf16.mxu0 0
        %777 = vmatpush1.bf16.msra.mxu0 0
        %778 = vmatprep.subr.bf16.mxu0 0
        %779 = vmatpush1.bf16.msra.mxu0 0
        %780 = vmatprep.subr.bf16.mxu0 0
        %781 = vmatpush1.bf16.msra.mxu0 0
        %782 = vmatprep.mubr.bf16.mxu0 0
        %783 = vmatmul.mubr.bf16.gmra.mrb[0].mxu0 %v708
        %v784 = vpop.f32.mrb[0].mxu0
        %v785 = vadd.f32 %v461, %v784
        %v786 = vpop.f32.mrb[0].mxu0
        %v787 = vpop.f32.mrb[0].mxu0
        %v788 = vpop.f32.mrb[0].mxu0
        %789 = vdwg.mxu0
        %v790 = vadd.f32 %v705, %v744
        %v791 = vxor.u32 %v790, 2147483648
        %v792 = vmul.f32 %v791, 1.442695
        %v793 = vpow.pop %v792
        %v794 = vadd.f32 %v793, 1.0
        %v795 = vrcp.pop %v794
        %v796 = vmul.f32 1.0, %v795
        %v797 = vadd.f32 %v706, %v746
        %v798 = vxor.u32 %v797, 2147483648
        %v799 = vmul.f32 %v798, 1.442695
        %v800 = vpow.pop %v799
        %v801 = vadd.f32 %v800, 1.0
        %v802 = vrcp.pop %v801
        %v803 = vmul.f32 1.0, %v802
        %v804 = vmul.f32 %v796, %v785
        %v805 = vadd.f32 %v707, %v804
        %v806 = vtanh.pop %v805
        %v807 = vsub.f32 %v701, %v806
        %v808 = vmul.f32 %v803, %v807
        %v809 = vadd.f32 %v806, %v808
        %810 = vst [vmem:[#allocation2] sm:$0xff] %v809
        %v811 = vpack.c.bf16 %v809, %v809
        %s812 = smul.addr %s700, 4
        %s813 = scalar_lea.vmem %s365, %s812 [#allocation4]
        %814 = vst [vmem:[%s813] sm:$0xf] %v811
        %s815 = smul.u32 %s21, 3
        %s816 = sadd.s32 %s815, 2
        %v817 = vld [vmem:[#allocation2] sm:$0xff]
        %s818 = smul.u32 %s816, 3
        %s819 = smul.addr %s818, 8
        %s820 = scalar_lea.vmem %s331, %s819 [#allocation3]
        %v821 = vld [vmem:[%s820] sm:$0xff]
        %v822 = vld [vmem:[%s820 + $0x8] sm:$0xff]
        %v823 = vld [vmem:[%s820 + $0x10] sm:$0xff]
        %v824 = vpack.c.bf16 %v817, %v817
        %825 = vmatprep.subr.bf16.mxu0 %v546
        %826 = vmatpush1.bf16.msra.mxu0 %v545
        %827 = vmatprep.subr.bf16.mxu0 %v549
        %828 = vmatpush1.bf16.msra.mxu0 %v548
        %829 = vmatprep.subr.bf16.mxu0 %v552
        %830 = vmatpush1.bf16.msra.mxu0 %v551
        %831 = vmatprep.subr.bf16.mxu0 %v555
        %832 = vmatpush1.bf16.msra.mxu0 %v554
        %833 = vmatprep.subr.bf16.mxu0 %v558
        %834 = vmatpush1.bf16.msra.mxu0 %v557
        %835 = vmatprep.subr.bf16.mxu0 %v561
        %836 = vmatpush1.bf16.msra.mxu0 %v560
        %837 = vmatprep.subr.bf16.mxu0 %v564
        %838 = vmatpush1.bf16.msra.mxu0 %v563
        %839 = vmatprep.subr.bf16.mxu0 %v567
        %840 = vmatpush1.bf16.msra.mxu0 %v566
        %841 = vmatprep.subr.bf16.mxu0 0
        %842 = vmatpush1.bf16.msra.mxu0 0
        %843 = vmatprep.subr.bf16.mxu0 0
        %844 = vmatpush1.bf16.msra.mxu0 0
        %845 = vmatprep.subr.bf16.mxu0 0
        %846 = vmatpush1.bf16.msra.mxu0 0
        %847 = vmatprep.subr.bf16.mxu0 0
        %848 = vmatpush1.bf16.msra.mxu0 0
        %849 = vmatprep.subr.bf16.mxu0 0
        %850 = vmatpush1.bf16.msra.mxu0 0
        %851 = vmatprep.subr.bf16.mxu0 0
        %852 = vmatpush1.bf16.msra.mxu0 0
        %853 = vmatprep.subr.bf16.mxu0 0
        %854 = vmatpush1.bf16.msra.mxu0 0
        %855 = vmatprep.subr.bf16.mxu0 0
        %856 = vmatpush1.bf16.msra.mxu0 0
        %857 = vmatprep.mubr.bf16.mxu0 0
        %858 = vmatmul.mubr.bf16.gmra.mrb[0].mxu0 %v824
        %v859 = vpop.f32.mrb[0].mxu0
        %v860 = vadd.f32 %v453, %v859
        %v861 = vpop.f32.mrb[0].mxu0
        %v862 = vadd.f32 %v457, %v861
        %v863 = vpop.f32.mrb[0].mxu0
        %v864 = vpop.f32.mrb[0].mxu0
        %865 = vdwg.mxu0
        %866 = vmatprep.subr.bf16.mxu0 0
        %867 = vmatpush1.bf16.msra.mxu0 %v547
        %868 = vmatprep.subr.bf16.mxu0 0
        %869 = vmatpush1.bf16.msra.mxu0 %v550
        %870 = vmatprep.subr.bf16.mxu0 0
        %871 = vmatpush1.bf16.msra.mxu0 %v553
        %872 = vmatprep.subr.bf16.mxu0 0
        %873 = vmatpush1.bf16.msra.mxu0 %v556
        %874 = vmatprep.subr.bf16.mxu0 0
        %875 = vmatpush1.bf16.msra.mxu0 %v559
        %876 = vmatprep.subr.bf16.mxu0 0
        %877 = vmatpush1.bf16.msra.mxu0 %v562
        %878 = vmatprep.subr.bf16.mxu0 0
        %879 = vmatpush1.bf16.msra.mxu0 %v565
        %880 = vmatprep.subr.bf16.mxu0 0
        %881 = vmatpush1.bf16.msra.mxu0 %v568
        %882 = vmatprep.subr.bf16.mxu0 0
        %883 = vmatpush1.bf16.msra.mxu0 0
        %884 = vmatprep.subr.bf16.mxu0 0
        %885 = vmatpush1.bf16.msra.mxu0 0
        %886 = vmatprep.subr.bf16.mxu0 0
        %887 = vmatpush1.bf16.msra.mxu0 0
        %888 = vmatprep.subr.bf16.mxu0 0
        %889 = vmatpush1.bf16.msra.mxu0 0
        %890 = vmatprep.subr.bf16.mxu0 0
        %891 = vmatpush1.bf16.msra.mxu0 0
        %892 = vmatprep.subr.bf16.mxu0 0
        %893 = vmatpush1.bf16.msra.mxu0 0
        %894 = vmatprep.subr.bf16.mxu0 0
        %895 = vmatpush1.bf16.msra.mxu0 0
        %896 = vmatprep.subr.bf16.mxu0 0
        %897 = vmatpush1.bf16.msra.mxu0 0
        %898 = vmatprep.mubr.bf16.mxu0 0
        %899 = vmatmul.mubr.bf16.gmra.mrb[0].mxu0 %v824
        %v900 = vpop.f32.mrb[0].mxu0
        %v901 = vadd.f32 %v461, %v900
        %v902 = vpop.f32.mrb[0].mxu0
        %v903 = vpop.f32.mrb[0].mxu0
        %v904 = vpop.f32.mrb[0].mxu0
        %905 = vdwg.mxu0
        %v906 = vadd.f32 %v821, %v860
        %v907 = vxor.u32 %v906, 2147483648
        %v908 = vmul.f32 %v907, 1.442695
        %v909 = vpow.pop %v908
        %v910 = vadd.f32 %v909, 1.0
        %v911 = vrcp.pop %v910
        %v912 = vmul.f32 1.0, %v911
        %v913 = vadd.f32 %v822, %v862
        %v914 = vxor.u32 %v913, 2147483648
        %v915 = vmul.f32 %v914, 1.442695
        %v916 = vpow.pop %v915
        %v917 = vadd.f32 %v916, 1.0
        %v918 = vrcp.pop %v917
        %v919 = vmul.f32 1.0, %v918
        %v920 = vmul.f32 %v912, %v901
        %v921 = vadd.f32 %v823, %v920
        %v922 = vtanh.pop %v921
        %v923 = vsub.f32 %v817, %v922
        %v924 = vmul.f32 %v919, %v923
        %v925 = vadd.f32 %v922, %v924
        %926 = vst [vmem:[#allocation2] sm:$0xff] %v925
        %v927 = vpack.c.bf16 %v925, %v925
        %s928 = smul.addr %s816, 4
        %s929 = scalar_lea.vmem %s365, %s928 [#allocation4]
        %930 = vst [vmem:[%s929] sm:$0xf] %v927
        %s931 = sadd.s32 %s21, 3
        %v932 = vld [vmem:[#allocation2] sm:$0xff]
        %s933 = smul.u32 %s931, 3
        %s934 = smul.addr %s933, 8
        %s935 = scalar_lea.vmem %s331, %s934 [#allocation3]
        %v936 = vld [vmem:[%s935] sm:$0xff]
        %v937 = vld [vmem:[%s935 + $0x8] sm:$0xff]
        %v938 = vld [vmem:[%s935 + $0x10] sm:$0xff]
        %v939 = vpack.c.bf16 %v932, %v932
        %940 = vmatprep.subr.bf16.mxu0 %v546
        %941 = vmatpush1.bf16.msra.mxu0 %v545
        %942 = vmatprep.subr.bf16.mxu0 %v549
        %943 = vmatpush1.bf16.msra.mxu0 %v548
        %944 = vmatprep.subr.bf16.mxu0 %v552
        %945 = vmatpush1.bf16.msra.mxu0 %v551
        %946 = vmatprep.subr.bf16.mxu0 %v555
        %947 = vmatpush1.bf16.msra.mxu0 %v554
        %948 = vmatprep.subr.bf16.mxu0 %v558
        %949 = vmatpush1.bf16.msra.mxu0 %v557
        %950 = vmatprep.subr.bf16.mxu0 %v561
        %951 = vmatpush1.bf16.msra.mxu0 %v560
        %952 = vmatprep.subr.bf16.mxu0 %v564
        %953 = vmatpush1.bf16.msra.mxu0 %v563
        %954 = vmatprep.subr.bf16.mxu0 %v567
        %955 = vmatpush1.bf16.msra.mxu0 %v566
        %956 = vmatprep.subr.bf16.mxu0 0
        %957 = vmatpush1.bf16.msra.mxu0 0
        %958 = vmatprep.subr.bf16.mxu0 0
        %959 = vmatpush1.bf16.msra.mxu0 0
        %960 = vmatprep.subr.bf16.mxu0 0
        %961 = vmatpush1.bf16.msra.mxu0 0
        %962 = vmatprep.subr.bf16.mxu0 0
        %963 = vmatpush1.bf16.msra.mxu0 0
        %964 = vmatprep.subr.bf16.mxu0 0
        %965 = vmatpush1.bf16.msra.mxu0 0
        %966 = vmatprep.subr.bf16.mxu0 0
        %967 = vmatpush1.bf16.msra.mxu0 0
        %968 = vmatprep.subr.bf16.mxu0 0
        %969 = vmatpush1.bf16.msra.mxu0 0
        %970 = vmatprep.subr.bf16.mxu0 0
        %971 = vmatpush1.bf16.msra.mxu0 0
        %972 = vmatprep.mubr.bf16.mxu0 0
        %973 = vmatmul.mubr.bf16.gmra.mrb[0].mxu0 %v939
        %v974 = vpop.f32.mrb[0].mxu0
        %v975 = vadd.f32 %v453, %v974
        %v976 = vpop.f32.mrb[0].mxu0
        %v977 = vadd.f32 %v457, %v976
        %v978 = vpop.f32.mrb[0].mxu0
        %v979 = vpop.f32.mrb[0].mxu0
        %980 = vdwg.mxu0
        %981 = vmatprep.subr.bf16.mxu0 0
        %982 = vmatpush1.bf16.msra.mxu0 %v547
        %983 = vmatprep.subr.bf16.mxu0 0
        %984 = vmatpush1.bf16.msra.mxu0 %v550
        %985 = vmatprep.subr.bf16.mxu0 0
        %986 = vmatpush1.bf16.msra.mxu0 %v553
        %987 = vmatprep.subr.bf16.mxu0 0
        %988 = vmatpush1.bf16.msra.mxu0 %v556
        %989 = vmatprep.subr.bf16.mxu0 0
        %990 = vmatpush1.bf16.msra.mxu0 %v559
        %991 = vmatprep.subr.bf16.mxu0 0
        %992 = vmatpush1.bf16.msra.mxu0 %v562
        %993 = vmatprep.subr.bf16.mxu0 0
        %994 = vmatpush1.bf16.msra.mxu0 %v565
        %995 = vmatprep.subr.bf16.mxu0 0
        %996 = vmatpush1.bf16.msra.mxu0 %v568
        %997 = vmatprep.subr.bf16.mxu0 0
        %998 = vmatpush1.bf16.msra.mxu0 0
        %999 = vmatprep.subr.bf16.mxu0 0
        %1000 = vmatpush1.bf16.msra.mxu0 0
        %1001 = vmatprep.subr.bf16.mxu0 0
        %1002 = vmatpush1.bf16.msra.mxu0 0
        %1003 = vmatprep.subr.bf16.mxu0 0
        %1004 = vmatpush1.bf16.msra.mxu0 0
        %1005 = vmatprep.subr.bf16.mxu0 0
        %1006 = vmatpush1.bf16.msra.mxu0 0
        %1007 = vmatprep.subr.bf16.mxu0 0
        %1008 = vmatpush1.bf16.msra.mxu0 0
        %1009 = vmatprep.subr.bf16.mxu0 0
        %1010 = vmatpush1.bf16.msra.mxu0 0
        %1011 = vmatprep.subr.bf16.mxu0 0
        %1012 = vmatpush1.bf16.msra.mxu0 0
        %1013 = vmatprep.mubr.bf16.mxu0 0
        %1014 = vmatmul.mubr.bf16.gmra.mrb[0].mxu0 %v939
        %v1015 = vpop.f32.mrb[0].mxu0
        %v1016 = vadd.f32 %v461, %v1015
        %v1017 = vpop.f32.mrb[0].mxu0
        %v1018 = vpop.f32.mrb[0].mxu0
        %v1019 = vpop.f32.mrb[0].mxu0
        %1020 = vdwg.mxu0
        %v1021 = vadd.f32 %v936, %v975
        %v1022 = vxor.u32 %v1021, 2147483648
        %v1023 = vmul.f32 %v1022, 1.442695
        %v1024 = vpow.pop %v1023
        %v1025 = vadd.f32 %v1024, 1.0
        %v1026 = vrcp.pop %v1025
        %v1027 = vmul.f32 1.0, %v1026
        %v1028 = vadd.f32 %v937, %v977
        %v1029 = vxor.u32 %v1028, 2147483648
        %v1030 = vmul.f32 %v1029, 1.442695
        %v1031 = vpow.pop %v1030
        %v1032 = vadd.f32 %v1031, 1.0
        %v1033 = vrcp.pop %v1032
        %v1034 = vmul.f32 1.0, %v1033
        %v1035 = vmul.f32 %v1027, %v1016
        %v1036 = vadd.f32 %v938, %v1035
        %v1037 = vtanh.pop %v1036
        %v1038 = vsub.f32 %v932, %v1037
        %v1039 = vmul.f32 %v1034, %v1038
        %v1040 = vadd.f32 %v1037, %v1039
        %1041 = vst [vmem:[#allocation2] sm:$0xff] %v1040
        %v1042 = vpack.c.bf16 %v1040, %v1040
        %s1043 = smul.addr %s931, 4
        %s1044 = scalar_lea.vmem %s365, %s1043 [#allocation4]
        %1045 = vst [vmem:[%s1044] sm:$0xf] %v1042
        %s1046 = ssub.s32 4, %s21
        %v1047 = vld [vmem:[#allocation2] sm:$0xff]
        %s1048 = smul.u32 %s1046, 3
        %s1049 = smul.addr %s1048, 8
        %s1050 = scalar_lea.vmem %s331, %s1049 [#allocation3]
        %v1051 = vld [vmem:[%s1050] sm:$0xff]
        %v1052 = vld [vmem:[%s1050 + $0x8] sm:$0xff]
        %v1053 = vld [vmem:[%s1050 + $0x10] sm:$0xff]
        %v1054 = vpack.c.bf16 %v1047, %v1047
        %1055 = vmatprep.subr.bf16.mxu0 %v546
        %1056 = vmatpush1.bf16.msra.mxu0 %v545
        %1057 = vmatprep.subr.bf16.mxu0 %v549
        %1058 = vmatpush1.bf16.msra.mxu0 %v548
        %1059 = vmatprep.subr.bf16.mxu0 %v552
        %1060 = vmatpush1.bf16.msra.mxu0 %v551
        %1061 = vmatprep.subr.bf16.mxu0 %v555
        %1062 = vmatpush1.bf16.msra.mxu0 %v554
        %1063 = vmatprep.subr.bf16.mxu0 %v558
        %1064 = vmatpush1.bf16.msra.mxu0 %v557
        %1065 = vmatprep.subr.bf16.mxu0 %v561
        %1066 = vmatpush1.bf16.msra.mxu0 %v560
        %1067 = vmatprep.subr.bf16.mxu0 %v564
        %1068 = vmatpush1.bf16.msra.mxu0 %v563
        %1069 = vmatprep.subr.bf16.mxu0 %v567
        %1070 = vmatpush1.bf16.msra.mxu0 %v566
        %1071 = vmatprep.subr.bf16.mxu0 0
        %1072 = vmatpush1.bf16.msra.mxu0 0
        %1073 = vmatprep.subr.bf16.mxu0 0
        %1074 = vmatpush1.bf16.msra.mxu0 0
        %1075 = vmatprep.subr.bf16.mxu0 0
        %1076 = vmatpush1.bf16.msra.mxu0 0
        %1077 = vmatprep.subr.bf16.mxu0 0
        %1078 = vmatpush1.bf16.msra.mxu0 0
        %1079 = vmatprep.subr.bf16.mxu0 0
        %1080 = vmatpush1.bf16.msra.mxu0 0
        %1081 = vmatprep.subr.bf16.mxu0 0
        %1082 = vmatpush1.bf16.msra.mxu0 0
        %1083 = vmatprep.subr.bf16.mxu0 0
        %1084 = vmatpush1.bf16.msra.mxu0 0
        %1085 = vmatprep.subr.bf16.mxu0 0
        %1086 = vmatpush1.bf16.msra.mxu0 0
        %1087 = vmatprep.mubr.bf16.mxu0 0
        %1088 = vmatmul.mubr.bf16.gmra.mrb[0].mxu0 %v1054
        %v1089 = vpop.f32.mrb[0].mxu0
        %v1090 = vadd.f32 %v453, %v1089
        %v1091 = vpop.f32.mrb[0].mxu0
        %v1092 = vadd.f32 %v457, %v1091
        %v1093 = vpop.f32.mrb[0].mxu0
        %v1094 = vpop.f32.mrb[0].mxu0
        %1095 = vdwg.mxu0
        %1096 = vmatprep.subr.bf16.mxu0 0
        %1097 = vmatpush1.bf16.msra.mxu0 %v547
        %1098 = vmatprep.subr.bf16.mxu0 0
        %1099 = vmatpush1.bf16.msra.mxu0 %v550
        %1100 = vmatprep.subr.bf16.mxu0 0
        %1101 = vmatpush1.bf16.msra.mxu0 %v553
        %1102 = vmatprep.subr.bf16.mxu0 0
        %1103 = vmatpush1.bf16.msra.mxu0 %v556
        %1104 = vmatprep.subr.bf16.mxu0 0
        %1105 = vmatpush1.bf16.msra.mxu0 %v559
        %1106 = vmatprep.subr.bf16.mxu0 0
        %1107 = vmatpush1.bf16.msra.mxu0 %v562
        %1108 = vmatprep.subr.bf16.mxu0 0
        %1109 = vmatpush1.bf16.msra.mxu0 %v565
        %1110 = vmatprep.subr.bf16.mxu0 0
        %1111 = vmatpush1.bf16.msra.mxu0 %v568
        %1112 = vmatprep.subr.bf16.mxu0 0
        %1113 = vmatpush1.bf16.msra.mxu0 0
        %1114 = vmatprep.subr.bf16.mxu0 0
        %1115 = vmatpush1.bf16.msra.mxu0 0
        %1116 = vmatprep.subr.bf16.mxu0 0
        %1117 = vmatpush1.bf16.msra.mxu0 0
        %1118 = vmatprep.subr.bf16.mxu0 0
        %1119 = vmatpush1.bf16.msra.mxu0 0
        %1120 = vmatprep.subr.bf16.mxu0 0
        %1121 = vmatpush1.bf16.msra.mxu0 0
        %1122 = vmatprep.subr.bf16.mxu0 0
        %1123 = vmatpush1.bf16.msra.mxu0 0
        %1124 = vmatprep.subr.bf16.mxu0 0
        %1125 = vmatpush1.bf16.msra.mxu0 0
        %1126 = vmatprep.subr.bf16.mxu0 0
        %1127 = vmatpush1.bf16.msra.mxu0 0
        %1128 = vmatprep.mubr.bf16.mxu0 0
        %1129 = vmatmul.mubr.bf16.gmra.mrb[0].mxu0 %v1054
        %v1130 = vpop.f32.mrb[0].mxu0
        %v1131 = vadd.f32 %v461, %v1130
        %v1132 = vpop.f32.mrb[0].mxu0
        %v1133 = vpop.f32.mrb[0].mxu0
        %v1134 = vpop.f32.mrb[0].mxu0
        %1135 = vdwg.mxu0
        %v1136 = vadd.f32 %v1051, %v1090
        %v1137 = vxor.u32 %v1136, 2147483648
        %v1138 = vmul.f32 %v1137, 1.442695
        %v1139 = vpow.pop %v1138
        %v1140 = vadd.f32 %v1139, 1.0
        %v1141 = vrcp.pop %v1140
        %v1142 = vmul.f32 1.0, %v1141
        %v1143 = vadd.f32 %v1052, %v1092
        %v1144 = vxor.u32 %v1143, 2147483648
        %v1145 = vmul.f32 %v1144, 1.442695
        %v1146 = vpow.pop %v1145
        %v1147 = vadd.f32 %v1146, 1.0
        %v1148 = vrcp.pop %v1147
        %v1149 = vmul.f32 1.0, %v1148
        %v1150 = vmul.f32 %v1142, %v1131
        %v1151 = vadd.f32 %v1053, %v1150
        %v1152 = vtanh.pop %v1151
        %v1153 = vsub.f32 %v1047, %v1152
        %v1154 = vmul.f32 %v1149, %v1153
        %v1155 = vadd.f32 %v1152, %v1154
        %1156 = vst [vmem:[#allocation2] sm:$0xff] %v1155
        %v1157 = vpack.c.bf16 %v1155, %v1155
        %s1158 = smul.addr %s1046, 4
        %s1159 = scalar_lea.vmem %s365, %s1158 [#allocation4]
        %1160 = vst [vmem:[%s1159] sm:$0xf] %v1157
        %s1161 = smul.u32 %s21, 4294967293
        %s1162 = sadd.s32 %s1161, 5
        %v1163 = vld [vmem:[#allocation2] sm:$0xff]
        %s1164 = smul.u32 %s1162, 3
        %s1165 = smul.addr %s1164, 8
        %s1166 = scalar_lea.vmem %s331, %s1165 [#allocation3]
        %v1167 = vld [vmem:[%s1166] sm:$0xff]
        %v1168 = vld [vmem:[%s1166 + $0x8] sm:$0xff]
        %v1169 = vld [vmem:[%s1166 + $0x10] sm:$0xff]
        %v1170 = vpack.c.bf16 %v1163, %v1163
        %1171 = vmatprep.subr.bf16.mxu0 %v546
        %1172 = vmatpush1.bf16.msra.mxu0 %v545
        %1173 = vmatprep.subr.bf16.mxu0 %v549
        %1174 = vmatpush1.bf16.msra.mxu0 %v548
        %1175 = vmatprep.subr.bf16.mxu0 %v552
        %1176 = vmatpush1.bf16.msra.mxu0 %v551
        %1177 = vmatprep.subr.bf16.mxu0 %v555
        %1178 = vmatpush1.bf16.msra.mxu0 %v554
        %1179 = vmatprep.subr.bf16.mxu0 %v558
        %1180 = vmatpush1.bf16.msra.mxu0 %v557
        %1181 = vmatprep.subr.bf16.mxu0 %v561
        %1182 = vmatpush1.bf16.msra.mxu0 %v560
        %1183 = vmatprep.subr.bf16.mxu0 %v564
        %1184 = vmatpush1.bf16.msra.mxu0 %v563
        %1185 = vmatprep.subr.bf16.mxu0 %v567
        %1186 = vmatpush1.bf16.msra.mxu0 %v566
        %1187 = vmatprep.subr.bf16.mxu0 0
        %1188 = vmatpush1.bf16.msra.mxu0 0
        %1189 = vmatprep.subr.bf16.mxu0 0
        %1190 = vmatpush1.bf16.msra.mxu0 0
        %1191 = vmatprep.subr.bf16.mxu0 0
        %1192 = vmatpush1.bf16.msra.mxu0 0
        %1193 = vmatprep.subr.bf16.mxu0 0
        %1194 = vmatpush1.bf16.msra.mxu0 0
        %1195 = vmatprep.subr.bf16.mxu0 0
        %1196 = vmatpush1.bf16.msra.mxu0 0
        %1197 = vmatprep.subr.bf16.mxu0 0
        %1198 = vmatpush1.bf16.msra.mxu0 0
        %1199 = vmatprep.subr.bf16.mxu0 0
        %1200 = vmatpush1.bf16.msra.mxu0 0
        %1201 = vmatprep.subr.bf16.mxu0 0
        %1202 = vmatpush1.bf16.msra.mxu0 0
        %1203 = vmatprep.mubr.bf16.mxu0 0
        %1204 = vmatmul.mubr.bf16.gmra.mrb[0].mxu0 %v1170
        %v1205 = vpop.f32.mrb[0].mxu0
        %v1206 = vadd.f32 %v453, %v1205
        %v1207 = vpop.f32.mrb[0].mxu0
        %v1208 = vadd.f32 %v457, %v1207
        %v1209 = vpop.f32.mrb[0].mxu0
        %v1210 = vpop.f32.mrb[0].mxu0
        %1211 = vdwg.mxu0
        %1212 = vmatprep.subr.bf16.mxu0 0
        %1213 = vmatpush1.bf16.msra.mxu0 %v547
        %1214 = vmatprep.subr.bf16.mxu0 0
        %1215 = vmatpush1.bf16.msra.mxu0 %v550
        %1216 = vmatprep.subr.bf16.mxu0 0
        %1217 = vmatpush1.bf16.msra.mxu0 %v553
        %1218 = vmatprep.subr.bf16.mxu0 0
        %1219 = vmatpush1.bf16.msra.mxu0 %v556
        %1220 = vmatprep.subr.bf16.mxu0 0
        %1221 = vmatpush1.bf16.msra.mxu0 %v559
        %1222 = vmatprep.subr.bf16.mxu0 0
        %1223 = vmatpush1.bf16.msra.mxu0 %v562
        %1224 = vmatprep.subr.bf16.mxu0 0
        %1225 = vmatpush1.bf16.msra.mxu0 %v565
        %1226 = vmatprep.subr.bf16.mxu0 0
        %1227 = vmatpush1.bf16.msra.mxu0 %v568
        %1228 = vmatprep.subr.bf16.mxu0 0
        %1229 = vmatpush1.bf16.msra.mxu0 0
        %1230 = vmatprep.subr.bf16.mxu0 0
        %1231 = vmatpush1.bf16.msra.mxu0 0
        %1232 = vmatprep.subr.bf16.mxu0 0
        %1233 = vmatpush1.bf16.msra.mxu0 0
        %1234 = vmatprep.subr.bf16.mxu0 0
        %1235 = vmatpush1.bf16.msra.mxu0 0
        %1236 = vmatprep.subr.bf16.mxu0 0
        %1237 = vmatpush1.bf16.msra.mxu0 0
        %1238 = vmatprep.subr.bf16.mxu0 0
        %1239 = vmatpush1.bf16.msra.mxu0 0
        %1240 = vmatprep.subr.bf16.mxu0 0
        %1241 = vmatpush1.bf16.msra.mxu0 0
        %1242 = vmatprep.subr.bf16.mxu0 0
        %1243 = vmatpush1.bf16.msra.mxu0 0
        %1244 = vmatprep.mubr.bf16.mxu0 0
        %1245 = vmatmul.mubr.bf16.gmra.mrb[0].mxu0 %v1170
        %v1246 = vpop.f32.mrb[0].mxu0
        %v1247 = vadd.f32 %v461, %v1246
        %v1248 = vpop.f32.mrb[0].mxu0
        %v1249 = vpop.f32.mrb[0].mxu0
        %v1250 = vpop.f32.mrb[0].mxu0
        %1251 = vdwg.mxu0
        %v1252 = vadd.f32 %v1167, %v1206
        %v1253 = vxor.u32 %v1252, 2147483648
        %v1254 = vmul.f32 %v1253, 1.442695
        %v1255 = vpow.pop %v1254
        %v1256 = vadd.f32 %v1255, 1.0
        %v1257 = vrcp.pop %v1256
        %v1258 = vmul.f32 1.0, %v1257
        %v1259 = vadd.f32 %v1168, %v1208
        %v1260 = vxor.u32 %v1259, 2147483648
        %v1261 = vmul.f32 %v1260, 1.442695
        %v1262 = vpow.pop %v1261
        %v1263 = vadd.f32 %v1262, 1.0
        %v1264 = vrcp.pop %v1263
        %v1265 = vmul.f32 1.0, %v1264
        %v1266 = vmul.f32 %v1258, %v1247
        %v1267 = vadd.f32 %v1169, %v1266
        %v1268 = vtanh.pop %v1267
        %v1269 = vsub.f32 %v1163, %v1268
        %v1270 = vmul.f32 %v1265, %v1269
        %v1271 = vadd.f32 %v1268, %v1270
        %1272 = vst [vmem:[#allocation2] sm:$0xff] %v1271
        %v1273 = vpack.c.bf16 %v1271, %v1271
        %s1274 = smul.addr %s1162, 4
        %s1275 = scalar_lea.vmem %s365, %s1274 [#allocation4]
        %1276 = vst [vmem:[%s1275] sm:$0xf] %v1273
        %s1277 = smul.u32 %s21, 4294967291
        %s1278 = sadd.s32 %s1277, 6
        %v1279 = vld [vmem:[#allocation2] sm:$0xff]
        %s1280 = smul.u32 %s1278, 3
        %s1281 = smul.addr %s1280, 8
        %s1282 = scalar_lea.vmem %s331, %s1281 [#allocation3]
        %v1283 = vld [vmem:[%s1282] sm:$0xff]
        %v1284 = vld [vmem:[%s1282 + $0x8] sm:$0xff]
        %v1285 = vld [vmem:[%s1282 + $0x10] sm:$0xff]
        %v1286 = vpack.c.bf16 %v1279, %v1279
        %1287 = vmatprep.subr.bf16.mxu0 %v546
        %1288 = vmatpush1.bf16.msra.mxu0 %v545
        %1289 = vmatprep.subr.bf16.mxu0 %v549
        %1290 = vmatpush1.bf16.msra.mxu0 %v548
        %1291 = vmatprep.subr.bf16.mxu0 %v552
        %1292 = vmatpush1.bf16.msra.mxu0 %v551
        %1293 = vmatprep.subr.bf16.mxu0 %v555
        %1294 = vmatpush1.bf16.msra.mxu0 %v554
        %1295 = vmatprep.subr.bf16.mxu0 %v558
        %1296 = vmatpush1.bf16.msra.mxu0 %v557
        %1297 = vmatprep.subr.bf16.mxu0 %v561
        %1298 = vmatpush1.bf16.msra.mxu0 %v560
        %1299 = vmatprep.subr.bf16.mxu0 %v564
        %1300 = vmatpush1.bf16.msra.mxu0 %v563
        %1301 = vmatprep.subr.bf16.mxu0 %v567
        %1302 = vmatpush1.bf16.msra.mxu0 %v566
        %1303 = vmatprep.subr.bf16.mxu0 0
        %1304 = vmatpush1.bf16.msra.mxu0 0
        %1305 = vmatprep.subr.bf16.mxu0 0
        %1306 = vmatpush1.bf16.msra.mxu0 0
        %1307 = vmatprep.subr.bf16.mxu0 0
        %1308 = vmatpush1.bf16.msra.mxu0 0
        %1309 = vmatprep.subr.bf16.mxu0 0
        %1310 = vmatpush1.bf16.msra.mxu0 0
        %1311 = vmatprep.subr.bf16.mxu0 0
        %1312 = vmatpush1.bf16.msra.mxu0 0
        %1313 = vmatprep.subr.bf16.mxu0 0
        %1314 = vmatpush1.bf16.msra.mxu0 0
        %1315 = vmatprep.subr.bf16.mxu0 0
        %1316 = vmatpush1.bf16.msra.mxu0 0
        %1317 = vmatprep.subr.bf16.mxu0 0
        %1318 = vmatpush1.bf16.msra.mxu0 0
        %1319 = vmatprep.mubr.bf16.mxu0 0
        %1320 = vmatmul.mubr.bf16.gmra.mrb[0].mxu0 %v1286
        %v1321 = vpop.f32.mrb[0].mxu0
        %v1322 = vadd.f32 %v453, %v1321
        %v1323 = vpop.f32.mrb[0].mxu0
        %v1324 = vadd.f32 %v457, %v1323
        %v1325 = vpop.f32.mrb[0].mxu0
        %v1326 = vpop.f32.mrb[0].mxu0
        %1327 = vdwg.mxu0
        %1328 = vmatprep.subr.bf16.mxu0 0
        %1329 = vmatpush1.bf16.msra.mxu0 %v547
        %1330 = vmatprep.subr.bf16.mxu0 0
        %1331 = vmatpush1.bf16.msra.mxu0 %v550
        %1332 = vmatprep.subr.bf16.mxu0 0
        %1333 = vmatpush1.bf16.msra.mxu0 %v553
        %1334 = vmatprep.subr.bf16.mxu0 0
        %1335 = vmatpush1.bf16.msra.mxu0 %v556
        %1336 = vmatprep.subr.bf16.mxu0 0
        %1337 = vmatpush1.bf16.msra.mxu0 %v559
        %1338 = vmatprep.subr.bf16.mxu0 0
        %1339 = vmatpush1.bf16.msra.mxu0 %v562
        %1340 = vmatprep.subr.bf16.mxu0 0
        %1341 = vmatpush1.bf16.msra.mxu0 %v565
        %1342 = vmatprep.subr.bf16.mxu0 0
        %1343 = vmatpush1.bf16.msra.mxu0 %v568
        %1344 = vmatprep.subr.bf16.mxu0 0
        %1345 = vmatpush1.bf16.msra.mxu0 0
        %1346 = vmatprep.subr.bf16.mxu0 0
        %1347 = vmatpush1.bf16.msra.mxu0 0
        %1348 = vmatprep.subr.bf16.mxu0 0
        %1349 = vmatpush1.bf16.msra.mxu0 0
        %1350 = vmatprep.subr.bf16.mxu0 0
        %1351 = vmatpush1.bf16.msra.mxu0 0
        %1352 = vmatprep.subr.bf16.mxu0 0
        %1353 = vmatpush1.bf16.msra.mxu0 0
        %1354 = vmatprep.subr.bf16.mxu0 0
        %1355 = vmatpush1.bf16.msra.mxu0 0
        %1356 = vmatprep.subr.bf16.mxu0 0
        %1357 = vmatpush1.bf16.msra.mxu0 0
        %1358 = vmatprep.subr.bf16.mxu0 0
        %1359 = vmatpush1.bf16.msra.mxu0 0
        %1360 = vmatprep.mubr.bf16.mxu0 0
        %1361 = vmatmul.mubr.bf16.gmra.mrb[0].mxu0 %v1286
        %v1362 = vpop.f32.mrb[0].mxu0
        %v1363 = vadd.f32 %v461, %v1362
        %v1364 = vpop.f32.mrb[0].mxu0
        %v1365 = vpop.f32.mrb[0].mxu0
        %v1366 = vpop.f32.mrb[0].mxu0
        %1367 = vdwg.mxu0
        %v1368 = vadd.f32 %v1283, %v1322
        %v1369 = vxor.u32 %v1368, 2147483648
        %v1370 = vmul.f32 %v1369, 1.442695
        %v1371 = vpow.pop %v1370
        %v1372 = vadd.f32 %v1371, 1.0
        %v1373 = vrcp.pop %v1372
        %v1374 = vmul.f32 1.0, %v1373
        %v1375 = vadd.f32 %v1284, %v1324
        %v1376 = vxor.u32 %v1375, 2147483648
        %v1377 = vmul.f32 %v1376, 1.442695
        %v1378 = vpow.pop %v1377
        %v1379 = vadd.f32 %v1378, 1.0
        %v1380 = vrcp.pop %v1379
        %v1381 = vmul.f32 1.0, %v1380
        %v1382 = vmul.f32 %v1374, %v1363
        %v1383 = vadd.f32 %v1285, %v1382
        %v1384 = vtanh.pop %v1383
        %v1385 = vsub.f32 %v1279, %v1384
        %v1386 = vmul.f32 %v1381, %v1385
        %v1387 = vadd.f32 %v1384, %v1386
        %1388 = vst [vmem:[#allocation2] sm:$0xff] %v1387
        %v1389 = vpack.c.bf16 %v1387, %v1387
        %s1390 = smul.addr %s1278, 4
        %s1391 = scalar_lea.vmem %s365, %s1390 [#allocation4]
        %1392 = vst [vmem:[%s1391] sm:$0xf] %v1389
        %s1393 = smul.u32 %s21, 4294967289
        %s1394 = sadd.s32 %s1393, 7
        %v1395 = vld [vmem:[#allocation2] sm:$0xff]
        %s1396 = smul.u32 %s1394, 3
        %s1397 = smul.addr %s1396, 8
        %s1398 = scalar_lea.vmem %s331, %s1397 [#allocation3]
        %v1399 = vld [vmem:[%s1398] sm:$0xff]
        %v1400 = vld [vmem:[%s1398 + $0x8] sm:$0xff]
        %v1401 = vld [vmem:[%s1398 + $0x10] sm:$0xff]
        %v1402 = vpack.c.bf16 %v1395, %v1395
        %1403 = vmatprep.subr.bf16.mxu0 %v546
        %1404 = vmatpush1.bf16.msra.mxu0 %v545
        %1405 = vmatprep.subr.bf16.mxu0 %v549
        %1406 = vmatpush1.bf16.msra.mxu0 %v548
        %1407 = vmatprep.subr.bf16.mxu0 %v552
        %1408 = vmatpush1.bf16.msra.mxu0 %v551
        %1409 = vmatprep.subr.bf16.mxu0 %v555
        %1410 = vmatpush1.bf16.msra.mxu0 %v554
        %1411 = vmatprep.subr.bf16.mxu0 %v558
        %1412 = vmatpush1.bf16.msra.mxu0 %v557
        %1413 = vmatprep.subr.bf16.mxu0 %v561
        %1414 = vmatpush1.bf16.msra.mxu0 %v560
        %1415 = vmatprep.subr.bf16.mxu0 %v564
        %1416 = vmatpush1.bf16.msra.mxu0 %v563
        %1417 = vmatprep.subr.bf16.mxu0 %v567
        %1418 = vmatpush1.bf16.msra.mxu0 %v566
        %1419 = vmatprep.subr.bf16.mxu0 0
        %1420 = vmatpush1.bf16.msra.mxu0 0
        %1421 = vmatprep.subr.bf16.mxu0 0
        %1422 = vmatpush1.bf16.msra.mxu0 0
        %1423 = vmatprep.subr.bf16.mxu0 0
        %1424 = vmatpush1.bf16.msra.mxu0 0
        %1425 = vmatprep.subr.bf16.mxu0 0
        %1426 = vmatpush1.bf16.msra.mxu0 0
        %1427 = vmatprep.subr.bf16.mxu0 0
        %1428 = vmatpush1.bf16.msra.mxu0 0
        %1429 = vmatprep.subr.bf16.mxu0 0
        %1430 = vmatpush1.bf16.msra.mxu0 0
        %1431 = vmatprep.subr.bf16.mxu0 0
        %1432 = vmatpush1.bf16.msra.mxu0 0
        %1433 = vmatprep.subr.bf16.mxu0 0
        %1434 = vmatpush1.bf16.msra.mxu0 0
        %1435 = vmatprep.mubr.bf16.mxu0 0
        %1436 = vmatmul.mubr.bf16.gmra.mrb[0].mxu0 %v1402
        %v1437 = vpop.f32.mrb[0].mxu0
        %v1438 = vadd.f32 %v453, %v1437
        %v1439 = vpop.f32.mrb[0].mxu0
        %v1440 = vadd.f32 %v457, %v1439
        %v1441 = vpop.f32.mrb[0].mxu0
        %v1442 = vpop.f32.mrb[0].mxu0
        %1443 = vdwg.mxu0
        %1444 = vmatprep.subr.bf16.mxu0 0
        %1445 = vmatpush1.bf16.msra.mxu0 %v547
        %1446 = vmatprep.subr.bf16.mxu0 0
        %1447 = vmatpush1.bf16.msra.mxu0 %v550
        %1448 = vmatprep.subr.bf16.mxu0 0
        %1449 = vmatpush1.bf16.msra.mxu0 %v553
        %1450 = vmatprep.subr.bf16.mxu0 0
        %1451 = vmatpush1.bf16.msra.mxu0 %v556
        %1452 = vmatprep.subr.bf16.mxu0 0
        %1453 = vmatpush1.bf16.msra.mxu0 %v559
        %1454 = vmatprep.subr.bf16.mxu0 0
        %1455 = vmatpush1.bf16.msra.mxu0 %v562
        %1456 = vmatprep.subr.bf16.mxu0 0
        %1457 = vmatpush1.bf16.msra.mxu0 %v565
        %1458 = vmatprep.subr.bf16.mxu0 0
        %1459 = vmatpush1.bf16.msra.mxu0 %v568
        %1460 = vmatprep.subr.bf16.mxu0 0
        %1461 = vmatpush1.bf16.msra.mxu0 0
        %1462 = vmatprep.subr.bf16.mxu0 0
        %1463 = vmatpush1.bf16.msra.mxu0 0
        %1464 = vmatprep.subr.bf16.mxu0 0
        %1465 = vmatpush1.bf16.msra.mxu0 0
        %1466 = vmatprep.subr.bf16.mxu0 0
        %1467 = vmatpush1.bf16.msra.mxu0 0
        %1468 = vmatprep.subr.bf16.mxu0 0
        %1469 = vmatpush1.bf16.msra.mxu0 0
        %1470 = vmatprep.subr.bf16.mxu0 0
        %1471 = vmatpush1.bf16.msra.mxu0 0
        %1472 = vmatprep.subr.bf16.mxu0 0
        %1473 = vmatpush1.bf16.msra.mxu0 0
        %1474 = vmatprep.subr.bf16.mxu0 0
        %1475 = vmatpush1.bf16.msra.mxu0 0
        %1476 = vmatprep.mubr.bf16.mxu0 0
        %1477 = vmatmul.mubr.bf16.gmra.mrb[0].mxu0 %v1402
        %v1478 = vpop.f32.mrb[0].mxu0
        %v1479 = vadd.f32 %v461, %v1478
        %v1480 = vpop.f32.mrb[0].mxu0
        %v1481 = vpop.f32.mrb[0].mxu0
        %v1482 = vpop.f32.mrb[0].mxu0
        %1483 = vdwg.mxu0
        %v1484 = vadd.f32 %v1399, %v1438
        %v1485 = vxor.u32 %v1484, 2147483648
        %v1486 = vmul.f32 %v1485, 1.442695
        %v1487 = vpow.pop %v1486
        %v1488 = vadd.f32 %v1487, 1.0
        %v1489 = vrcp.pop %v1488
        %v1490 = vmul.f32 1.0, %v1489
        %v1491 = vadd.f32 %v1400, %v1440
        %v1492 = vxor.u32 %v1491, 2147483648
        %v1493 = vmul.f32 %v1492, 1.442695
        %v1494 = vpow.pop %v1493
        %v1495 = vadd.f32 %v1494, 1.0
        %v1496 = vrcp.pop %v1495
        %v1497 = vmul.f32 1.0, %v1496
        %v1498 = vmul.f32 %v1490, %v1479
        %v1499 = vadd.f32 %v1401, %v1498
        %v1500 = vtanh.pop %v1499
        %v1501 = vsub.f32 %v1395, %v1500
        %v1502 = vmul.f32 %v1497, %v1501
        %v1503 = vadd.f32 %v1500, %v1502
        %1504 = vst [vmem:[#allocation2] sm:$0xff] %v1503
        %v1505 = vpack.c.bf16 %v1503, %v1503
        %s1506 = smul.addr %s1394, 4
        %s1507 = scalar_lea.vmem %s365, %s1506 [#allocation4]
        %1508 = vst [vmem:[%s1507] sm:$0xf] %v1505
        %p1509 = scmp.eq.s32.totalorder %s22, 1
        // Predicated region
        $region64: #{generator_forward.10} parent=54 // pred_check
          %p1510 = pneg %p1509
        $region65: #{generator_forward.10} parent=54 // pred_check_branch
          %1512 = sbr.rel (%p1510) target = $region67
        $region66: #{generator_forward.10} parent=54 // pred_region
          %v1513 = vld [vmem:[#allocation2] sm:$0xff]
          %1514 = vst [vmem:[%s399] sm:$0xff] %v1513
        $region67: #{generator_forward.10} parent=54 // pred_fallthru
          _
        %s1515 = sand.u32 %s161, 1
        %s1516 = sand.u32 %s161, 1
        %s1517 = smul.addr %s1516, 32
        %s1518 = scalar_lea.vmem [#allocation4], %s1517
        %p1519 = scmp.lt.s32.totalorder %s21, 1
        %s1520 = scalar_select %p1519, %s21, 1
        %s1521 = smul.addr %s1520, 8
        %s1522 = scalar_lea.vmem %s5, %s1521
        // Predicated region
        $region68: #{generator_forward.10} parent=54 // pred_check
          %p1523 = pneg %p171
        $region69: #{generator_forward.10} parent=54 // pred_check_branch
          %1525 = sbr.rel (%p1523) target = $region71
        $region70: #{generator_forward.10} parent=54 // pred_region
          %s1526 = smul.u32 %s22, 2
          %s1527 = ssub.s32 1, %s1526
          %s1528 = smul.u32 %s21, %s1527
          %s1529 = sadd.s32 %s22, %s1528
          %s1530 = smul.u32 8, %s1529
          %s1531 = smul.addr %s1530, 2
          %s1532 = sadd.s32 %s21, %s1531
          %s1533 = smul.addr %s1532, 4
          %s1534 = scalar_lea.vmem %s4, %s1533
          // Predicated region
          $region72: #{generator_forward.10} parent=70 // pred_check
            _
          $region73: #{generator_forward.10} parent=70 // pred_check_branch
            %1536 = sbr.rel (0) target = $region75
          $region74: #{generator_forward.10} parent=70 // pred_region
            // Predicated region
            $region76: #{generator_forward.10} parent=74 // pred_check
              _
            $region77: #{generator_forward.10} parent=74 // pred_check_branch
              %1538 = sbr.rel target = $region79
            $region78: #{generator_forward.10} parent=74 // pred_region
              // Predicated region
              $region91: #{generator_forward.10} parent=78 // pred_check
                _
              $region92: #{generator_forward.10} parent=78 // pred_check_branch
                %1567 = sbr.rel (0) target = $region94
              $region93: #{generator_forward.10} parent=78 // pred_region
                loop: start=0, step=1, limit=1
                $region95: #{generator_forward.10} parent=93 // loop_pre_header
                  _
                $region96: #{generator_forward.10} parent=93 // loop_header
                  %s1569 = sphi 0, %s1573
                  %p1570 = scmp.ge.s32.totalorder %s1569, 1
                  %s1574 = sphi %s1518, %s1518
                  %s1575 = sphi %s1534, %s1534
                $region97: #{generator_forward.10} parent=93 // loop_header_branch
                  %1572 = sbr.rel (%p1570) target = $region101
                $region98: #{generator_forward.10} parent=93 // loop_body
                  _
                $region99: #{generator_forward.10} parent=93 // loop_footer
                  %s1573 = sadd.s32 1, %s1569
                $region100: #{generator_forward.10} parent=93 // loop_footer_branch
                  %1568 = sbr.rel target = $region96
                $region101: #{generator_forward.10} parent=93 // loop_exit
                  _
                loop: start=0, step=1, limit=1
                $region102: #{generator_forward.10} parent=93 // loop_pre_header
                  _
                $region103: #{generator_forward.10} parent=93 // loop_header
                  %s1578 = sphi 0, %s1582
                  %p1579 = scmp.ge.s32.totalorder %s1578, 1
                  %s1583 = sphi %s1518, %s1518
                  %s1584 = sphi %s1534, %s1534
                $region104: #{generator_forward.10} parent=93 // loop_header_branch
                  %1581 = sbr.rel (%p1579) target = $region108
                $region105: #{generator_forward.10} parent=93 // loop_body
                  %v1585 = vld [vmem:[%s1583] sm:$0xf]
                  %1586 = vst [vmem:[%s1584] sm:$0xf] %v1585
                  %v1587 = vld [vmem:[%s1583 + $0x4] sm:$0xf]
                  %1588 = vst [vmem:[%s1584 + $0x8] sm:$0xf] %v1587
                  %v1589 = vld [vmem:[%s1583 + $0x8] sm:$0xf]
                  %1590 = vst [vmem:[%s1584 + $0x10] sm:$0xf] %v1589
                  %v1591 = vld [vmem:[%s1583 + $0xc] sm:$0xf]
                  %1592 = vst [vmem:[%s1584 + $0x18] sm:$0xf] %v1591
                  %v1593 = vld [vmem:[%s1583 + $0x10] sm:$0xf]
                  %1594 = vst [vmem:[%s1584 + $0x20] sm:$0xf] %v1593
                  %v1595 = vld [vmem:[%s1583 + $0x14] sm:$0xf]
                  %1596 = vst [vmem:[%s1584 + $0x28] sm:$0xf] %v1595
                  %v1597 = vld [vmem:[%s1583 + $0x18] sm:$0xf]
                  %1598 = vst [vmem:[%s1584 + $0x30] sm:$0xf] %v1597
                  %v1599 = vld [vmem:[%s1583 + $0x1c] sm:$0xf]
                  %1600 = vst [vmem:[%s1584 + $0x38] sm:$0xf] %v1599
                $region106: #{generator_forward.10} parent=93 // loop_footer
                  %s1582 = sadd.s32 1, %s1578
                $region107: #{generator_forward.10} parent=93 // loop_footer_branch
                  %1577 = sbr.rel target = $region103
                $region108: #{generator_forward.10} parent=93 // loop_exit
                  _
              $region94: #{generator_forward.10} parent=78 // pred_fallthru
                _
            $region79: #{generator_forward.10} parent=74 // pred_fallthru
              _
            // Predicated region
            $region80: #{generator_forward.10} parent=74 // pred_check
              _
            $region81: #{generator_forward.10} parent=74 // pred_check_branch
              %1540 = sbr.rel (0) target = $region83
            $region82: #{generator_forward.10} parent=74 // pred_region
              loop: start=0, step=1, limit=1
              $region84: #{generator_forward.10} parent=82 // loop_pre_header
                _
              $region85: #{generator_forward.10} parent=82 // loop_header
                %s1543 = sphi 0, %s1547
                %p1544 = scmp.ge.s32.totalorder %s1543, 1
                %s1548 = sphi %s1518, %s1518
                %s1549 = sphi %s1534, %s1534
              $region86: #{generator_forward.10} parent=82 // loop_header_branch
                %1546 = sbr.rel (%p1544) target = $region90
              $region87: #{generator_forward.10} parent=82 // loop_body
                %v1550 = vld [vmem:[%s1548] sm:$0xf]
                %1551 = vst [vmem:[%s1549] sm:$0xf] %v1550
                %v1552 = vld [vmem:[%s1548 + $0x4] sm:$0xf]
                %1553 = vst [vmem:[%s1549 + $0x8] sm:$0xf] %v1552
                %v1554 = vld [vmem:[%s1548 + $0x8] sm:$0xf]
                %1555 = vst [vmem:[%s1549 + $0x10] sm:$0xf] %v1554
                %v1556 = vld [vmem:[%s1548 + $0xc] sm:$0xf]
                %1557 = vst [vmem:[%s1549 + $0x18] sm:$0xf] %v1556
                %v1558 = vld [vmem:[%s1548 + $0x10] sm:$0xf]
                %1559 = vst [vmem:[%s1549 + $0x20] sm:$0xf] %v1558
                %v1560 = vld [vmem:[%s1548 + $0x14] sm:$0xf]
                %1561 = vst [vmem:[%s1549 + $0x28] sm:$0xf] %v1560
                %v1562 = vld [vmem:[%s1548 + $0x18] sm:$0xf]
                %1563 = vst [vmem:[%s1549 + $0x30] sm:$0xf] %v1562
                %v1564 = vld [vmem:[%s1548 + $0x1c] sm:$0xf]
                %1565 = vst [vmem:[%s1549 + $0x38] sm:$0xf] %v1564
              $region88: #{generator_forward.10} parent=82 // loop_footer
                %s1547 = sadd.s32 1, %s1543
              $region89: #{generator_forward.10} parent=82 // loop_footer_branch
                %1542 = sbr.rel target = $region85
              $region90: #{generator_forward.10} parent=82 // loop_exit
                _
            $region83: #{generator_forward.10} parent=74 // pred_fallthru
              _
          $region75: #{generator_forward.10} parent=70 // pred_fallthru
            _
          %1601 = vnop
        $region71: #{generator_forward.10} parent=54 // pred_fallthru
          _
        // Predicated region
        $region109: #{generator_forward.10} parent=54 // pred_check
          %p1602 = pneg %p197
        $region110: #{generator_forward.10} parent=54 // pred_check_branch
          %1604 = sbr.rel (%p1602) target = $region112
        $region111: #{generator_forward.10} parent=54 // pred_region
          _
        $region112: #{generator_forward.10} parent=54 // pred_fallthru
          _
      $region55: #{generator_forward.10} parent=5 // pred_fallthru
        _
      %p1605 = scmp.le.s32.totalorder 2, %s12
      // Predicated region
      $region113: #{generator_forward.10} parent=5 // pred_check
        %p1606 = pneg %p1605
      $region114: #{generator_forward.10} parent=5 // pred_check_branch
        %1608 = sbr.rel (%p1606) target = $region116
      $region115: #{generator_forward.10} parent=5 // pred_region
        %s1609 = ssub.s32 %s12, 2
        // Predicated region
        $region117: #{generator_forward.10} parent=115 // pred_check
          %p1610 = pneg %p177
        $region118: #{generator_forward.10} parent=115 // pred_check_branch
          %1612 = sbr.rel (%p1610) target = $region120
        $region119: #{generator_forward.10} parent=115 // pred_region
          %s1613 = sand.u32 %s162, 1
          %s1614 = sand.u32 %s162, 1
          %s1615 = smul.addr %s1614, 32
          %s1616 = scalar_lea.vmem [#allocation4], %s1615
        $region120: #{generator_forward.10} parent=115 // pred_fallthru
          _
        // Predicated region
        $region121: #{generator_forward.10} parent=115 // pred_check
          %p1617 = pneg %p203
        $region122: #{generator_forward.10} parent=115 // pred_check_branch
          %1619 = sbr.rel (%p1617) target = $region124
        $region123: #{generator_forward.10} parent=115 // pred_region
          %p1620 = scmp.lt.s32.totalorder %s23, 1
          %s1621 = scalar_select %p1620, %s23, 1
          %s1622 = smul.addr %s1621, 8
          %s1623 = scalar_lea.vmem %s5, %s1622
        $region124: #{generator_forward.10} parent=115 // pred_fallthru
          _
      $region116: #{generator_forward.10} parent=5 // pred_fallthru
        _
    $region6: #{generator_forward.10} parent=1 // loop_footer
      %s16 = sadd.s32 1, %s12
    $region7: #{generator_forward.10} parent=1 // loop_footer_branch
      %11 = sbr.rel target = $region3
    $region8: #{generator_forward.10} parent=1 // loop_exit
      _

// kernel: generator_forward.15
$region0: #{generator_forward.15}
  #allocation0 [shape = 'u32[]', space=smem, size = 0x4, offset = 0x4, fixed_abs, tag = 'smem constant byte address 0x4 - core index']
  #allocation1 [shape = 'u32[144,128]{1,0:T(1,128)}', space=vmem, size = 0x12000, scoped, tag = 'internal scratch']
  #allocation2 [shape = 'f32[128,256]{1,0:T(8,128)}', space=vmem, size = 0x20000, scoped, tag = 'scratch operand']
  %s0 = inlined_call_operand.vmem [shape: bf16[128,256], index: 0, kind: input, shape index: {}]
  %s1 = inlined_call_operand.vmem [shape: bf16[256,256], index: 1, kind: input, shape index: {}]
  %s2 = inlined_call_operand.vmem [shape: f32[1,256], index: 2, kind: input, shape index: {}]
  %s3 = inlined_call_operand.hbm [shape: f32[128,256], index: 3, kind: output, shape index: {}]
  %s4 = sld [smem:[#allocation0]]
  $region30: #{generator_forward.15} parent=0
    _
  %s6 = ssub.s32 1, %s4
  %s7 = scalar_select 0, %s6, %s4
  $region1: #{generator_forward.15} parent=0
    #allocation3 [shape = 'u8[131072]{0}', space=vmem, size = 0x20000, scoped, tag = 'output window, operand 0, single buffered']
    #allocation4 [shape = 's32[1]{0}', space=sflag, size = 0x4, scoped, tag = 'scoped memory for generator_forward.15']
    %8 = vsyncpa [#allocation4], 0
    // Predicated region
    $region2: #{generator_forward.15} parent=1 // pred_check
      _
    $region3: #{generator_forward.15} parent=1 // pred_check_branch
      %10 = sbr.rel (0) target = $region5
    $region4: #{generator_forward.15} parent=1 // pred_region
      _
    $region5: #{generator_forward.15} parent=1 // pred_fallthru
      _
    // Predicated region
    $region6: #{generator_forward.15} parent=1 // pred_check
      _
    $region7: #{generator_forward.15} parent=1 // pred_check_branch
      %12 = sbr.rel (0) target = $region9
    $region8: #{generator_forward.15} parent=1 // pred_region
      _
    $region9: #{generator_forward.15} parent=1 // pred_fallthru
      _
    // Predicated region
    $region10: #{generator_forward.15} parent=1 // pred_check
      _
    $region11: #{generator_forward.15} parent=1 // pred_check_branch
      %14 = sbr.rel (0) target = $region13
    $region12: #{generator_forward.15} parent=1 // pred_region
      _
    $region13: #{generator_forward.15} parent=1 // pred_fallthru
      _
    %p15 = scmp.eq.s32.totalorder 0, 0
    // Predicated region
    $region14: #{generator_forward.15} parent=1 // pred_check
      %p16 = pneg %p15
    $region15: #{generator_forward.15} parent=1 // pred_check_branch
      %18 = sbr.rel (%p16) target = $region17
    $region16: #{generator_forward.15} parent=1 // pred_region
      %19 = vst [vmem:[#allocation2] sm:$0xff] 0.0
      %20 = vst [vmem:[#allocation2 + $0x8] sm:$0xff] 0.0
      %21 = vst [vmem:[#allocation2 + $0x10] sm:$0xff] 0.0
      %22 = vst [vmem:[#allocation2 + $0x18] sm:$0xff] 0.0
      %23 = vst [vmem:[#allocation2 + $0x20] sm:$0xff] 0.0
      %24 = vst [vmem:[#allocation2 + $0x28] sm:$0xff] 0.0
      %25 = vst [vmem:[#allocation2 + $0x30] sm:$0xff] 0.0
      %26 = vst [vmem:[#allocation2 + $0x38] sm:$0xff] 0.0
      %27 = vst [vmem:[#allocation2 + $0x40] sm:$0xff] 0.0
      %28 = vst [vmem:[#allocation2 + $0x48] sm:$0xff] 0.0
      %29 = vst [vmem:[#allocation2 + $0x50] sm:$0xff] 0.0
      %30 = vst [vmem:[#allocation2 + $0x58] sm:$0xff] 0.0
      %31 = vst [vmem:[#allocation2 + $0x60] sm:$0xff] 0.0
      %32 = vst [vmem:[#allocation2 + $0x68] sm:$0xff] 0.0
      %33 = vst [vmem:[#allocation2 + $0x70] sm:$0xff] 0.0
      %34 = vst [vmem:[#allocation2 + $0x78] sm:$0xff] 0.0
      %35 = vst [vmem:[#allocation2 + $0x80] sm:$0xff] 0.0
      %36 = vst [vmem:[#allocation2 + $0x88] sm:$0xff] 0.0
      %37 = vst [vmem:[#allocation2 + $0x90] sm:$0xff] 0.0
      %38 = vst [vmem:[#allocation2 + $0x98] sm:$0xff] 0.0
      %39 = vst [vmem:[#allocation2 + $0xa0] sm:$0xff] 0.0
      %40 = vst [vmem:[#allocation2 + $0xa8] sm:$0xff] 0.0
      %41 = vst [vmem:[#allocation2 + $0xb0] sm:$0xff] 0.0
      %42 = vst [vmem:[#allocation2 + $0xb8] sm:$0xff] 0.0
      %43 = vst [vmem:[#allocation2 + $0xc0] sm:$0xff] 0.0
      %44 = vst [vmem:[#allocation2 + $0xc8] sm:$0xff] 0.0
      %45 = vst [vmem:[#allocation2 + $0xd0] sm:$0xff] 0.0
      %46 = vst [vmem:[#allocation2 + $0xd8] sm:$0xff] 0.0
      %47 = vst [vmem:[#allocation2 + $0xe0] sm:$0xff] 0.0
      %48 = vst [vmem:[#allocation2 + $0xe8] sm:$0xff] 0.0
      %49 = vst [vmem:[#allocation2 + $0xf0] sm:$0xff] 0.0
      %50 = vst [vmem:[#allocation2 + $0xf8] sm:$0xff] 0.0
    $region17: #{generator_forward.15} parent=1 // pred_fallthru
      _
    %v51 = vld [vmem:[#allocation2] sm:$0xff]
    %v52 = vld [vmem:[#allocation2 + $0x8] sm:$0xff]
    %v53 = vld [vmem:[#allocation2 + $0x10] sm:$0xff]
    %v54 = vld [vmem:[#allocation2 + $0x18] sm:$0xff]
    %v55 = vld [vmem:[#allocation2 + $0x20] sm:$0xff]
    %v56 = vld [vmem:[#allocation2 + $0x28] sm:$0xff]
    %v57 = vld [vmem:[#allocation2 + $0x30] sm:$0xff]
    %v58 = vld [vmem:[#allocation2 + $0x38] sm:$0xff]
    %v59 = vld [vmem:[#allocation2 + $0x40] sm:$0xff]
    %v60 = vld [vmem:[#allocation2 + $0x48] sm:$0xff]
    %v61 = vld [vmem:[#allocation2 + $0x50] sm:$0xff]
    %v62 = vld [vmem:[#allocation2 + $0x58] sm:$0xff]
    %v63 = vld [vmem:[#allocation2 + $0x60] sm:$0xff]
    %v64 = vld [vmem:[#allocation2 + $0x68] sm:$0xff]
    %v65 = vld [vmem:[#allocation2 + $0x70] sm:$0xff]
    %v66 = vld [vmem:[#allocation2 + $0x78] sm:$0xff]
    %v67 = vld [vmem:[#allocation2 + $0x80] sm:$0xff]
    %v68 = vld [vmem:[#allocation2 + $0x88] sm:$0xff]
    %v69 = vld [vmem:[#allocation2 + $0x90] sm:$0xff]
    %v70 = vld [vmem:[#allocation2 + $0x98] sm:$0xff]
    %v71 = vld [vmem:[#allocation2 + $0xa0] sm:$0xff]
    %v72 = vld [vmem:[#allocation2 + $0xa8] sm:$0xff]
    %v73 = vld [vmem:[#allocation2 + $0xb0] sm:$0xff]
    %v74 = vld [vmem:[#allocation2 + $0xb8] sm:$0xff]
    %v75 = vld [vmem:[#allocation2 + $0xc0] sm:$0xff]
    %v76 = vld [vmem:[#allocation2 + $0xc8] sm:$0xff]
    %v77 = vld [vmem:[#allocation2 + $0xd0] sm:$0xff]
    %v78 = vld [vmem:[#allocation2 + $0xd8] sm:$0xff]
    %v79 = vld [vmem:[#allocation2 + $0xe0] sm:$0xff]
    %v80 = vld [vmem:[#allocation2 + $0xe8] sm:$0xff]
    %v81 = vld [vmem:[#allocation2 + $0xf0] sm:$0xff]
    %v82 = vld [vmem:[#allocation2 + $0xf8] sm:$0xff]
    %v83 = vld [vmem:[%s0] sm:$0xff]
    %v84 = vld [vmem:[%s0 + $0x8] sm:$0xff]
    %v85 = vld [vmem:[%s0 + $0x10] sm:$0xff]
    %v86 = vld [vmem:[%s0 + $0x18] sm:$0xff]
    %v87 = vld [vmem:[%s0 + $0x20] sm:$0xff]
    %v88 = vld [vmem:[%s0 + $0x28] sm:$0xff]
    %v89 = vld [vmem:[%s0 + $0x30] sm:$0xff]
    %v90 = vld [vmem:[%s0 + $0x38] sm:$0xff]
    %v91 = vld [vmem:[%s0 + $0x40] sm:$0xff]
    %v92 = vld [vmem:[%s0 + $0x48] sm:$0xff]
    %v93 = vld [vmem:[%s0 + $0x50] sm:$0xff]
    %v94 = vld [vmem:[%s0 + $0x58] sm:$0xff]
    %v95 = vld [vmem:[%s0 + $0x60] sm:$0xff]
    %v96 = vld [vmem:[%s0 + $0x68] sm:$0xff]
    %v97 = vld [vmem:[%s0 + $0x70] sm:$0xff]
    %v98 = vld [vmem:[%s0 + $0x78] sm:$0xff]
    %v99 = vld [vmem:[%s1] sm:$0xff]
    %v100 = vld [vmem:[%s1 + $0x8] sm:$0xff]
    %v101 = vld [vmem:[%s1 + $0x10] sm:$0xff]
    %v102 = vld [vmem:[%s1 + $0x18] sm:$0xff]
    %v103 = vld [vmem:[%s1 + $0x20] sm:$0xff]
    %v104 = vld [vmem:[%s1 + $0x28] sm:$0xff]
    %v105 = vld [vmem:[%s1 + $0x30] sm:$0xff]
    %v106 = vld [vmem:[%s1 + $0x38] sm:$0xff]
    %v107 = vld [vmem:[%s1 + $0x40] sm:$0xff]
    %v108 = vld [vmem:[%s1 + $0x48] sm:$0xff]
    %v109 = vld [vmem:[%s1 + $0x50] sm:$0xff]
    %v110 = vld [vmem:[%s1 + $0x58] sm:$0xff]
    %v111 = vld [vmem:[%s1 + $0x60] sm:$0xff]
    %v112 = vld [vmem:[%s1 + $0x68] sm:$0xff]
    %v113 = vld [vmem:[%s1 + $0x70] sm:$0xff]
    %v114 = vld [vmem:[%s1 + $0x78] sm:$0xff]
    %v115 = vld [vmem:[%s1 + $0x80] sm:$0xff]
    %v116 = vld [vmem:[%s1 + $0x88] sm:$0xff]
    %v117 = vld [vmem:[%s1 + $0x90] sm:$0xff]
    %v118 = vld [vmem:[%s1 + $0x98] sm:$0xff]
    %v119 = vld [vmem:[%s1 + $0xa0] sm:$0xff]
    %v120 = vld [vmem:[%s1 + $0xa8] sm:$0xff]
    %v121 = vld [vmem:[%s1 + $0xb0] sm:$0xff]
    %v122 = vld [vmem:[%s1 + $0xb8] sm:$0xff]
    %v123 = vld [vmem:[%s1 + $0xc0] sm:$0xff]
    %v124 = vld [vmem:[%s1 + $0xc8] sm:$0xff]
    %v125 = vld [vmem:[%s1 + $0xd0] sm:$0xff]
    %v126 = vld [vmem:[%s1 + $0xd8] sm:$0xff]
    %v127 = vld [vmem:[%s1 + $0xe0] sm:$0xff]
    %v128 = vld [vmem:[%s1 + $0xe8] sm:$0xff]
    %v129 = vld [vmem:[%s1 + $0xf0] sm:$0xff]
    %v130 = vld [vmem:[%s1 + $0xf8] sm:$0xff]
    %v147 = vunpack.c.l.b16 %v83
    %v148 = vunpack.c.h.b16 %v83
    %v149 = vunpack.c.l.b16 %v84
    %v150 = vunpack.c.h.b16 %v84
    %v151 = vunpack.c.l.b16 %v85
    %v152 = vunpack.c.h.b16 %v85
    %v153 = vunpack.c.l.b16 %v86
    %v154 = vunpack.c.h.b16 %v86
    %v155 = vunpack.c.l.b16 %v87
    %v156 = vunpack.c.h.b16 %v87
    %v157 = vunpack.c.l.b16 %v88
    %v158 = vunpack.c.h.b16 %v88
    %v159 = vunpack.c.l.b16 %v89
    %v160 = vunpack.c.h.b16 %v89
    %v161 = vunpack.c.l.b16 %v90
    %v162 = vunpack.c.h.b16 %v90
    %v163 = vunpack.c.l.b16 %v91
    %v164 = vunpack.c.h.b16 %v91
    %v165 = vunpack.c.l.b16 %v92
    %v166 = vunpack.c.h.b16 %v92
    %v167 = vunpack.c.l.b16 %v93
    %v168 = vunpack.c.h.b16 %v93
    %v169 = vunpack.c.l.b16 %v94
    %v170 = vunpack.c.h.b16 %v94
    %v171 = vunpack.c.l.b16 %v95
    %v172 = vunpack.c.h.b16 %v95
    %v173 = vunpack.c.l.b16 %v96
    %v174 = vunpack.c.h.b16 %v96
    %v175 = vunpack.c.l.b16 %v97
    %v176 = vunpack.c.h.b16 %v97
    %v177 = vunpack.c.l.b16 %v98
    %v178 = vunpack.c.h.b16 %v98
    %v179 = vpack.c.b16 %v149, %v147
    %v180 = vpack.c.b16 %v150, %v148
    %v181 = vpack.c.b16 %v153, %v151
    %v182 = vpack.c.b16 %v154, %v152
    %v183 = vpack.c.b16 %v157, %v155
    %v184 = vpack.c.b16 %v158, %v156
    %v185 = vpack.c.b16 %v161, %v159
    %v186 = vpack.c.b16 %v162, %v160
    %v187 = vpack.c.b16 %v165, %v163
    %v188 = vpack.c.b16 %v166, %v164
    %v189 = vpack.c.b16 %v169, %v167
    %v190 = vpack.c.b16 %v170, %v168
    %v191 = vpack.c.b16 %v173, %v171
    %v192 = vpack.c.b16 %v174, %v172
    %v193 = vpack.c.b16 %v177, %v175
    %v194 = vpack.c.b16 %v178, %v176
    %v243 = vunpack.c.l.b16 %v99
    %v244 = vunpack.c.h.b16 %v99
    %v245 = vunpack.c.l.b16 %v100
    %v246 = vunpack.c.h.b16 %v100
    %v247 = vunpack.c.l.b16 %v101
    %v248 = vunpack.c.h.b16 %v101
    %v249 = vunpack.c.l.b16 %v102
    %v250 = vunpack.c.h.b16 %v102
    %v251 = vunpack.c.l.b16 %v103
    %v252 = vunpack.c.h.b16 %v103
    %v253 = vunpack.c.l.b16 %v104
    %v254 = vunpack.c.h.b16 %v104
    %v255 = vunpack.c.l.b16 %v105
    %v256 = vunpack.c.h.b16 %v105
    %v257 = vunpack.c.l.b16 %v106
    %v258 = vunpack.c.h.b16 %v106
    %v259 = vunpack.c.l.b16 %v107
    %v260 = vunpack.c.h.b16 %v107
    %v261 = vunpack.c.l.b16 %v108
    %v262 = vunpack.c.h.b16 %v108
    %v263 = vunpack.c.l.b16 %v109
    %v264 = vunpack.c.h.b16 %v109
    %v265 = vunpack.c.l.b16 %v110
    %v266 = vunpack.c.h.b16 %v110
    %v267 = vunpack.c.l.b16 %v111
    %v268 = vunpack.c.h.b16 %v111
    %v269 = vunpack.c.l.b16 %v112
    %v270 = vunpack.c.h.b16 %v112
    %v271 = vunpack.c.l.b16 %v113
    %v272 = vunpack.c.h.b16 %v113
    %v273 = vunpack.c.l.b16 %v114
    %v274 = vunpack.c.h.b16 %v114
    %v275 = vunpack.c.l.b16 %v115
    %v276 = vunpack.c.h.b16 %v115
    %v277 = vunpack.c.l.b16 %v116
    %v278 = vunpack.c.h.b16 %v116
    %v279 = vunpack.c.l.b16 %v117
    %v280 = vunpack.c.h.b16 %v117
    %v281 = vunpack.c.l.b16 %v118
    %v282 = vunpack.c.h.b16 %v118
    %v283 = vunpack.c.l.b16 %v119
    %v284 = vunpack.c.h.b16 %v119
    %v285 = vunpack.c.l.b16 %v120
    %v286 = vunpack.c.h.b16 %v120
    %v287 = vunpack.c.l.b16 %v121
    %v288 = vunpack.c.h.b16 %v121
    %v289 = vunpack.c.l.b16 %v122
    %v290 = vunpack.c.h.b16 %v122
    %v291 = vunpack.c.l.b16 %v123
    %v292 = vunpack.c.h.b16 %v123
    %v293 = vunpack.c.l.b16 %v124
    %v294 = vunpack.c.h.b16 %v124
    %v295 = vunpack.c.l.b16 %v125
    %v296 = vunpack.c.h.b16 %v125
    %v297 = vunpack.c.l.b16 %v126
    %v298 = vunpack.c.h.b16 %v126
    %v299 = vunpack.c.l.b16 %v127
    %v300 = vunpack.c.h.b16 %v127
    %v301 = vunpack.c.l.b16 %v128
    %v302 = vunpack.c.h.b16 %v128
    %v303 = vunpack.c.l.b16 %v129
    %v304 = vunpack.c.h.b16 %v129
    %v305 = vunpack.c.l.b16 %v130
    %v306 = vunpack.c.h.b16 %v130
    %v307 = vpack.c.b16 %v245, %v243
    %v308 = vpack.c.b16 %v246, %v244
    %v309 = vpack.c.b16 %v249, %v247
    %v310 = vpack.c.b16 %v250, %v248
    %v311 = vpack.c.b16 %v253, %v251
    %v312 = vpack.c.b16 %v254, %v252
    %v313 = vpack.c.b16 %v257, %v255
    %v314 = vpack.c.b16 %v258, %v256
    %v315 = vpack.c.b16 %v261, %v259
    %v316 = vpack.c.b16 %v262, %v260
    %v317 = vpack.c.b16 %v265, %v263
    %v318 = vpack.c.b16 %v266, %v264
    %v319 = vpack.c.b16 %v269, %v267
    %v320 = vpack.c.b16 %v270, %v268
    %v321 = vpack.c.b16 %v273, %v271
    %v322 = vpack.c.b16 %v274, %v272
    %v323 = vpack.c.b16 %v277, %v275
    %v324 = vpack.c.b16 %v278, %v276
    %v325 = vpack.c.b16 %v281, %v279
    %v326 = vpack.c.b16 %v282, %v280
    %v327 = vpack.c.b16 %v285, %v283
    %v328 = vpack.c.b16 %v286, %v284
    %v329 = vpack.c.b16 %v289, %v287
    %v330 = vpack.c.b16 %v290, %v288
    %v331 = vpack.c.b16 %v293, %v291
    %v332 = vpack.c.b16 %v294, %v292
    %v333 = vpack.c.b16 %v297, %v295
    %v334 = vpack.c.b16 %v298, %v296
    %v335 = vpack.c.b16 %v301, %v299
    %v336 = vpack.c.b16 %v302, %v300
    %v337 = vpack.c.b16 %v305, %v303
    %v338 = vpack.c.b16 %v306, %v304
    %371 = vmatprep.subr.bf16.mxu0 %v308
    %372 = vmatpush1.bf16.msra.mxu0 %v307
    %373 = vmatprep.subr.bf16.mxu0 %v310
    %374 = vmatpush1.bf16.msra.mxu0 %v309
    %375 = vmatprep.subr.bf16.mxu0 %v312
    %376 = vmatpush1.bf16.msra.mxu0 %v311
    %377 = vmatprep.subr.bf16.mxu0 %v314
    %378 = vmatpush1.bf16.msra.mxu0 %v313
    %379 = vmatprep.subr.bf16.mxu0 %v316
    %380 = vmatpush1.bf16.msra.mxu0 %v315
    %381 = vmatprep.subr.bf16.mxu0 %v318
    %382 = vmatpush1.bf16.msra.mxu0 %v317
    %383 = vmatprep.subr.bf16.mxu0 %v320
    %384 = vmatpush1.bf16.msra.mxu0 %v319
    %385 = vmatprep.subr.bf16.mxu0 %v322
    %386 = vmatpush1.bf16.msra.mxu0 %v321
    %387 = vmatprep.subr.bf16.mxu0 %v324
    %388 = vmatpush1.bf16.msra.mxu0 %v323
    %389 = vmatprep.subr.bf16.mxu0 %v326
    %390 = vmatpush1.bf16.msra.mxu0 %v325
    %391 = vmatprep.subr.bf16.mxu0 %v328
    %392 = vmatpush1.bf16.msra.mxu0 %v327
    %393 = vmatprep.subr.bf16.mxu0 %v330
    %394 = vmatpush1.bf16.msra.mxu0 %v329
    %395 = vmatprep.subr.bf16.mxu0 %v332
    %396 = vmatpush1.bf16.msra.mxu0 %v331
    %397 = vmatprep.subr.bf16.mxu0 %v334
    %398 = vmatpush1.bf16.msra.mxu0 %v333
    %399 = vmatprep.subr.bf16.mxu0 %v336
    %400 = vmatpush1.bf16.msra.mxu0 %v335
    %401 = vmatprep.subr.bf16.mxu0 %v338
    %402 = vmatpush1.bf16.msra.mxu0 %v337
    %403 = vmatprep.mubr.bf16.mxu0 %v180
    %404 = vmatmul.mubr.bf16.gmra.mrb[0].mxu0 %v179
    %v405 = vpop.f32.mrb[0].mxu0
    %v406 = vadd.f32 0.0, %v405
    %v407 = vpop.f32.mrb[0].mxu0
    %v408 = vadd.f32 0.0, %v407
    %v409 = vpop.f32.mrb[0].mxu0
    %v410 = vadd.f32 0.0, %v409
    %v411 = vpop.f32.mrb[0].mxu0
    %v412 = vadd.f32 0.0, %v411
    %413 = vmatprep.mubr.bf16.mxu0 %v182
    %414 = vmatmul.mubr.bf16.gmra.mrb[0].mxu0 %v181
    %v415 = vpop.f32.mrb[0].mxu0
    %v416 = vadd.f32 0.0, %v415
    %v417 = vpop.f32.mrb[0].mxu0
    %v418 = vadd.f32 0.0, %v417
    %v419 = vpop.f32.mrb[0].mxu0
    %v420 = vadd.f32 0.0, %v419
    %v421 = vpop.f32.mrb[0].mxu0
    %v422 = vadd.f32 0.0, %v421
    %423 = vmatprep.mubr.bf16.mxu0 %v184
    %424 = vmatmul.mubr.bf16.gmra.mrb[0].mxu0 %v183
    %v425 = vpop.f32.mrb[0].mxu0
    %v426 = vadd.f32 0.0, %v425
    %v427 = vpop.f32.mrb[0].mxu0
    %v428 = vadd.f32 0.0, %v427
    %v429 = vpop.f32.mrb[0].mxu0
    %v430 = vadd.f32 0.0, %v429
    %v431 = vpop.f32.mrb[0].mxu0
    %v432 = vadd.f32 0.0, %v431
    %433 = vmatprep.mubr.bf16.mxu0 %v186
    %434 = vmatmul.mubr.bf16.gmra.mrb[0].mxu0 %v185
    %v435 = vpop.f32.mrb[0].mxu0
    %v436 = vadd.f32 0.0, %v435
    %v437 = vpop.f32.mrb[0].mxu0
    %v438 = vadd.f32 0.0, %v437
    %v439 = vpop.f32.mrb[0].mxu0
    %v440 = vadd.f32 0.0, %v439
    %v441 = vpop.f32.mrb[0].mxu0
    %v442 = vadd.f32 0.0, %v441
    %443 = vmatprep.mubr.bf16.mxu0 %v188
    %444 = vmatmul.mubr.bf16.gmra.mrb[0].mxu0 %v187
    %v445 = vpop.f32.mrb[0].mxu0
    %v446 = vadd.f32 0.0, %v445
    %v447 = vpop.f32.mrb[0].mxu0
    %v448 = vadd.f32 0.0, %v447
    %v449 = vpop.f32.mrb[0].mxu0
    %v450 = vadd.f32 0.0, %v449
    %v451 = vpop.f32.mrb[0].mxu0
    %v452 = vadd.f32 0.0, %v451
    %453 = vmatprep.mubr.bf16.mxu0 %v190
    %454 = vmatmul.mubr.bf16.gmra.mrb[0].mxu0 %v189
    %v455 = vpop.f32.mrb[0].mxu0
    %v456 = vadd.f32 0.0, %v455
    %v457 = vpop.f32.mrb[0].mxu0
    %v458 = vadd.f32 0.0, %v457
    %v459 = vpop.f32.mrb[0].mxu0
    %v460 = vadd.f32 0.0, %v459
    %v461 = vpop.f32.mrb[0].mxu0
    %v462 = vadd.f32 0.0, %v461
    %463 = vmatprep.mubr.bf16.mxu0 %v192
    %464 = vmatmul.mubr.bf16.gmra.mrb[0].mxu0 %v191
    %v465 = vpop.f32.mrb[0].mxu0
    %v466 = vadd.f32 0.0, %v465
    %v467 = vpop.f32.mrb[0].mxu0
    %v468 = vadd.f32 0.0, %v467
    %v469 = vpop.f32.mrb[0].mxu0
    %v470 = vadd.f32 0.0, %v469
    %v471 = vpop.f32.mrb[0].mxu0
    %v472 = vadd.f32 0.0, %v471
    %473 = vmatprep.mubr.bf16.mxu0 %v194
    %474 = vmatmul.mubr.bf16.gmra.mrb[0].mxu0 %v193
    %v475 = vpop.f32.mrb[0].mxu0
    %v476 = vadd.f32 0.0, %v475
    %v477 = vpop.f32.mrb[0].mxu0
    %v478 = vadd.f32 0.0, %v477
    %v479 = vpop.f32.mrb[0].mxu0
    %v480 = vadd.f32 0.0, %v479
    %v481 = vpop.f32.mrb[0].mxu0
    %v482 = vadd.f32 0.0, %v481
    %483 = vdwg.mxu0
    %v484 = vadd.f32 %v51, %v406
    %v485 = vadd.f32 %v52, %v408
    %v486 = vadd.f32 %v53, %v410
    %v487 = vadd.f32 %v54, %v412
    %v488 = vadd.f32 %v55, %v416
    %v489 = vadd.f32 %v56, %v418
    %v490 = vadd.f32 %v57, %v420
    %v491 = vadd.f32 %v58, %v422
    %v492 = vadd.f32 %v59, %v426
    %v493 = vadd.f32 %v60, %v428
    %v494 = vadd.f32 %v61, %v430
    %v495 = vadd.f32 %v62, %v432
    %v496 = vadd.f32 %v63, %v436
    %v497 = vadd.f32 %v64, %v438
    %v498 = vadd.f32 %v65, %v440
    %v499 = vadd.f32 %v66, %v442
    %v500 = vadd.f32 %v67, %v446
    %v501 = vadd.f32 %v68, %v448
    %v502 = vadd.f32 %v69, %v450
    %v503 = vadd.f32 %v70, %v452
    %v504 = vadd.f32 %v71, %v456
    %v505 = vadd.f32 %v72, %v458
    %v506 = vadd.f32 %v73, %v460
    %v507 = vadd.f32 %v74, %v462
    %v508 = vadd.f32 %v75, %v466
    %v509 = vadd.f32 %v76, %v468
    %v510 = vadd.f32 %v77, %v470
    %v511 = vadd.f32 %v78, %v472
    %v512 = vadd.f32 %v79, %v476
    %v513 = vadd.f32 %v80, %v478
    %v514 = vadd.f32 %v81, %v480
    %v515 = vadd.f32 %v82, %v482
    %516 = vst [vmem:[#allocation2] sm:$0xff] %v484
    %517 = vst [vmem:[#allocation2 + $0x8] sm:$0xff] %v485
    %518 = vst [vmem:[#allocation2 + $0x10] sm:$0xff] %v486
    %519 = vst [vmem:[#allocation2 + $0x18] sm:$0xff] %v487
    %520 = vst [vmem:[#allocation2 + $0x20] sm:$0xff] %v488
    %521 = vst [vmem:[#allocation2 + $0x28] sm:$0xff] %v489
    %522 = vst [vmem:[#allocation2 + $0x30] sm:$0xff] %v490
    %523 = vst [vmem:[#allocation2 + $0x38] sm:$0xff] %v491
    %524 = vst [vmem:[#allocation2 + $0x40] sm:$0xff] %v492
    %525 = vst [vmem:[#allocation2 + $0x48] sm:$0xff] %v493
    %526 = vst [vmem:[#allocation2 + $0x50] sm:$0xff] %v494
    %527 = vst [vmem:[#allocation2 + $0x58] sm:$0xff] %v495
    %528 = vst [vmem:[#allocation2 + $0x60] sm:$0xff] %v496
    %529 = vst [vmem:[#allocation2 + $0x68] sm:$0xff] %v497
    %530 = vst [vmem:[#allocation2 + $0x70] sm:$0xff] %v498
    %531 = vst [vmem:[#allocation2 + $0x78] sm:$0xff] %v499
    %532 = vst [vmem:[#allocation2 + $0x80] sm:$0xff] %v500
    %533 = vst [vmem:[#allocation2 + $0x88] sm:$0xff] %v501
    %534 = vst [vmem:[#allocation2 + $0x90] sm:$0xff] %v502
    %535 = vst [vmem:[#allocation2 + $0x98] sm:$0xff] %v503
    %536 = vst [vmem:[#allocation2 + $0xa0] sm:$0xff] %v504
    %537 = vst [vmem:[#allocation2 + $0xa8] sm:$0xff] %v505
    %538 = vst [vmem:[#allocation2 + $0xb0] sm:$0xff] %v506
    %539 = vst [vmem:[#allocation2 + $0xb8] sm:$0xff] %v507
    %540 = vst [vmem:[#allocation2 + $0xc0] sm:$0xff] %v508
    %541 = vst [vmem:[#allocation2 + $0xc8] sm:$0xff] %v509
    %542 = vst [vmem:[#allocation2 + $0xd0] sm:$0xff] %v510
    %543 = vst [vmem:[#allocation2 + $0xd8] sm:$0xff] %v511
    %544 = vst [vmem:[#allocation2 + $0xe0] sm:$0xff] %v512
    %545 = vst [vmem:[#allocation2 + $0xe8] sm:$0xff] %v513
    %546 = vst [vmem:[#allocation2 + $0xf0] sm:$0xff] %v514
    %547 = vst [vmem:[#allocation2 + $0xf8] sm:$0xff] %v515
    // Predicated region
    $region18: #{generator_forward.15} parent=1 // pred_check
      %p548 = pneg %p15
    $region19: #{generator_forward.15} parent=1 // pred_check_branch
      %550 = sbr.rel (%p548) target = $region21
    $region20: #{generator_forward.15} parent=1 // pred_region
      %v551 = vld [vmem:[#allocation2] sm:$0xff]
      %v552 = vld [vmem:[#allocation2 + $0x8] sm:$0xff]
      %v553 = vld [vmem:[#allocation2 + $0x10] sm:$0xff]
      %v554 = vld [vmem:[#allocation2 + $0x18] sm:$0xff]
      %v555 = vld [vmem:[#allocation2 + $0x20] sm:$0xff]
      %v556 = vld [vmem:[#allocation2 + $0x28] sm:$0xff]
      %v557 = vld [vmem:[#allocation2 + $0x30] sm:$0xff]
      %v558 = vld [vmem:[#allocation2 + $0x38] sm:$0xff]
      %v559 = vld [vmem:[#allocation2 + $0x40] sm:$0xff]
      %v560 = vld [vmem:[#allocation2 + $0x48] sm:$0xff]
      %v561 = vld [vmem:[#allocation2 + $0x50] sm:$0xff]
      %v562 = vld [vmem:[#allocation2 + $0x58] sm:$0xff]
      %v563 = vld [vmem:[#allocation2 + $0x60] sm:$0xff]
      %v564 = vld [vmem:[#allocation2 + $0x68] sm:$0xff]
      %v565 = vld [vmem:[#allocation2 + $0x70] sm:$0xff]
      %v566 = vld [vmem:[#allocation2 + $0x78] sm:$0xff]
      %v567 = vld [vmem:[#allocation2 + $0x80] sm:$0xff]
      %v568 = vld [vmem:[#allocation2 + $0x88] sm:$0xff]
      %v569 = vld [vmem:[#allocation2 + $0x90] sm:$0xff]
      %v570 = vld [vmem:[#allocation2 + $0x98] sm:$0xff]
      %v571 = vld [vmem:[#allocation2 + $0xa0] sm:$0xff]
      %v572 = vld [vmem:[#allocation2 + $0xa8] sm:$0xff]
      %v573 = vld [vmem:[#allocation2 + $0xb0] sm:$0xff]
      %v574 = vld [vmem:[#allocation2 + $0xb8] sm:$0xff]
      %v575 = vld [vmem:[#allocation2 + $0xc0] sm:$0xff]
      %v576 = vld [vmem:[#allocation2 + $0xc8] sm:$0xff]
      %v577 = vld [vmem:[#allocation2 + $0xd0] sm:$0xff]
      %v578 = vld [vmem:[#allocation2 + $0xd8] sm:$0xff]
      %v579 = vld [vmem:[#allocation2 + $0xe0] sm:$0xff]
      %v580 = vld [vmem:[#allocation2 + $0xe8] sm:$0xff]
      %v581 = vld [vmem:[#allocation2 + $0xf0] sm:$0xff]
      %v582 = vld [vmem:[#allocation2 + $0xf8] sm:$0xff]
      %v583 = vld [vmem:[%s2] sm:$0x3]
      %v585 = vlaneseq
      %v586 = vshrl.u32 %v585, 7
      %v587 = vsub.s32 0, %v586
      %v588 = vrot.slane %v583, %v587
      %v589 = vlaneseq
      %v590 = vshrl.u32 %v589, 7
      %v591 = vsub.s32 1, %v590
      %v592 = vrot.slane %v583, %v591
      %v595 = vadd.f32 %v551, %v588
      %v596 = vadd.f32 %v552, %v592
      %v597 = vadd.f32 %v553, %v588
      %v598 = vadd.f32 %v554, %v592
      %v599 = vadd.f32 %v555, %v588
      %v600 = vadd.f32 %v556, %v592
      %v601 = vadd.f32 %v557, %v588
      %v602 = vadd.f32 %v558, %v592
      %v603 = vadd.f32 %v559, %v588
      %v604 = vadd.f32 %v560, %v592
      %v605 = vadd.f32 %v561, %v588
      %v606 = vadd.f32 %v562, %v592
      %v607 = vadd.f32 %v563, %v588
      %v608 = vadd.f32 %v564, %v592
      %v609 = vadd.f32 %v565, %v588
      %v610 = vadd.f32 %v566, %v592
      %v611 = vadd.f32 %v567, %v588
      %v612 = vadd.f32 %v568, %v592
      %v613 = vadd.f32 %v569, %v588
      %v614 = vadd.f32 %v570, %v592
      %v615 = vadd.f32 %v571, %v588
      %v616 = vadd.f32 %v572, %v592
      %v617 = vadd.f32 %v573, %v588
      %v618 = vadd.f32 %v574, %v592
      %v619 = vadd.f32 %v575, %v588
      %v620 = vadd.f32 %v576, %v592
      %v621 = vadd.f32 %v577, %v588
      %v622 = vadd.f32 %v578, %v592
      %v623 = vadd.f32 %v579, %v588
      %v624 = vadd.f32 %v580, %v592
      %v625 = vadd.f32 %v581, %v588
      %v626 = vadd.f32 %v582, %v592
      %627 = vst [vmem:[#allocation3] sm:$0xff] %v595
      %628 = vst [vmem:[#allocation3 + $0x8] sm:$0xff] %v596
      %629 = vst [vmem:[#allocation3 + $0x10] sm:$0xff] %v597
      %630 = vst [vmem:[#allocation3 + $0x18] sm:$0xff] %v598
      %631 = vst [vmem:[#allocation3 + $0x20] sm:$0xff] %v599
      %632 = vst [vmem:[#allocation3 + $0x28] sm:$0xff] %v600
      %633 = vst [vmem:[#allocation3 + $0x30] sm:$0xff] %v601
      %634 = vst [vmem:[#allocation3 + $0x38] sm:$0xff] %v602
      %635 = vst [vmem:[#allocation3 + $0x40] sm:$0xff] %v603
      %636 = vst [vmem:[#allocation3 + $0x48] sm:$0xff] %v604
      %637 = vst [vmem:[#allocation3 + $0x50] sm:$0xff] %v605
      %638 = vst [vmem:[#allocation3 + $0x58] sm:$0xff] %v606
      %639 = vst [vmem:[#allocation3 + $0x60] sm:$0xff] %v607
      %640 = vst [vmem:[#allocation3 + $0x68] sm:$0xff] %v608
      %641 = vst [vmem:[#allocation3 + $0x70] sm:$0xff] %v609
      %642 = vst [vmem:[#allocation3 + $0x78] sm:$0xff] %v610
      %643 = vst [vmem:[#allocation3 + $0x80] sm:$0xff] %v611
      %644 = vst [vmem:[#allocation3 + $0x88] sm:$0xff] %v612
      %645 = vst [vmem:[#allocation3 + $0x90] sm:$0xff] %v613
      %646 = vst [vmem:[#allocation3 + $0x98] sm:$0xff] %v614
      %647 = vst [vmem:[#allocation3 + $0xa0] sm:$0xff] %v615
      %648 = vst [vmem:[#allocation3 + $0xa8] sm:$0xff] %v616
      %649 = vst [vmem:[#allocation3 + $0xb0] sm:$0xff] %v617
      %650 = vst [vmem:[#allocation3 + $0xb8] sm:$0xff] %v618
      %651 = vst [vmem:[#allocation3 + $0xc0] sm:$0xff] %v619
      %652 = vst [vmem:[#allocation3 + $0xc8] sm:$0xff] %v620
      %653 = vst [vmem:[#allocation3 + $0xd0] sm:$0xff] %v621
      %654 = vst [vmem:[#allocation3 + $0xd8] sm:$0xff] %v622
      %655 = vst [vmem:[#allocation3 + $0xe0] sm:$0xff] %v623
      %656 = vst [vmem:[#allocation3 + $0xe8] sm:$0xff] %v624
      %657 = vst [vmem:[#allocation3 + $0xf0] sm:$0xff] %v625
      %658 = vst [vmem:[#allocation3 + $0xf8] sm:$0xff] %v626
    $region21: #{generator_forward.15} parent=1 // pred_fallthru
      _
    // Predicated region
    $region22: #{generator_forward.15} parent=1 // pred_check
      _
    $region23: #{generator_forward.15} parent=1 // pred_check_branch
      %660 = sbr.rel (0) target = $region25
    $region24: #{generator_forward.15} parent=1 // pred_region
      %s662 = ssub.s32 4096, 4096
      %663 = vsyncadd [#allocation4], %s662
      %s664 = sshll.u32 [#allocation3], 4
      %s665 = int_to_ptr.vmem [resolvable:$true] %s664
      %670 = dma.vmem_to_hbm [thread:$0]  %s665, 4096, %s3, [#allocation4], 256, 256, 16
    $region25: #{generator_forward.15} parent=1 // pred_fallthru
      _
    // Predicated region
    $region26: #{generator_forward.15} parent=1 // pred_check
      _
    $region27: #{generator_forward.15} parent=1 // pred_check_branch
      %672 = sbr.rel (0) target = $region29
    $region28: #{generator_forward.15} parent=1 // pred_region
      %673 = dma.done [#allocation4], 4096
    $region29: #{generator_forward.15} parent=1 // pred_fallthru
      _
    %674 = vsyncpa [#allocation4], 1

</llo_original>
